<compile_context>
chip_gen: v5e
topology: v5e:2x2
jax: 0.10.0
libtpu: 0.0.40
codegen_flags: <defaults>
</compile_context>

<pallas_src>
import functools

import jax
import jax.numpy as jnp
from jax import lax
from jax.experimental import pallas as pl
from jax.experimental.pallas import tpu as pltpu


def _round_up(x, m):
    return (x + m - 1) // m * m


def _sigmoid_eup(x):
    # sigmoid(x) == 0.5 * tanh(0.5 * x) + 0.5 -- one EUP tanh, no VPU divide.
    return 0.5 * jnp.tanh(0.5 * x) + 0.5


def _lstm_kernel(x_ref, wih_ref, whh_ref, b_ref, out_ref, h_sc, c_sc, gx_sc,
                 *, unroll):
    """One grid step = TQ timesteps for the whole (padded) batch.

    x_ref   : (TQ*Bp, D)     bf16  -- TQ timesteps of input, rows grouped by t
    wih_ref : (D, 4*Hp)      bf16  -- W_ih^T, gate-major columns [i|f|g|o]
    whh_ref : (Hp, 4*Hp)     bf16  -- W_hh^T, gate-major columns [i|f|g|o]
    b_ref   : (1, 4*Hp)      f32   -- b_ih + b_hh
    out_ref : (TQ*Bp, Hp)    x.dtype
    h_sc/c_sc : (Bp, Hp)     f32   -- recurrent state, persists across grid
    gx_sc   : (TQ*Bp, 4*Hp)  bf16  -- hoisted input-gate pre-activations
    """
    bp, hp = h_sc.shape
    tq = x_ref.shape[0] // bp

    @pl.when(pl.program_id(0) == 0)
    def _():
        h_sc[...] = jnp.zeros_like(h_sc)
        c_sc[...] = jnp.zeros_like(c_sc)

    # Hoisted input projection for all TQ timesteps of this block: one large
    # bf16 MXU matmul (f32 accumulate); bias folded in once, result kept bf16.
    gx_sc[...] = (
        jnp.dot(x_ref[...], wih_ref[...], preferred_element_type=jnp.float32)
        + b_ref[...]
    ).astype(gx_sc.dtype)

    def step(s, carry):
        h_prev, c_prev = carry                                   # (Bp, Hp) f32
        r = pl.multiple_of(s * bp, bp)
        gates = gx_sc[pl.ds(r, bp), :].astype(jnp.float32) + jnp.dot(
            h_prev.astype(jnp.bfloat16), whh_ref[...],
            preferred_element_type=jnp.float32)                  # (Bp, 4Hp) f32
        # Lane-aligned gate slices (hp is a multiple of 128); all gate
        # transcendentals are single EUP tanh calls.
        i_g = _sigmoid_eup(gates[:, 0 * hp:1 * hp])
        f_g = _sigmoid_eup(gates[:, 1 * hp:2 * hp])
        g_g = jnp.tanh(gates[:, 2 * hp:3 * hp])
        o_g = _sigmoid_eup(gates[:, 3 * hp:4 * hp])
        c_new = f_g * c_prev + i_g * g_g
        h_new = o_g * jnp.tanh(c_new)
        out_ref[pl.ds(r, bp), :] = h_new.astype(out_ref.dtype)
        return h_new, c_new

    h, c = lax.fori_loop(0, tq, step, (h_sc[...], c_sc[...]), unroll=unroll)
    h_sc[...] = h
    c_sc[...] = c


def _vmem_bytes(tq, bp, d, hp, out_bytes, weight_bufs):
    """Rough VMEM working-set estimate for a candidate TQ."""
    x_slab = 2 * (tq * bp * d * 2)                        # bf16 x, double buffered
    out_slab = 2 * (tq * bp * hp * out_bytes)             # out, double buffered
    weights = weight_bufs * (d * 4 * hp * 2 + hp * 4 * hp * 2 + 4 * hp * 4)
    scratch = 2 * bp * hp * 4 + tq * bp * 4 * hp * 2      # h,c f32 + gx bf16
    return x_slab + out_slab + weights + scratch


def lstm_pallas(x, w_ih, w_hh, b_ih, b_hh, *, tq=None):
    """x: (T, B, D). w_ih: (4H, D), w_hh: (4H, H), b_*: (4H,). Returns (T, B, H)."""
    T, B, D = x.shape
    fourH, H = w_hh.shape
    assert fourH == 4 * H and w_ih.shape == (4 * H, D)

    out_dtype = x.dtype
    out_bytes = jnp.dtype(out_dtype).itemsize
    Hp = _round_up(H, 128)          # lane-aligned per-gate width
    Bp = _round_up(B, 8)            # sublane-aligned batch

    # --- per-generation VMEM budget (v7x has only 64 MiB per TensorCore) -----
    try:
        vmem_cap = int(pltpu.get_tpu_info().vmem_capacity_bytes)
    except Exception:
        vmem_cap = 64 * 1024 * 1024     # conservative (v7x) fallback
    budget = vmem_cap // 2

    if tq is None:
        # Fill >= 128 MXU rows (tq*Bp) when the sequence allows, subject to the
        # VMEM budget; larger tq also amortizes the ~0.35us/grid-step overhead.
        tq = 1
        for cand in (32, 16, 8, 4, 2):
            if _vmem_bytes(cand, Bp, D, Hp, out_bytes, 1) <= budget:
                tq = cand
                break
    tq = max(1, min(tq, T))
    Tp = _round_up(T, tq)
    nt = Tp // tq

    vmem_need = _vmem_bytes(tq, Bp, D, Hp, out_bytes, 1)
    vmem_limit = int(min(max(vmem_cap - (4 << 20), 16 << 20),
                         max(32 << 20, 2 * vmem_need + (8 << 20))))

    # --- vreg-pressure-guarded unroll ----------------------------------------
    vreg_tiles = (Bp // 8) * (Hp // 128)
    live_vregs = 8 * vreg_tiles          # h, c + ~6 gate temporaries per tile
    if live_vregs <= 24:
        unroll = True
    elif live_vregs <= 48:
        unroll = 4
    else:
        unroll = 2

    # --- pad & flatten the input (no f32 intermediate; skip if unneeded) -----
    if (Tp, Bp) != (T, B):
        x_p = jnp.zeros((Tp, Bp, D), x.dtype).at[:T, :B, :].set(x)
    else:
        x_p = x
    x2d = x_p.reshape(Tp * Bp, D).astype(jnp.bfloat16)

    # --- per-gate padded, transposed weights (gate order [i, f, g, o]) -------
    # Zero-padded weight rows/cols + zero bias + zero initial state keep the
    # padded hidden columns exactly 0 through the recurrence.
    wih4 = jnp.asarray(w_ih, jnp.float32).reshape(4, H, D)
    wih_t = (jnp.zeros((4, Hp, D), jnp.float32).at[:, :H, :].set(wih4)
             .transpose(2, 0, 1).reshape(D, 4 * Hp).astype(jnp.bfloat16))

    whh4 = jnp.asarray(w_hh, jnp.float32).reshape(4, H, H)
    whh_t = (jnp.zeros((4, Hp, Hp), jnp.float32).at[:, :H, :H].set(whh4)
             .transpose(2, 0, 1).reshape(Hp, 4 * Hp).astype(jnp.bfloat16))

    b4 = (jnp.asarray(b_ih, jnp.float32)
          + jnp.asarray(b_hh, jnp.float32)).reshape(4, H)
    bias = (jnp.zeros((4, Hp), jnp.float32).at[:, :H].set(b4)
            .reshape(1, 4 * Hp))

    cost = pl.CostEstimate(
        flops=int(2 * Tp * Bp * (D + Hp) * 4 * Hp),
        transcendentals=int(5 * Tp * Bp * Hp),
        bytes_accessed=int(x2d.size * 2 + wih_t.size * 2 + whh_t.size * 2
                           + bias.size * 4 + Tp * Bp * Hp * out_bytes),
    )

    def _build(use_buffered):
        const_mode = ({"pipeline_mode": pl.Buffered(1)} if use_buffered else {})
        grid_spec = pltpu.PrefetchScalarGridSpec(
            num_scalar_prefetch=0,
            grid=(nt,),
            in_specs=[
                pl.BlockSpec((tq * Bp, D), lambda t: (t, 0)),               # x slab
                pl.BlockSpec((D, 4 * Hp), lambda t: (0, 0), **const_mode),  # W_ih^T
                pl.BlockSpec((Hp, 4 * Hp), lambda t: (0, 0), **const_mode), # W_hh^T
                pl.BlockSpec((1, 4 * Hp), lambda t: (0, 0), **const_mode),  # bias
            ],
            out_specs=pl.BlockSpec((tq * Bp, Hp), lambda t: (t, 0)),
            scratch_shapes=[
                pltpu.VMEM((Bp, Hp), jnp.float32),                 # h_t
                pltpu.VMEM((Bp, Hp), jnp.float32),                 # c_t
                pltpu.VMEM((tq * Bp, 4 * Hp), jnp.bfloat16),       # hoisted gates
            ],
        )
        return pl.pallas_call(
            functools.partial(_lstm_kernel, unroll=unroll),
            out_shape=jax.ShapeDtypeStruct((Tp * Bp, Hp), out_dtype),
            grid_spec=grid_spec,
            compiler_params=pltpu.CompilerParams(
                dimension_semantics=("arbitrary",),   # time recurrence is serial
                vmem_limit_bytes=vmem_limit,
            ),
            cost_estimate=cost,
        )

    try:
        out2d = _build(True)(x2d, wih_t, whh_t, bias)
    except Exception:
        # Fallback if this runtime rejects pipeline_mode=pl.Buffered(1).
        out2d = _build(False)(x2d, wih_t, whh_t, bias)

    out = out2d.reshape(Tp, Bp, Hp)[:T, :B, :H]
    return out.astype(out_dtype)


class LSTMWrapperPallas:
    """Mirrors kirigami LSTM_Wrapper.forward with a Pallas LSTM kernel."""

    def __init__(self, input_size, hidden_size, key):
        self.input_size = input_size
        self.hidden_size = hidden_size
        k = 1.0 / jnp.sqrt(jnp.float32(hidden_size))
        k1, k2, k3, k4 = jax.random.split(key, 4)
        # Deterministic init matching nn.LSTM's U(-1/sqrt(H), 1/sqrt(H)) shapes.
        self.w_ih = jax.random.uniform(k1, (4 * hidden_size, input_size),
                                       jnp.float32, -k, k)
        self.w_hh = jax.random.uniform(k2, (4 * hidden_size, hidden_size),
                                       jnp.float32, -k, k)
        self.b_ih = jax.random.uniform(k3, (4 * hidden_size,),
                                       jnp.float32, -k, k)
        self.b_hh = jax.random.uniform(k4, (4 * hidden_size,),
                                       jnp.float32, -k, k)

    def __call__(self, ipt):
        # forward(): if ipt.dim() > 3: ipt.squeeze_(1)   (the debug print of
        # ipt.shape is intentionally omitted to keep stdout clean)
        if ipt.ndim > 3:
            ipt = jnp.squeeze(ipt, axis=1)
        # out, _ = self.lstm(ipt); return out
        return lstm_pallas(ipt, self.w_ih, self.w_hh, self.b_ih, self.b_hh)


def _lstm_reference(x, w_ih, w_hh, b_ih, b_hh):
    """Pure-JAX f32 reference (lax.scan) for correctness checking."""
    T, B, D = x.shape
    H = w_hh.shape[1]
    bias = b_ih + b_hh

    def step(carry, x_t):
        h, c = carry
        gates = x_t @ w_ih.T + h @ w_hh.T + bias
        i = jax.nn.sigmoid(gates[:, 0 * H:1 * H])
        f = jax.nn.sigmoid(gates[:, 1 * H:2 * H])
        g = jnp.tanh(gates[:, 2 * H:3 * H])
        o = jax.nn.sigmoid(gates[:, 3 * H:4 * H])
        c = f * c + i * g
        h = o * jnp.tanh(c)
        return (h, c), h

    init = (jnp.zeros((B, H), jnp.float32), jnp.zeros((B, H), jnp.float32))
    _, hs = lax.scan(step, init, x)
    return hs


if __name__ == "__main__":
    key = jax.random.PRNGKey(0)
    k_in, k_par = jax.random.split(key)

    T, B, D, H = 8, 2, 16, 32
    # 4-D input (T, 1, B, D) exercises the squeeze(1) branch of forward().
    x = jax.random.normal(k_in, (T, 1, B, D), jnp.float32)

    module = LSTMWrapperPallas(input_size=D, hidden_size=H, key=k_par)

    out = jax.block_until_ready(module(x))
    assert out.shape == (T, B, H), out.shape

    ref = _lstm_reference(jnp.squeeze(x, axis=1),
                          module.w_ih, module.w_hh, module.b_ih, module.b_hh)
    err = float(jnp.max(jnp.abs(out - ref)))
    # bf16 MXU operands (with f32 accumulation) vs the pure-f32 reference.
    assert err < 3e-2, err

    print("KERNEL_OK")
</pallas_src>

<mosaic_0001>
module attributes {stable_mosaic.version = 11 : i64} {
  func.func @_lstm_kernel(%arg0: i32, %arg1: memref<64x16xbf16, #tpu.memory_space<vmem>>, %arg2: memref<16x512xbf16, #tpu.memory_space<vmem>>, %arg3: memref<128x512xbf16, #tpu.memory_space<vmem>>, %arg4: memref<1x512xf32, #tpu.memory_space<vmem>>, %arg5: memref<64x128xf32, #tpu.memory_space<vmem>>, %arg6: memref<8x128xf32, #tpu.memory_space<vmem>>, %arg7: memref<8x128xf32, #tpu.memory_space<vmem>>, %arg8: memref<64x512xbf16, #tpu.memory_space<vmem>>) attributes {dimension_semantics = [#tpu.dimension_semantics<arbitrary>], iteration_bounds = array<i64: 1>, scalar_prefetch = 0 : i64, scratch_operands = 3 : i64, tpu.core_type = #tpu.core_type<tc>, window_params = [{transform_indices = @transform_0, window_bounds = array<i64: 64, 16>}, {pipeline_mode = #tpu.pipeline_mode<synchronous>, transform_indices = @transform_1, window_bounds = array<i64: 16, 512>}, {pipeline_mode = #tpu.pipeline_mode<synchronous>, transform_indices = @transform_2, window_bounds = array<i64: 128, 512>}, {pipeline_mode = #tpu.pipeline_mode<synchronous>, transform_indices = @transform_3, window_bounds = array<i64: 1, 512>}, {transform_indices = @transform_4, window_bounds = array<i64: 64, 128>}]} {
    %c0_i32 = arith.constant 0 : i32
    %0 = arith.cmpi eq, %arg0, %c0_i32 : i32
    %1 = arith.extui %0 : i1 to i32
    %c0_i32_0 = arith.constant 0 : i32
    %2 = arith.cmpi ne, %1, %c0_i32_0 : i32
    scf.if %2 {
      %cst_137 = arith.constant 0.000000e+00 : f32
      %351 = vector.broadcast %cst_137 : f32 to vector<8x128xf32>
      %c0_138 = arith.constant 0 : index
      %c0_139 = arith.constant 0 : index
      %352 = vector.load %arg6[%c0_138, %c0_139] : memref<8x128xf32, #tpu.memory_space<vmem>>, vector<8x128xf32>
      tpu.vector_store %arg6[%c0_138, %c0_139], %351 {strides = array<i32>} : memref<8x128xf32, #tpu.memory_space<vmem>>, vector<8x128xf32>,
      %cst_140 = arith.constant 0.000000e+00 : f32
      %353 = vector.broadcast %cst_140 : f32 to vector<8x128xf32>
      %c0_141 = arith.constant 0 : index
      %c0_142 = arith.constant 0 : index
      %354 = vector.load %arg7[%c0_141, %c0_142] : memref<8x128xf32, #tpu.memory_space<vmem>>, vector<8x128xf32>
      tpu.vector_store %arg7[%c0_141, %c0_142], %353 {strides = array<i32>} : memref<8x128xf32, #tpu.memory_space<vmem>>, vector<8x128xf32>,
    } else {
    }
    %c0 = arith.constant 0 : index
    %c0_1 = arith.constant 0 : index
    %3 = vector.load %arg1[%c0, %c0_1] : memref<64x16xbf16, #tpu.memory_space<vmem>>, vector<64x16xbf16>
    %c0_2 = arith.constant 0 : index
    %c0_3 = arith.constant 0 : index
    %4 = vector.load %arg2[%c0_2, %c0_3] : memref<16x512xbf16, #tpu.memory_space<vmem>>, vector<16x512xbf16>
    %cst = arith.constant dense<0.000000e+00> : vector<64x512xf32>
    %5 = tpu.matmul %3, %4, %cst {dimension_numbers = #tpu.dot_dimension_numbers<[1], [0], [0], [1], [0, 0, 1, 1], [], []>} : vector<64x16xbf16>, vector<16x512xbf16>, vector<64x512xf32> -> vector<64x512xf32>
    %c0_4 = arith.constant 0 : index
    %c0_5 = arith.constant 0 : index
    %6 = vector.load %arg4[%c0_4, %c0_5] : memref<1x512xf32, #tpu.memory_space<vmem>>, vector<1x512xf32>
    %7 = vector.broadcast %6 : vector<1x512xf32> to vector<64x512xf32>
    %8 = arith.addf %5, %7 : vector<64x512xf32>
    %9 = arith.truncf %8 : vector<64x512xf32> to vector<64x512xbf16>
    %c0_6 = arith.constant 0 : index
    %c0_7 = arith.constant 0 : index
    %10 = vector.load %arg8[%c0_6, %c0_7] : memref<64x512xbf16, #tpu.memory_space<vmem>>, vector<64x512xbf16>
    tpu.vector_store %arg8[%c0_6, %c0_7], %9 {strides = array<i32>} : memref<64x512xbf16, #tpu.memory_space<vmem>>, vector<64x512xbf16>,
    %c0_8 = arith.constant 0 : index
    %c0_9 = arith.constant 0 : index
    %11 = vector.load %arg6[%c0_8, %c0_9] : memref<8x128xf32, #tpu.memory_space<vmem>>, vector<8x128xf32>
    %c0_10 = arith.constant 0 : index
    %c0_11 = arith.constant 0 : index
    %12 = vector.load %arg7[%c0_10, %c0_11] : memref<8x128xf32, #tpu.memory_space<vmem>>, vector<8x128xf32>
    %c0_i32_12 = arith.constant 0 : i32
    %c8_i32 = arith.constant 8 : i32
    %13 = arith.muli %c0_i32_12, %c8_i32 : i32
    %14 = tpu.assume_multiple %13, 8 : i32
    %15 = arith.index_cast %14 : i32 to index
    %c0_13 = arith.constant 0 : index
    %16 = vector.load %arg8[%15, %c0_13] : memref<64x512xbf16, #tpu.memory_space<vmem>>, vector<8x512xbf16>
    %17 = arith.extf %16 : vector<8x512xbf16> to vector<8x512xf32>
    %18 = arith.truncf %11 : vector<8x128xf32> to vector<8x128xbf16>
    %c0_14 = arith.constant 0 : index
    %c0_15 = arith.constant 0 : index
    %19 = vector.load %arg3[%c0_14, %c0_15] : memref<128x512xbf16, #tpu.memory_space<vmem>>, vector<128x512xbf16>
    %cst_16 = arith.constant dense<0.000000e+00> : vector<8x512xf32>
    %20 = tpu.matmul %18, %19, %cst_16 {dimension_numbers = #tpu.dot_dimension_numbers<[1], [0], [0], [1], [0, 0, 1, 1], [], []>} : vector<8x128xbf16>, vector<128x512xbf16>, vector<8x512xf32> -> vector<8x512xf32>
    %21 = arith.addf %17, %20 : vector<8x512xf32>
    %22 = vector.extract_strided_slice %21 {offsets = [0, 0], sizes = [8, 128], strides = [1, 1]} : vector<8x512xf32> to vector<8x128xf32>
    %cst_17 = arith.constant 5.000000e-01 : f32
    %23 = vector.broadcast %cst_17 : f32 to vector<8x128xf32>
    %24 = arith.mulf %23, %22 : vector<8x128xf32>
    %25 = math.tanh %24 : vector<8x128xf32>
    %cst_18 = arith.constant 5.000000e-01 : f32
    %26 = vector.broadcast %cst_18 : f32 to vector<8x128xf32>
    %27 = arith.mulf %26, %25 : vector<8x128xf32>
    %cst_19 = arith.constant 5.000000e-01 : f32
    %28 = vector.broadcast %cst_19 : f32 to vector<8x128xf32>
    %29 = arith.addf %27, %28 : vector<8x128xf32>
    %30 = vector.extract_strided_slice %21 {offsets = [0, 128], sizes = [8, 128], strides = [1, 1]} : vector<8x512xf32> to vector<8x128xf32>
    %cst_20 = arith.constant 5.000000e-01 : f32
    %31 = vector.broadcast %cst_20 : f32 to vector<8x128xf32>
    %32 = arith.mulf %31, %30 : vector<8x128xf32>
    %33 = math.tanh %32 : vector<8x128xf32>
    %cst_21 = arith.constant 5.000000e-01 : f32
    %34 = vector.broadcast %cst_21 : f32 to vector<8x128xf32>
    %35 = arith.mulf %34, %33 : vector<8x128xf32>
    %cst_22 = arith.constant 5.000000e-01 : f32
    %36 = vector.broadcast %cst_22 : f32 to vector<8x128xf32>
    %37 = arith.addf %35, %36 : vector<8x128xf32>
    %38 = vector.extract_strided_slice %21 {offsets = [0, 256], sizes = [8, 128], strides = [1, 1]} : vector<8x512xf32> to vector<8x128xf32>
    %39 = math.tanh %38 : vector<8x128xf32>
    %40 = vector.extract_strided_slice %21 {offsets = [0, 384], sizes = [8, 128], strides = [1, 1]} : vector<8x512xf32> to vector<8x128xf32>
    %cst_23 = arith.constant 5.000000e-01 : f32
    %41 = vector.broadcast %cst_23 : f32 to vector<8x128xf32>
    %42 = arith.mulf %41, %40 : vector<8x128xf32>
    %43 = math.tanh %42 : vector<8x128xf32>
    %cst_24 = arith.constant 5.000000e-01 : f32
    %44 = vector.broadcast %cst_24 : f32 to vector<8x128xf32>
    %45 = arith.mulf %44, %43 : vector<8x128xf32>
    %cst_25 = arith.constant 5.000000e-01 : f32
    %46 = vector.broadcast %cst_25 : f32 to vector<8x128xf32>
    %47 = arith.addf %45, %46 : vector<8x128xf32>
    %48 = arith.mulf %37, %12 : vector<8x128xf32>
    %49 = arith.mulf %29, %39 : vector<8x128xf32>
    %50 = arith.addf %48, %49 : vector<8x128xf32>
    %51 = math.tanh %50 : vector<8x128xf32>
    %52 = arith.mulf %47, %51 : vector<8x128xf32>
    %53 = arith.index_cast %14 : i32 to index
    %c0_26 = arith.constant 0 : index
    %54 = vector.load %arg5[%53, %c0_26] : memref<64x128xf32, #tpu.memory_space<vmem>>, vector<8x128xf32>
    tpu.vector_store %arg5[%53, %c0_26], %52 {strides = array<i32>} : memref<64x128xf32, #tpu.memory_space<vmem>>, vector<8x128xf32>,
    %c1_i32 = arith.constant 1 : i32
    %c8_i32_27 = arith.constant 8 : i32
    %55 = arith.muli %c1_i32, %c8_i32_27 : i32
    %56 = tpu.assume_multiple %55, 8 : i32
    %57 = arith.index_cast %56 : i32 to index
    %c0_28 = arith.constant 0 : index
    %58 = vector.load %arg8[%57, %c0_28] : memref<64x512xbf16, #tpu.memory_space<vmem>>, vector<8x512xbf16>
    %59 = arith.extf %58 : vector<8x512xbf16> to vector<8x512xf32>
    %60 = arith.truncf %52 : vector<8x128xf32> to vector<8x128xbf16>
    %c0_29 = arith.constant 0 : index
    %c0_30 = arith.constant 0 : index
    %61 = vector.load %arg3[%c0_29, %c0_30] : memref<128x512xbf16, #tpu.memory_space<vmem>>, vector<128x512xbf16>
    %cst_31 = arith.constant dense<0.000000e+00> : vector<8x512xf32>
    %62 = tpu.matmul %60, %61, %cst_31 {dimension_numbers = #tpu.dot_dimension_numbers<[1], [0], [0], [1], [0, 0, 1, 1], [], []>} : vector<8x128xbf16>, vector<128x512xbf16>, vector<8x512xf32> -> vector<8x512xf32>
    %63 = arith.addf %59, %62 : vector<8x512xf32>
    %64 = vector.extract_strided_slice %63 {offsets = [0, 0], sizes = [8, 128], strides = [1, 1]} : vector<8x512xf32> to vector<8x128xf32>
    %cst_32 = arith.constant 5.000000e-01 : f32
    %65 = vector.broadcast %cst_32 : f32 to vector<8x128xf32>
    %66 = arith.mulf %65, %64 : vector<8x128xf32>
    %67 = math.tanh %66 : vector<8x128xf32>
    %cst_33 = arith.constant 5.000000e-01 : f32
    %68 = vector.broadcast %cst_33 : f32 to vector<8x128xf32>
    %69 = arith.mulf %68, %67 : vector<8x128xf32>
    %cst_34 = arith.constant 5.000000e-01 : f32
    %70 = vector.broadcast %cst_34 : f32 to vector<8x128xf32>
    %71 = arith.addf %69, %70 : vector<8x128xf32>
    %72 = vector.extract_strided_slice %63 {offsets = [0, 128], sizes = [8, 128], strides = [1, 1]} : vector<8x512xf32> to vector<8x128xf32>
    %cst_35 = arith.constant 5.000000e-01 : f32
    %73 = vector.broadcast %cst_35 : f32 to vector<8x128xf32>
    %74 = arith.mulf %73, %72 : vector<8x128xf32>
    %75 = math.tanh %74 : vector<8x128xf32>
    %cst_36 = arith.constant 5.000000e-01 : f32
    %76 = vector.broadcast %cst_36 : f32 to vector<8x128xf32>
    %77 = arith.mulf %76, %75 : vector<8x128xf32>
    %cst_37 = arith.constant 5.000000e-01 : f32
    %78 = vector.broadcast %cst_37 : f32 to vector<8x128xf32>
    %79 = arith.addf %77, %78 : vector<8x128xf32>
    %80 = vector.extract_strided_slice %63 {offsets = [0, 256], sizes = [8, 128], strides = [1, 1]} : vector<8x512xf32> to vector<8x128xf32>
    %81 = math.tanh %80 : vector<8x128xf32>
    %82 = vector.extract_strided_slice %63 {offsets = [0, 384], sizes = [8, 128], strides = [1, 1]} : vector<8x512xf32> to vector<8x128xf32>
    %cst_38 = arith.constant 5.000000e-01 : f32
    %83 = vector.broadcast %cst_38 : f32 to vector<8x128xf32>
    %84 = arith.mulf %83, %82 : vector<8x128xf32>
    %85 = math.tanh %84 : vector<8x128xf32>
    %cst_39 = arith.constant 5.000000e-01 : f32
    %86 = vector.broadcast %cst_39 : f32 to vector<8x128xf32>
    %87 = arith.mulf %86, %85 : vector<8x128xf32>
    %cst_40 = arith.constant 5.000000e-01 : f32
    %88 = vector.broadcast %cst_40 : f32 to vector<8x128xf32>
    %89 = arith.addf %87, %88 : vector<8x128xf32>
    %90 = arith.mulf %79, %50 : vector<8x128xf32>
    %91 = arith.mulf %71, %81 : vector<8x128xf32>
    %92 = arith.addf %90, %91 : vector<8x128xf32>
    %93 = math.tanh %92 : vector<8x128xf32>
    %94 = arith.mulf %89, %93 : vector<8x128xf32>
    %95 = arith.index_cast %56 : i32 to index
    %c0_41 = arith.constant 0 : index
    %96 = vector.load %arg5[%95, %c0_41] : memref<64x128xf32, #tpu.memory_space<vmem>>, vector<8x128xf32>
    tpu.vector_store %arg5[%95, %c0_41], %94 {strides = array<i32>} : memref<64x128xf32, #tpu.memory_space<vmem>>, vector<8x128xf32>,
    %c2_i32 = arith.constant 2 : i32
    %c8_i32_42 = arith.constant 8 : i32
    %97 = arith.muli %c2_i32, %c8_i32_42 : i32
    %98 = tpu.assume_multiple %97, 8 : i32
    %99 = arith.index_cast %98 : i32 to index
    %c0_43 = arith.constant 0 : index
    %100 = vector.load %arg8[%99, %c0_43] : memref<64x512xbf16, #tpu.memory_space<vmem>>, vector<8x512xbf16>
    %101 = arith.extf %100 : vector<8x512xbf16> to vector<8x512xf32>
    %102 = arith.truncf %94 : vector<8x128xf32> to vector<8x128xbf16>
    %c0_44 = arith.constant 0 : index
    %c0_45 = arith.constant 0 : index
    %103 = vector.load %arg3[%c0_44, %c0_45] : memref<128x512xbf16, #tpu.memory_space<vmem>>, vector<128x512xbf16>
    %cst_46 = arith.constant dense<0.000000e+00> : vector<8x512xf32>
    %104 = tpu.matmul %102, %103, %cst_46 {dimension_numbers = #tpu.dot_dimension_numbers<[1], [0], [0], [1], [0, 0, 1, 1], [], []>} : vector<8x128xbf16>, vector<128x512xbf16>, vector<8x512xf32> -> vector<8x512xf32>
    %105 = arith.addf %101, %104 : vector<8x512xf32>
    %106 = vector.extract_strided_slice %105 {offsets = [0, 0], sizes = [8, 128], strides = [1, 1]} : vector<8x512xf32> to vector<8x128xf32>
    %cst_47 = arith.constant 5.000000e-01 : f32
    %107 = vector.broadcast %cst_47 : f32 to vector<8x128xf32>
    %108 = arith.mulf %107, %106 : vector<8x128xf32>
    %109 = math.tanh %108 : vector<8x128xf32>
    %cst_48 = arith.constant 5.000000e-01 : f32
    %110 = vector.broadcast %cst_48 : f32 to vector<8x128xf32>
    %111 = arith.mulf %110, %109 : vector<8x128xf32>
    %cst_49 = arith.constant 5.000000e-01 : f32
    %112 = vector.broadcast %cst_49 : f32 to vector<8x128xf32>
    %113 = arith.addf %111, %112 : vector<8x128xf32>
    %114 = vector.extract_strided_slice %105 {offsets = [0, 128], sizes = [8, 128], strides = [1, 1]} : vector<8x512xf32> to vector<8x128xf32>
    %cst_50 = arith.constant 5.000000e-01 : f32
    %115 = vector.broadcast %cst_50 : f32 to vector<8x128xf32>
    %116 = arith.mulf %115, %114 : vector<8x128xf32>
    %117 = math.tanh %116 : vector<8x128xf32>
    %cst_51 = arith.constant 5.000000e-01 : f32
    %118 = vector.broadcast %cst_51 : f32 to vector<8x128xf32>
    %119 = arith.mulf %118, %117 : vector<8x128xf32>
    %cst_52 = arith.constant 5.000000e-01 : f32
    %120 = vector.broadcast %cst_52 : f32 to vector<8x128xf32>
    %121 = arith.addf %119, %120 : vector<8x128xf32>
    %122 = vector.extract_strided_slice %105 {offsets = [0, 256], sizes = [8, 128], strides = [1, 1]} : vector<8x512xf32> to vector<8x128xf32>
    %123 = math.tanh %122 : vector<8x128xf32>
    %124 = vector.extract_strided_slice %105 {offsets = [0, 384], sizes = [8, 128], strides = [1, 1]} : vector<8x512xf32> to vector<8x128xf32>
    %cst_53 = arith.constant 5.000000e-01 : f32
    %125 = vector.broadcast %cst_53 : f32 to vector<8x128xf32>
    %126 = arith.mulf %125, %124 : vector<8x128xf32>
    %127 = math.tanh %126 : vector<8x128xf32>
    %cst_54 = arith.constant 5.000000e-01 : f32
    %128 = vector.broadcast %cst_54 : f32 to vector<8x128xf32>
    %129 = arith.mulf %128, %127 : vector<8x128xf32>
    %cst_55 = arith.constant 5.000000e-01 : f32
    %130 = vector.broadcast %cst_55 : f32 to vector<8x128xf32>
    %131 = arith.addf %129, %130 : vector<8x128xf32>
    %132 = arith.mulf %121, %92 : vector<8x128xf32>
    %133 = arith.mulf %113, %123 : vector<8x128xf32>
    %134 = arith.addf %132, %133 : vector<8x128xf32>
    %135 = math.tanh %134 : vector<8x128xf32>
    %136 = arith.mulf %131, %135 : vector<8x128xf32>
    %137 = arith.index_cast %98 : i32 to index
    %c0_56 = arith.constant 0 : index
    %138 = vector.load %arg5[%137, %c0_56] : memref<64x128xf32, #tpu.memory_space<vmem>>, vector<8x128xf32>
    tpu.vector_store %arg5[%137, %c0_56], %136 {strides = array<i32>} : memref<64x128xf32, #tpu.memory_space<vmem>>, vector<8x128xf32>,
    %c3_i32 = arith.constant 3 : i32
    %c8_i32_57 = arith.constant 8 : i32
    %139 = arith.muli %c3_i32, %c8_i32_57 : i32
    %140 = tpu.assume_multiple %139, 8 : i32
    %141 = arith.index_cast %140 : i32 to index
    %c0_58 = arith.constant 0 : index
    %142 = vector.load %arg8[%141, %c0_58] : memref<64x512xbf16, #tpu.memory_space<vmem>>, vector<8x512xbf16>
    %143 = arith.extf %142 : vector<8x512xbf16> to vector<8x512xf32>
    %144 = arith.truncf %136 : vector<8x128xf32> to vector<8x128xbf16>
    %c0_59 = arith.constant 0 : index
    %c0_60 = arith.constant 0 : index
    %145 = vector.load %arg3[%c0_59, %c0_60] : memref<128x512xbf16, #tpu.memory_space<vmem>>, vector<128x512xbf16>
    %cst_61 = arith.constant dense<0.000000e+00> : vector<8x512xf32>
    %146 = tpu.matmul %144, %145, %cst_61 {dimension_numbers = #tpu.dot_dimension_numbers<[1], [0], [0], [1], [0, 0, 1, 1], [], []>} : vector<8x128xbf16>, vector<128x512xbf16>, vector<8x512xf32> -> vector<8x512xf32>
    %147 = arith.addf %143, %146 : vector<8x512xf32>
    %148 = vector.extract_strided_slice %147 {offsets = [0, 0], sizes = [8, 128], strides = [1, 1]} : vector<8x512xf32> to vector<8x128xf32>
    %cst_62 = arith.constant 5.000000e-01 : f32
    %149 = vector.broadcast %cst_62 : f32 to vector<8x128xf32>
    %150 = arith.mulf %149, %148 : vector<8x128xf32>
    %151 = math.tanh %150 : vector<8x128xf32>
    %cst_63 = arith.constant 5.000000e-01 : f32
    %152 = vector.broadcast %cst_63 : f32 to vector<8x128xf32>
    %153 = arith.mulf %152, %151 : vector<8x128xf32>
    %cst_64 = arith.constant 5.000000e-01 : f32
    %154 = vector.broadcast %cst_64 : f32 to vector<8x128xf32>
    %155 = arith.addf %153, %154 : vector<8x128xf32>
    %156 = vector.extract_strided_slice %147 {offsets = [0, 128], sizes = [8, 128], strides = [1, 1]} : vector<8x512xf32> to vector<8x128xf32>
    %cst_65 = arith.constant 5.000000e-01 : f32
    %157 = vector.broadcast %cst_65 : f32 to vector<8x128xf32>
    %158 = arith.mulf %157, %156 : vector<8x128xf32>
    %159 = math.tanh %158 : vector<8x128xf32>
    %cst_66 = arith.constant 5.000000e-01 : f32
    %160 = vector.broadcast %cst_66 : f32 to vector<8x128xf32>
    %161 = arith.mulf %160, %159 : vector<8x128xf32>
    %cst_67 = arith.constant 5.000000e-01 : f32
    %162 = vector.broadcast %cst_67 : f32 to vector<8x128xf32>
    %163 = arith.addf %161, %162 : vector<8x128xf32>
    %164 = vector.extract_strided_slice %147 {offsets = [0, 256], sizes = [8, 128], strides = [1, 1]} : vector<8x512xf32> to vector<8x128xf32>
    %165 = math.tanh %164 : vector<8x128xf32>
    %166 = vector.extract_strided_slice %147 {offsets = [0, 384], sizes = [8, 128], strides = [1, 1]} : vector<8x512xf32> to vector<8x128xf32>
    %cst_68 = arith.constant 5.000000e-01 : f32
    %167 = vector.broadcast %cst_68 : f32 to vector<8x128xf32>
    %168 = arith.mulf %167, %166 : vector<8x128xf32>
    %169 = math.tanh %168 : vector<8x128xf32>
    %cst_69 = arith.constant 5.000000e-01 : f32
    %170 = vector.broadcast %cst_69 : f32 to vector<8x128xf32>
    %171 = arith.mulf %170, %169 : vector<8x128xf32>
    %cst_70 = arith.constant 5.000000e-01 : f32
    %172 = vector.broadcast %cst_70 : f32 to vector<8x128xf32>
    %173 = arith.addf %171, %172 : vector<8x128xf32>
    %174 = arith.mulf %163, %134 : vector<8x128xf32>
    %175 = arith.mulf %155, %165 : vector<8x128xf32>
    %176 = arith.addf %174, %175 : vector<8x128xf32>
    %177 = math.tanh %176 : vector<8x128xf32>
    %178 = arith.mulf %173, %177 : vector<8x128xf32>
    %179 = arith.index_cast %140 : i32 to index
    %c0_71 = arith.constant 0 : index
    %180 = vector.load %arg5[%179, %c0_71] : memref<64x128xf32, #tpu.memory_space<vmem>>, vector<8x128xf32>
    tpu.vector_store %arg5[%179, %c0_71], %178 {strides = array<i32>} : memref<64x128xf32, #tpu.memory_space<vmem>>, vector<8x128xf32>,
    %c4_i32 = arith.constant 4 : i32
    %c8_i32_72 = arith.constant 8 : i32
    %181 = arith.muli %c4_i32, %c8_i32_72 : i32
    %182 = tpu.assume_multiple %181, 8 : i32
    %183 = arith.index_cast %182 : i32 to index
    %c0_73 = arith.constant 0 : index
    %184 = vector.load %arg8[%183, %c0_73] : memref<64x512xbf16, #tpu.memory_space<vmem>>, vector<8x512xbf16>
    %185 = arith.extf %184 : vector<8x512xbf16> to vector<8x512xf32>
    %186 = arith.truncf %178 : vector<8x128xf32> to vector<8x128xbf16>
    %c0_74 = arith.constant 0 : index
    %c0_75 = arith.constant 0 : index
    %187 = vector.load %arg3[%c0_74, %c0_75] : memref<128x512xbf16, #tpu.memory_space<vmem>>, vector<128x512xbf16>
    %cst_76 = arith.constant dense<0.000000e+00> : vector<8x512xf32>
    %188 = tpu.matmul %186, %187, %cst_76 {dimension_numbers = #tpu.dot_dimension_numbers<[1], [0], [0], [1], [0, 0, 1, 1], [], []>} : vector<8x128xbf16>, vector<128x512xbf16>, vector<8x512xf32> -> vector<8x512xf32>
    %189 = arith.addf %185, %188 : vector<8x512xf32>
    %190 = vector.extract_strided_slice %189 {offsets = [0, 0], sizes = [8, 128], strides = [1, 1]} : vector<8x512xf32> to vector<8x128xf32>
    %cst_77 = arith.constant 5.000000e-01 : f32
    %191 = vector.broadcast %cst_77 : f32 to vector<8x128xf32>
    %192 = arith.mulf %191, %190 : vector<8x128xf32>
    %193 = math.tanh %192 : vector<8x128xf32>
    %cst_78 = arith.constant 5.000000e-01 : f32
    %194 = vector.broadcast %cst_78 : f32 to vector<8x128xf32>
    %195 = arith.mulf %194, %193 : vector<8x128xf32>
    %cst_79 = arith.constant 5.000000e-01 : f32
    %196 = vector.broadcast %cst_79 : f32 to vector<8x128xf32>
    %197 = arith.addf %195, %196 : vector<8x128xf32>
    %198 = vector.extract_strided_slice %189 {offsets = [0, 128], sizes = [8, 128], strides = [1, 1]} : vector<8x512xf32> to vector<8x128xf32>
    %cst_80 = arith.constant 5.000000e-01 : f32
    %199 = vector.broadcast %cst_80 : f32 to vector<8x128xf32>
    %200 = arith.mulf %199, %198 : vector<8x128xf32>
    %201 = math.tanh %200 : vector<8x128xf32>
    %cst_81 = arith.constant 5.000000e-01 : f32
    %202 = vector.broadcast %cst_81 : f32 to vector<8x128xf32>
    %203 = arith.mulf %202, %201 : vector<8x128xf32>
    %cst_82 = arith.constant 5.000000e-01 : f32
    %204 = vector.broadcast %cst_82 : f32 to vector<8x128xf32>
    %205 = arith.addf %203, %204 : vector<8x128xf32>
    %206 = vector.extract_strided_slice %189 {offsets = [0, 256], sizes = [8, 128], strides = [1, 1]} : vector<8x512xf32> to vector<8x128xf32>
    %207 = math.tanh %206 : vector<8x128xf32>
    %208 = vector.extract_strided_slice %189 {offsets = [0, 384], sizes = [8, 128], strides = [1, 1]} : vector<8x512xf32> to vector<8x128xf32>
    %cst_83 = arith.constant 5.000000e-01 : f32
    %209 = vector.broadcast %cst_83 : f32 to vector<8x128xf32>
    %210 = arith.mulf %209, %208 : vector<8x128xf32>
    %211 = math.tanh %210 : vector<8x128xf32>
    %cst_84 = arith.constant 5.000000e-01 : f32
    %212 = vector.broadcast %cst_84 : f32 to vector<8x128xf32>
    %213 = arith.mulf %212, %211 : vector<8x128xf32>
    %cst_85 = arith.constant 5.000000e-01 : f32
    %214 = vector.broadcast %cst_85 : f32 to vector<8x128xf32>
    %215 = arith.addf %213, %214 : vector<8x128xf32>
    %216 = arith.mulf %205, %176 : vector<8x128xf32>
    %217 = arith.mulf %197, %207 : vector<8x128xf32>
    %218 = arith.addf %216, %217 : vector<8x128xf32>
    %219 = math.tanh %218 : vector<8x128xf32>
    %220 = arith.mulf %215, %219 : vector<8x128xf32>
    %221 = arith.index_cast %182 : i32 to index
    %c0_86 = arith.constant 0 : index
    %222 = vector.load %arg5[%221, %c0_86] : memref<64x128xf32, #tpu.memory_space<vmem>>, vector<8x128xf32>
    tpu.vector_store %arg5[%221, %c0_86], %220 {strides = array<i32>} : memref<64x128xf32, #tpu.memory_space<vmem>>, vector<8x128xf32>,
    %c5_i32 = arith.constant 5 : i32
    %c8_i32_87 = arith.constant 8 : i32
    %223 = arith.muli %c5_i32, %c8_i32_87 : i32
    %224 = tpu.assume_multiple %223, 8 : i32
    %225 = arith.index_cast %224 : i32 to index
    %c0_88 = arith.constant 0 : index
    %226 = vector.load %arg8[%225, %c0_88] : memref<64x512xbf16, #tpu.memory_space<vmem>>, vector<8x512xbf16>
    %227 = arith.extf %226 : vector<8x512xbf16> to vector<8x512xf32>
    %228 = arith.truncf %220 : vector<8x128xf32> to vector<8x128xbf16>
    %c0_89 = arith.constant 0 : index
    %c0_90 = arith.constant 0 : index
    %229 = vector.load %arg3[%c0_89, %c0_90] : memref<128x512xbf16, #tpu.memory_space<vmem>>, vector<128x512xbf16>
    %cst_91 = arith.constant dense<0.000000e+00> : vector<8x512xf32>
    %230 = tpu.matmul %228, %229, %cst_91 {dimension_numbers = #tpu.dot_dimension_numbers<[1], [0], [0], [1], [0, 0, 1, 1], [], []>} : vector<8x128xbf16>, vector<128x512xbf16>, vector<8x512xf32> -> vector<8x512xf32>
    %231 = arith.addf %227, %230 : vector<8x512xf32>
    %232 = vector.extract_strided_slice %231 {offsets = [0, 0], sizes = [8, 128], strides = [1, 1]} : vector<8x512xf32> to vector<8x128xf32>
    %cst_92 = arith.constant 5.000000e-01 : f32
    %233 = vector.broadcast %cst_92 : f32 to vector<8x128xf32>
    %234 = arith.mulf %233, %232 : vector<8x128xf32>
    %235 = math.tanh %234 : vector<8x128xf32>
    %cst_93 = arith.constant 5.000000e-01 : f32
    %236 = vector.broadcast %cst_93 : f32 to vector<8x128xf32>
    %237 = arith.mulf %236, %235 : vector<8x128xf32>
    %cst_94 = arith.constant 5.000000e-01 : f32
    %238 = vector.broadcast %cst_94 : f32 to vector<8x128xf32>
    %239 = arith.addf %237, %238 : vector<8x128xf32>
    %240 = vector.extract_strided_slice %231 {offsets = [0, 128], sizes = [8, 128], strides = [1, 1]} : vector<8x512xf32> to vector<8x128xf32>
    %cst_95 = arith.constant 5.000000e-01 : f32
    %241 = vector.broadcast %cst_95 : f32 to vector<8x128xf32>
    %242 = arith.mulf %241, %240 : vector<8x128xf32>
    %243 = math.tanh %242 : vector<8x128xf32>
    %cst_96 = arith.constant 5.000000e-01 : f32
    %244 = vector.broadcast %cst_96 : f32 to vector<8x128xf32>
    %245 = arith.mulf %244, %243 : vector<8x128xf32>
    %cst_97 = arith.constant 5.000000e-01 : f32
    %246 = vector.broadcast %cst_97 : f32 to vector<8x128xf32>
    %247 = arith.addf %245, %246 : vector<8x128xf32>
    %248 = vector.extract_strided_slice %231 {offsets = [0, 256], sizes = [8, 128], strides = [1, 1]} : vector<8x512xf32> to vector<8x128xf32>
    %249 = math.tanh %248 : vector<8x128xf32>
    %250 = vector.extract_strided_slice %231 {offsets = [0, 384], sizes = [8, 128], strides = [1, 1]} : vector<8x512xf32> to vector<8x128xf32>
    %cst_98 = arith.constant 5.000000e-01 : f32
    %251 = vector.broadcast %cst_98 : f32 to vector<8x128xf32>
    %252 = arith.mulf %251, %250 : vector<8x128xf32>
    %253 = math.tanh %252 : vector<8x128xf32>
    %cst_99 = arith.constant 5.000000e-01 : f32
    %254 = vector.broadcast %cst_99 : f32 to vector<8x128xf32>
    %255 = arith.mulf %254, %253 : vector<8x128xf32>
    %cst_100 = arith.constant 5.000000e-01 : f32
    %256 = vector.broadcast %cst_100 : f32 to vector<8x128xf32>
    %257 = arith.addf %255, %256 : vector<8x128xf32>
    %258 = arith.mulf %247, %218 : vector<8x128xf32>
    %259 = arith.mulf %239, %249 : vector<8x128xf32>
    %260 = arith.addf %258, %259 : vector<8x128xf32>
    %261 = math.tanh %260 : vector<8x128xf32>
    %262 = arith.mulf %257, %261 : vector<8x128xf32>
    %263 = arith.index_cast %224 : i32 to index
    %c0_101 = arith.constant 0 : index
    %264 = vector.load %arg5[%263, %c0_101] : memref<64x128xf32, #tpu.memory_space<vmem>>, vector<8x128xf32>
    tpu.vector_store %arg5[%263, %c0_101], %262 {strides = array<i32>} : memref<64x128xf32, #tpu.memory_space<vmem>>, vector<8x128xf32>,
    %c6_i32 = arith.constant 6 : i32
    %c8_i32_102 = arith.constant 8 : i32
    %265 = arith.muli %c6_i32, %c8_i32_102 : i32
    %266 = tpu.assume_multiple %265, 8 : i32
    %267 = arith.index_cast %266 : i32 to index
    %c0_103 = arith.constant 0 : index
    %268 = vector.load %arg8[%267, %c0_103] : memref<64x512xbf16, #tpu.memory_space<vmem>>, vector<8x512xbf16>
    %269 = arith.extf %268 : vector<8x512xbf16> to vector<8x512xf32>
    %270 = arith.truncf %262 : vector<8x128xf32> to vector<8x128xbf16>
    %c0_104 = arith.constant 0 : index
    %c0_105 = arith.constant 0 : index
    %271 = vector.load %arg3[%c0_104, %c0_105] : memref<128x512xbf16, #tpu.memory_space<vmem>>, vector<128x512xbf16>
    %cst_106 = arith.constant dense<0.000000e+00> : vector<8x512xf32>
    %272 = tpu.matmul %270, %271, %cst_106 {dimension_numbers = #tpu.dot_dimension_numbers<[1], [0], [0], [1], [0, 0, 1, 1], [], []>} : vector<8x128xbf16>, vector<128x512xbf16>, vector<8x512xf32> -> vector<8x512xf32>
    %273 = arith.addf %269, %272 : vector<8x512xf32>
    %274 = vector.extract_strided_slice %273 {offsets = [0, 0], sizes = [8, 128], strides = [1, 1]} : vector<8x512xf32> to vector<8x128xf32>
    %cst_107 = arith.constant 5.000000e-01 : f32
    %275 = vector.broadcast %cst_107 : f32 to vector<8x128xf32>
    %276 = arith.mulf %275, %274 : vector<8x128xf32>
    %277 = math.tanh %276 : vector<8x128xf32>
    %cst_108 = arith.constant 5.000000e-01 : f32
    %278 = vector.broadcast %cst_108 : f32 to vector<8x128xf32>
    %279 = arith.mulf %278, %277 : vector<8x128xf32>
    %cst_109 = arith.constant 5.000000e-01 : f32
    %280 = vector.broadcast %cst_109 : f32 to vector<8x128xf32>
    %281 = arith.addf %279, %280 : vector<8x128xf32>
    %282 = vector.extract_strided_slice %273 {offsets = [0, 128], sizes = [8, 128], strides = [1, 1]} : vector<8x512xf32> to vector<8x128xf32>
    %cst_110 = arith.constant 5.000000e-01 : f32
    %283 = vector.broadcast %cst_110 : f32 to vector<8x128xf32>
    %284 = arith.mulf %283, %282 : vector<8x128xf32>
    %285 = math.tanh %284 : vector<8x128xf32>
    %cst_111 = arith.constant 5.000000e-01 : f32
    %286 = vector.broadcast %cst_111 : f32 to vector<8x128xf32>
    %287 = arith.mulf %286, %285 : vector<8x128xf32>
    %cst_112 = arith.constant 5.000000e-01 : f32
    %288 = vector.broadcast %cst_112 : f32 to vector<8x128xf32>
    %289 = arith.addf %287, %288 : vector<8x128xf32>
    %290 = vector.extract_strided_slice %273 {offsets = [0, 256], sizes = [8, 128], strides = [1, 1]} : vector<8x512xf32> to vector<8x128xf32>
    %291 = math.tanh %290 : vector<8x128xf32>
    %292 = vector.extract_strided_slice %273 {offsets = [0, 384], sizes = [8, 128], strides = [1, 1]} : vector<8x512xf32> to vector<8x128xf32>
    %cst_113 = arith.constant 5.000000e-01 : f32
    %293 = vector.broadcast %cst_113 : f32 to vector<8x128xf32>
    %294 = arith.mulf %293, %292 : vector<8x128xf32>
    %295 = math.tanh %294 : vector<8x128xf32>
    %cst_114 = arith.constant 5.000000e-01 : f32
    %296 = vector.broadcast %cst_114 : f32 to vector<8x128xf32>
    %297 = arith.mulf %296, %295 : vector<8x128xf32>
    %cst_115 = arith.constant 5.000000e-01 : f32
    %298 = vector.broadcast %cst_115 : f32 to vector<8x128xf32>
    %299 = arith.addf %297, %298 : vector<8x128xf32>
    %300 = arith.mulf %289, %260 : vector<8x128xf32>
    %301 = arith.mulf %281, %291 : vector<8x128xf32>
    %302 = arith.addf %300, %301 : vector<8x128xf32>
    %303 = math.tanh %302 : vector<8x128xf32>
    %304 = arith.mulf %299, %303 : vector<8x128xf32>
    %305 = arith.index_cast %266 : i32 to index
    %c0_116 = arith.constant 0 : index
    %306 = vector.load %arg5[%305, %c0_116] : memref<64x128xf32, #tpu.memory_space<vmem>>, vector<8x128xf32>
    tpu.vector_store %arg5[%305, %c0_116], %304 {strides = array<i32>} : memref<64x128xf32, #tpu.memory_space<vmem>>, vector<8x128xf32>,
    %c7_i32 = arith.constant 7 : i32
    %c8_i32_117 = arith.constant 8 : i32
    %307 = arith.muli %c7_i32, %c8_i32_117 : i32
    %308 = tpu.assume_multiple %307, 8 : i32
    %309 = arith.index_cast %308 : i32 to index
    %c0_118 = arith.constant 0 : index
    %310 = vector.load %arg8[%309, %c0_118] : memref<64x512xbf16, #tpu.memory_space<vmem>>, vector<8x512xbf16>
    %311 = arith.extf %310 : vector<8x512xbf16> to vector<8x512xf32>
    %312 = arith.truncf %304 : vector<8x128xf32> to vector<8x128xbf16>
    %c0_119 = arith.constant 0 : index
    %c0_120 = arith.constant 0 : index
    %313 = vector.load %arg3[%c0_119, %c0_120] : memref<128x512xbf16, #tpu.memory_space<vmem>>, vector<128x512xbf16>
    %cst_121 = arith.constant dense<0.000000e+00> : vector<8x512xf32>
    %314 = tpu.matmul %312, %313, %cst_121 {dimension_numbers = #tpu.dot_dimension_numbers<[1], [0], [0], [1], [0, 0, 1, 1], [], []>} : vector<8x128xbf16>, vector<128x512xbf16>, vector<8x512xf32> -> vector<8x512xf32>
    %315 = arith.addf %311, %314 : vector<8x512xf32>
    %316 = vector.extract_strided_slice %315 {offsets = [0, 0], sizes = [8, 128], strides = [1, 1]} : vector<8x512xf32> to vector<8x128xf32>
    %cst_122 = arith.constant 5.000000e-01 : f32
    %317 = vector.broadcast %cst_122 : f32 to vector<8x128xf32>
    %318 = arith.mulf %317, %316 : vector<8x128xf32>
    %319 = math.tanh %318 : vector<8x128xf32>
    %cst_123 = arith.constant 5.000000e-01 : f32
    %320 = vector.broadcast %cst_123 : f32 to vector<8x128xf32>
    %321 = arith.mulf %320, %319 : vector<8x128xf32>
    %cst_124 = arith.constant 5.000000e-01 : f32
    %322 = vector.broadcast %cst_124 : f32 to vector<8x128xf32>
    %323 = arith.addf %321, %322 : vector<8x128xf32>
    %324 = vector.extract_strided_slice %315 {offsets = [0, 128], sizes = [8, 128], strides = [1, 1]} : vector<8x512xf32> to vector<8x128xf32>
    %cst_125 = arith.constant 5.000000e-01 : f32
    %325 = vector.broadcast %cst_125 : f32 to vector<8x128xf32>
    %326 = arith.mulf %325, %324 : vector<8x128xf32>
    %327 = math.tanh %326 : vector<8x128xf32>
    %cst_126 = arith.constant 5.000000e-01 : f32
    %328 = vector.broadcast %cst_126 : f32 to vector<8x128xf32>
    %329 = arith.mulf %328, %327 : vector<8x128xf32>
    %cst_127 = arith.constant 5.000000e-01 : f32
    %330 = vector.broadcast %cst_127 : f32 to vector<8x128xf32>
    %331 = arith.addf %329, %330 : vector<8x128xf32>
    %332 = vector.extract_strided_slice %315 {offsets = [0, 256], sizes = [8, 128], strides = [1, 1]} : vector<8x512xf32> to vector<8x128xf32>
    %333 = math.tanh %332 : vector<8x128xf32>
    %334 = vector.extract_strided_slice %315 {offsets = [0, 384], sizes = [8, 128], strides = [1, 1]} : vector<8x512xf32> to vector<8x128xf32>
    %cst_128 = arith.constant 5.000000e-01 : f32
    %335 = vector.broadcast %cst_128 : f32 to vector<8x128xf32>
    %336 = arith.mulf %335, %334 : vector<8x128xf32>
    %337 = math.tanh %336 : vector<8x128xf32>
    %cst_129 = arith.constant 5.000000e-01 : f32
    %338 = vector.broadcast %cst_129 : f32 to vector<8x128xf32>
    %339 = arith.mulf %338, %337 : vector<8x128xf32>
    %cst_130 = arith.constant 5.000000e-01 : f32
    %340 = vector.broadcast %cst_130 : f32 to vector<8x128xf32>
    %341 = arith.addf %339, %340 : vector<8x128xf32>
    %342 = arith.mulf %331, %302 : vector<8x128xf32>
    %343 = arith.mulf %323, %333 : vector<8x128xf32>
    %344 = arith.addf %342, %343 : vector<8x128xf32>
    %345 = math.tanh %344 : vector<8x128xf32>
    %346 = arith.mulf %341, %345 : vector<8x128xf32>
    %347 = arith.index_cast %308 : i32 to index
    %c0_131 = arith.constant 0 : index
    %348 = vector.load %arg5[%347, %c0_131] : memref<64x128xf32, #tpu.memory_space<vmem>>, vector<8x128xf32>
    tpu.vector_store %arg5[%347, %c0_131], %346 {strides = array<i32>} : memref<64x128xf32, #tpu.memory_space<vmem>>, vector<8x128xf32>,
    %c8_i32_132 = arith.constant 8 : i32
    %c0_133 = arith.constant 0 : index
    %c0_134 = arith.constant 0 : index
    %349 = vector.load %arg6[%c0_133, %c0_134] : memref<8x128xf32, #tpu.memory_space<vmem>>, vector<8x128xf32>
    tpu.vector_store %arg6[%c0_133, %c0_134], %346 {strides = array<i32>} : memref<8x128xf32, #tpu.memory_space<vmem>>, vector<8x128xf32>,
    %c0_135 = arith.constant 0 : index
    %c0_136 = arith.constant 0 : index
    %350 = vector.load %arg7[%c0_135, %c0_136] : memref<8x128xf32, #tpu.memory_space<vmem>>, vector<8x128xf32>
    tpu.vector_store %arg7[%c0_135, %c0_136], %344 {strides = array<i32>} : memref<8x128xf32, #tpu.memory_space<vmem>>, vector<8x128xf32>,
    return
  }
  func.func @transform_0(%arg0: i32) -> (i32, i32) {
    %c0_i32 = arith.constant 0 : i32
    %c0_i32_0 = arith.constant 0 : i32
    return %arg0, %c0_i32 : i32, i32
  }
  func.func @transform_1(%arg0: i32) -> (i32, i32) {
    %c0_i32 = arith.constant 0 : i32
    %c0_i32_0 = arith.constant 0 : i32
    %c0_i32_1 = arith.constant 0 : i32
    return %c0_i32, %c0_i32_0 : i32, i32
  }
  func.func @transform_2(%arg0: i32) -> (i32, i32) {
    %c0_i32 = arith.constant 0 : i32
    %c0_i32_0 = arith.constant 0 : i32
    %c0_i32_1 = arith.constant 0 : i32
    return %c0_i32, %c0_i32_0 : i32, i32
  }
  func.func @transform_3(%arg0: i32) -> (i32, i32) {
    %c0_i32 = arith.constant 0 : i32
    %c0_i32_0 = arith.constant 0 : i32
    %c0_i32_1 = arith.constant 0 : i32
    return %c0_i32, %c0_i32_0 : i32, i32
  }
  func.func @transform_4(%arg0: i32) -> (i32, i32) {
    %c0_i32 = arith.constant 0 : i32
    %c0_i32_0 = arith.constant 0 : i32
    return %arg0, %c0_i32 : i32, i32
  }
}

module attributes {stable_mosaic.version = 11 : i64} {
  func.func @_lstm_kernel(%arg0: i32, %arg1: memref<64x16xbf16, #tpu.memory_space<vmem>>, %arg2: memref<16x512xbf16, #tpu.memory_space<vmem>>, %arg3: memref<128x512xbf16, #tpu.memory_space<vmem>>, %arg4: memref<1x512xf32, #tpu.memory_space<vmem>>, %arg5: memref<64x128xf32, #tpu.memory_space<vmem>>, %arg6: memref<8x128xf32, #tpu.memory_space<vmem>>, %arg7: memref<8x128xf32, #tpu.memory_space<vmem>>, %arg8: memref<64x512xbf16, #tpu.memory_space<vmem>>) attributes {dimension_semantics = [#tpu.dimension_semantics<arbitrary>], iteration_bounds = array<i64: 1>, scalar_prefetch = 0 : i64, scratch_operands = 3 : i64, tpu.core_type = #tpu.core_type<tc>, window_params = [{transform_indices = @transform_0, window_bounds = array<i64: 64, 16>}, {pipeline_mode = #tpu.pipeline_mode<synchronous>, transform_indices = @transform_1, window_bounds = array<i64: 16, 512>}, {pipeline_mode = #tpu.pipeline_mode<synchronous>, transform_indices = @transform_2, window_bounds = array<i64: 128, 512>}, {pipeline_mode = #tpu.pipeline_mode<synchronous>, transform_indices = @transform_3, window_bounds = array<i64: 1, 512>}, {transform_indices = @transform_4, window_bounds = array<i64: 64, 128>}]} {
    %c0_i32 = arith.constant 0 : i32
    %0 = arith.cmpi eq, %arg0, %c0_i32 : i32
    %1 = arith.extui %0 : i1 to i32
    %c0_i32_0 = arith.constant 0 : i32
    %2 = arith.cmpi ne, %1, %c0_i32_0 : i32
    scf.if %2 {
      %cst_137 = arith.constant 0.000000e+00 : f32
      %351 = vector.broadcast %cst_137 : f32 to vector<8x128xf32>
      %c0_138 = arith.constant 0 : index
      %c0_139 = arith.constant 0 : index
      %352 = vector.load %arg6[%c0_138, %c0_139] : memref<8x128xf32, #tpu.memory_space<vmem>>, vector<8x128xf32>
      tpu.vector_store %arg6[%c0_138, %c0_139], %351 {strides = array<i32>} : memref<8x128xf32, #tpu.memory_space<vmem>>, vector<8x128xf32>,
      %cst_140 = arith.constant 0.000000e+00 : f32
      %353 = vector.broadcast %cst_140 : f32 to vector<8x128xf32>
      %c0_141 = arith.constant 0 : index
      %c0_142 = arith.constant 0 : index
      %354 = vector.load %arg7[%c0_141, %c0_142] : memref<8x128xf32, #tpu.memory_space<vmem>>, vector<8x128xf32>
      tpu.vector_store %arg7[%c0_141, %c0_142], %353 {strides = array<i32>} : memref<8x128xf32, #tpu.memory_space<vmem>>, vector<8x128xf32>,
    } else {
    }
    %c0 = arith.constant 0 : index
    %c0_1 = arith.constant 0 : index
    %3 = vector.load %arg1[%c0, %c0_1] : memref<64x16xbf16, #tpu.memory_space<vmem>>, vector<64x16xbf16>
    %c0_2 = arith.constant 0 : index
    %c0_3 = arith.constant 0 : index
    %4 = vector.load %arg2[%c0_2, %c0_3] : memref<16x512xbf16, #tpu.memory_space<vmem>>, vector<16x512xbf16>
    %cst = arith.constant dense<0.000000e+00> : vector<64x512xf32>
    %5 = tpu.matmul %3, %4, %cst {dimension_numbers = #tpu.dot_dimension_numbers<[1], [0], [0], [1], [0, 0, 1, 1], [], []>} : vector<64x16xbf16>, vector<16x512xbf16>, vector<64x512xf32> -> vector<64x512xf32>
    %c0_4 = arith.constant 0 : index
    %c0_5 = arith.constant 0 : index
    %6 = vector.load %arg4[%c0_4, %c0_5] : memref<1x512xf32, #tpu.memory_space<vmem>>, vector<1x512xf32>
    %7 = vector.broadcast %6 : vector<1x512xf32> to vector<64x512xf32>
    %8 = arith.addf %5, %7 : vector<64x512xf32>
    %9 = arith.truncf %8 : vector<64x512xf32> to vector<64x512xbf16>
    %c0_6 = arith.constant 0 : index
    %c0_7 = arith.constant 0 : index
    %10 = vector.load %arg8[%c0_6, %c0_7] : memref<64x512xbf16, #tpu.memory_space<vmem>>, vector<64x512xbf16>
    tpu.vector_store %arg8[%c0_6, %c0_7], %9 {strides = array<i32>} : memref<64x512xbf16, #tpu.memory_space<vmem>>, vector<64x512xbf16>,
    %c0_8 = arith.constant 0 : index
    %c0_9 = arith.constant 0 : index
    %11 = vector.load %arg6[%c0_8, %c0_9] : memref<8x128xf32, #tpu.memory_space<vmem>>, vector<8x128xf32>
    %c0_10 = arith.constant 0 : index
    %c0_11 = arith.constant 0 : index
    %12 = vector.load %arg7[%c0_10, %c0_11] : memref<8x128xf32, #tpu.memory_space<vmem>>, vector<8x128xf32>
    %c0_i32_12 = arith.constant 0 : i32
    %c8_i32 = arith.constant 8 : i32
    %13 = arith.muli %c0_i32_12, %c8_i32 : i32
    %14 = tpu.assume_multiple %13, 8 : i32
    %15 = arith.index_cast %14 : i32 to index
    %c0_13 = arith.constant 0 : index
    %16 = vector.load %arg8[%15, %c0_13] : memref<64x512xbf16, #tpu.memory_space<vmem>>, vector<8x512xbf16>
    %17 = arith.extf %16 : vector<8x512xbf16> to vector<8x512xf32>
    %18 = arith.truncf %11 : vector<8x128xf32> to vector<8x128xbf16>
    %c0_14 = arith.constant 0 : index
    %c0_15 = arith.constant 0 : index
    %19 = vector.load %arg3[%c0_14, %c0_15] : memref<128x512xbf16, #tpu.memory_space<vmem>>, vector<128x512xbf16>
    %cst_16 = arith.constant dense<0.000000e+00> : vector<8x512xf32>
    %20 = tpu.matmul %18, %19, %cst_16 {dimension_numbers = #tpu.dot_dimension_numbers<[1], [0], [0], [1], [0, 0, 1, 1], [], []>} : vector<8x128xbf16>, vector<128x512xbf16>, vector<8x512xf32> -> vector<8x512xf32>
    %21 = arith.addf %17, %20 : vector<8x512xf32>
    %22 = vector.extract_strided_slice %21 {offsets = [0, 0], sizes = [8, 128], strides = [1, 1]} : vector<8x512xf32> to vector<8x128xf32>
    %cst_17 = arith.constant 5.000000e-01 : f32
    %23 = vector.broadcast %cst_17 : f32 to vector<8x128xf32>
    %24 = arith.mulf %23, %22 : vector<8x128xf32>
    %25 = math.tanh %24 : vector<8x128xf32>
    %cst_18 = arith.constant 5.000000e-01 : f32
    %26 = vector.broadcast %cst_18 : f32 to vector<8x128xf32>
    %27 = arith.mulf %26, %25 : vector<8x128xf32>
    %cst_19 = arith.constant 5.000000e-01 : f32
    %28 = vector.broadcast %cst_19 : f32 to vector<8x128xf32>
    %29 = arith.addf %27, %28 : vector<8x128xf32>
    %30 = vector.extract_strided_slice %21 {offsets = [0, 128], sizes = [8, 128], strides = [1, 1]} : vector<8x512xf32> to vector<8x128xf32>
    %cst_20 = arith.constant 5.000000e-01 : f32
    %31 = vector.broadcast %cst_20 : f32 to vector<8x128xf32>
    %32 = arith.mulf %31, %30 : vector<8x128xf32>
    %33 = math.tanh %32 : vector<8x128xf32>
    %cst_21 = arith.constant 5.000000e-01 : f32
    %34 = vector.broadcast %cst_21 : f32 to vector<8x128xf32>
    %35 = arith.mulf %34, %33 : vector<8x128xf32>
    %cst_22 = arith.constant 5.000000e-01 : f32
    %36 = vector.broadcast %cst_22 : f32 to vector<8x128xf32>
    %37 = arith.addf %35, %36 : vector<8x128xf32>
    %38 = vector.extract_strided_slice %21 {offsets = [0, 256], sizes = [8, 128], strides = [1, 1]} : vector<8x512xf32> to vector<8x128xf32>
    %39 = math.tanh %38 : vector<8x128xf32>
    %40 = vector.extract_strided_slice %21 {offsets = [0, 384], sizes = [8, 128], strides = [1, 1]} : vector<8x512xf32> to vector<8x128xf32>
    %cst_23 = arith.constant 5.000000e-01 : f32
    %41 = vector.broadcast %cst_23 : f32 to vector<8x128xf32>
    %42 = arith.mulf %41, %40 : vector<8x128xf32>
    %43 = math.tanh %42 : vector<8x128xf32>
    %cst_24 = arith.constant 5.000000e-01 : f32
    %44 = vector.broadcast %cst_24 : f32 to vector<8x128xf32>
    %45 = arith.mulf %44, %43 : vector<8x128xf32>
    %cst_25 = arith.constant 5.000000e-01 : f32
    %46 = vector.broadcast %cst_25 : f32 to vector<8x128xf32>
    %47 = arith.addf %45, %46 : vector<8x128xf32>
    %48 = arith.mulf %37, %12 : vector<8x128xf32>
    %49 = arith.mulf %29, %39 : vector<8x128xf32>
    %50 = arith.addf %48, %49 : vector<8x128xf32>
    %51 = math.tanh %50 : vector<8x128xf32>
    %52 = arith.mulf %47, %51 : vector<8x128xf32>
    %53 = arith.index_cast %14 : i32 to index
    %c0_26 = arith.constant 0 : index
    %54 = vector.load %arg5[%53, %c0_26] : memref<64x128xf32, #tpu.memory_space<vmem>>, vector<8x128xf32>
    tpu.vector_store %arg5[%53, %c0_26], %52 {strides = array<i32>} : memref<64x128xf32, #tpu.memory_space<vmem>>, vector<8x128xf32>,
    %c1_i32 = arith.constant 1 : i32
    %c8_i32_27 = arith.constant 8 : i32
    %55 = arith.muli %c1_i32, %c8_i32_27 : i32
    %56 = tpu.assume_multiple %55, 8 : i32
    %57 = arith.index_cast %56 : i32 to index
    %c0_28 = arith.constant 0 : index
    %58 = vector.load %arg8[%57, %c0_28] : memref<64x512xbf16, #tpu.memory_space<vmem>>, vector<8x512xbf16>
    %59 = arith.extf %58 : vector<8x512xbf16> to vector<8x512xf32>
    %60 = arith.truncf %52 : vector<8x128xf32> to vector<8x128xbf16>
    %c0_29 = arith.constant 0 : index
    %c0_30 = arith.constant 0 : index
    %61 = vector.load %arg3[%c0_29, %c0_30] : memref<128x512xbf16, #tpu.memory_space<vmem>>, vector<128x512xbf16>
    %cst_31 = arith.constant dense<0.000000e+00> : vector<8x512xf32>
    %62 = tpu.matmul %60, %61, %cst_31 {dimension_numbers = #tpu.dot_dimension_numbers<[1], [0], [0], [1], [0, 0, 1, 1], [], []>} : vector<8x128xbf16>, vector<128x512xbf16>, vector<8x512xf32> -> vector<8x512xf32>
    %63 = arith.addf %59, %62 : vector<8x512xf32>
    %64 = vector.extract_strided_slice %63 {offsets = [0, 0], sizes = [8, 128], strides = [1, 1]} : vector<8x512xf32> to vector<8x128xf32>
    %cst_32 = arith.constant 5.000000e-01 : f32
    %65 = vector.broadcast %cst_32 : f32 to vector<8x128xf32>
    %66 = arith.mulf %65, %64 : vector<8x128xf32>
    %67 = math.tanh %66 : vector<8x128xf32>
    %cst_33 = arith.constant 5.000000e-01 : f32
    %68 = vector.broadcast %cst_33 : f32 to vector<8x128xf32>
    %69 = arith.mulf %68, %67 : vector<8x128xf32>
    %cst_34 = arith.constant 5.000000e-01 : f32
    %70 = vector.broadcast %cst_34 : f32 to vector<8x128xf32>
    %71 = arith.addf %69, %70 : vector<8x128xf32>
    %72 = vector.extract_strided_slice %63 {offsets = [0, 128], sizes = [8, 128], strides = [1, 1]} : vector<8x512xf32> to vector<8x128xf32>
    %cst_35 = arith.constant 5.000000e-01 : f32
    %73 = vector.broadcast %cst_35 : f32 to vector<8x128xf32>
    %74 = arith.mulf %73, %72 : vector<8x128xf32>
    %75 = math.tanh %74 : vector<8x128xf32>
    %cst_36 = arith.constant 5.000000e-01 : f32
    %76 = vector.broadcast %cst_36 : f32 to vector<8x128xf32>
    %77 = arith.mulf %76, %75 : vector<8x128xf32>
    %cst_37 = arith.constant 5.000000e-01 : f32
    %78 = vector.broadcast %cst_37 : f32 to vector<8x128xf32>
    %79 = arith.addf %77, %78 : vector<8x128xf32>
    %80 = vector.extract_strided_slice %63 {offsets = [0, 256], sizes = [8, 128], strides = [1, 1]} : vector<8x512xf32> to vector<8x128xf32>
    %81 = math.tanh %80 : vector<8x128xf32>
    %82 = vector.extract_strided_slice %63 {offsets = [0, 384], sizes = [8, 128], strides = [1, 1]} : vector<8x512xf32> to vector<8x128xf32>
    %cst_38 = arith.constant 5.000000e-01 : f32
    %83 = vector.broadcast %cst_38 : f32 to vector<8x128xf32>
    %84 = arith.mulf %83, %82 : vector<8x128xf32>
    %85 = math.tanh %84 : vector<8x128xf32>
    %cst_39 = arith.constant 5.000000e-01 : f32
    %86 = vector.broadcast %cst_39 : f32 to vector<8x128xf32>
    %87 = arith.mulf %86, %85 : vector<8x128xf32>
    %cst_40 = arith.constant 5.000000e-01 : f32
    %88 = vector.broadcast %cst_40 : f32 to vector<8x128xf32>
    %89 = arith.addf %87, %88 : vector<8x128xf32>
    %90 = arith.mulf %79, %50 : vector<8x128xf32>
    %91 = arith.mulf %71, %81 : vector<8x128xf32>
    %92 = arith.addf %90, %91 : vector<8x128xf32>
    %93 = math.tanh %92 : vector<8x128xf32>
    %94 = arith.mulf %89, %93 : vector<8x128xf32>
    %95 = arith.index_cast %56 : i32 to index
    %c0_41 = arith.constant 0 : index
    %96 = vector.load %arg5[%95, %c0_41] : memref<64x128xf32, #tpu.memory_space<vmem>>, vector<8x128xf32>
    tpu.vector_store %arg5[%95, %c0_41], %94 {strides = array<i32>} : memref<64x128xf32, #tpu.memory_space<vmem>>, vector<8x128xf32>,
    %c2_i32 = arith.constant 2 : i32
    %c8_i32_42 = arith.constant 8 : i32
    %97 = arith.muli %c2_i32, %c8_i32_42 : i32
    %98 = tpu.assume_multiple %97, 8 : i32
    %99 = arith.index_cast %98 : i32 to index
    %c0_43 = arith.constant 0 : index
    %100 = vector.load %arg8[%99, %c0_43] : memref<64x512xbf16, #tpu.memory_space<vmem>>, vector<8x512xbf16>
    %101 = arith.extf %100 : vector<8x512xbf16> to vector<8x512xf32>
    %102 = arith.truncf %94 : vector<8x128xf32> to vector<8x128xbf16>
    %c0_44 = arith.constant 0 : index
    %c0_45 = arith.constant 0 : index
    %103 = vector.load %arg3[%c0_44, %c0_45] : memref<128x512xbf16, #tpu.memory_space<vmem>>, vector<128x512xbf16>
    %cst_46 = arith.constant dense<0.000000e+00> : vector<8x512xf32>
    %104 = tpu.matmul %102, %103, %cst_46 {dimension_numbers = #tpu.dot_dimension_numbers<[1], [0], [0], [1], [0, 0, 1, 1], [], []>} : vector<8x128xbf16>, vector<128x512xbf16>, vector<8x512xf32> -> vector<8x512xf32>
    %105 = arith.addf %101, %104 : vector<8x512xf32>
    %106 = vector.extract_strided_slice %105 {offsets = [0, 0], sizes = [8, 128], strides = [1, 1]} : vector<8x512xf32> to vector<8x128xf32>
    %cst_47 = arith.constant 5.000000e-01 : f32
    %107 = vector.broadcast %cst_47 : f32 to vector<8x128xf32>
    %108 = arith.mulf %107, %106 : vector<8x128xf32>
    %109 = math.tanh %108 : vector<8x128xf32>
    %cst_48 = arith.constant 5.000000e-01 : f32
    %110 = vector.broadcast %cst_48 : f32 to vector<8x128xf32>
    %111 = arith.mulf %110, %109 : vector<8x128xf32>
    %cst_49 = arith.constant 5.000000e-01 : f32
    %112 = vector.broadcast %cst_49 : f32 to vector<8x128xf32>
    %113 = arith.addf %111, %112 : vector<8x128xf32>
    %114 = vector.extract_strided_slice %105 {offsets = [0, 128], sizes = [8, 128], strides = [1, 1]} : vector<8x512xf32> to vector<8x128xf32>
    %cst_50 = arith.constant 5.000000e-01 : f32
    %115 = vector.broadcast %cst_50 : f32 to vector<8x128xf32>
    %116 = arith.mulf %115, %114 : vector<8x128xf32>
    %117 = math.tanh %116 : vector<8x128xf32>
    %cst_51 = arith.constant 5.000000e-01 : f32
    %118 = vector.broadcast %cst_51 : f32 to vector<8x128xf32>
    %119 = arith.mulf %118, %117 : vector<8x128xf32>
    %cst_52 = arith.constant 5.000000e-01 : f32
    %120 = vector.broadcast %cst_52 : f32 to vector<8x128xf32>
    %121 = arith.addf %119, %120 : vector<8x128xf32>
    %122 = vector.extract_strided_slice %105 {offsets = [0, 256], sizes = [8, 128], strides = [1, 1]} : vector<8x512xf32> to vector<8x128xf32>
    %123 = math.tanh %122 : vector<8x128xf32>
    %124 = vector.extract_strided_slice %105 {offsets = [0, 384], sizes = [8, 128], strides = [1, 1]} : vector<8x512xf32> to vector<8x128xf32>
    %cst_53 = arith.constant 5.000000e-01 : f32
    %125 = vector.broadcast %cst_53 : f32 to vector<8x128xf32>
    %126 = arith.mulf %125, %124 : vector<8x128xf32>
    %127 = math.tanh %126 : vector<8x128xf32>
    %cst_54 = arith.constant 5.000000e-01 : f32
    %128 = vector.broadcast %cst_54 : f32 to vector<8x128xf32>
    %129 = arith.mulf %128, %127 : vector<8x128xf32>
    %cst_55 = arith.constant 5.000000e-01 : f32
    %130 = vector.broadcast %cst_55 : f32 to vector<8x128xf32>
    %131 = arith.addf %129, %130 : vector<8x128xf32>
    %132 = arith.mulf %121, %92 : vector<8x128xf32>
    %133 = arith.mulf %113, %123 : vector<8x128xf32>
    %134 = arith.addf %132, %133 : vector<8x128xf32>
    %135 = math.tanh %134 : vector<8x128xf32>
    %136 = arith.mulf %131, %135 : vector<8x128xf32>
    %137 = arith.index_cast %98 : i32 to index
    %c0_56 = arith.constant 0 : index
    %138 = vector.load %arg5[%137, %c0_56] : memref<64x128xf32, #tpu.memory_space<vmem>>, vector<8x128xf32>
    tpu.vector_store %arg5[%137, %c0_56], %136 {strides = array<i32>} : memref<64x128xf32, #tpu.memory_space<vmem>>, vector<8x128xf32>,
    %c3_i32 = arith.constant 3 : i32
    %c8_i32_57 = arith.constant 8 : i32
    %139 = arith.muli %c3_i32, %c8_i32_57 : i32
    %140 = tpu.assume_multiple %139, 8 : i32
    %141 = arith.index_cast %140 : i32 to index
    %c0_58 = arith.constant 0 : index
    %142 = vector.load %arg8[%141, %c0_58] : memref<64x512xbf16, #tpu.memory_space<vmem>>, vector<8x512xbf16>
    %143 = arith.extf %142 : vector<8x512xbf16> to vector<8x512xf32>
    %144 = arith.truncf %136 : vector<8x128xf32> to vector<8x128xbf16>
    %c0_59 = arith.constant 0 : index
    %c0_60 = arith.constant 0 : index
    %145 = vector.load %arg3[%c0_59, %c0_60] : memref<128x512xbf16, #tpu.memory_space<vmem>>, vector<128x512xbf16>
    %cst_61 = arith.constant dense<0.000000e+00> : vector<8x512xf32>
    %146 = tpu.matmul %144, %145, %cst_61 {dimension_numbers = #tpu.dot_dimension_numbers<[1], [0], [0], [1], [0, 0, 1, 1], [], []>} : vector<8x128xbf16>, vector<128x512xbf16>, vector<8x512xf32> -> vector<8x512xf32>
    %147 = arith.addf %143, %146 : vector<8x512xf32>
    %148 = vector.extract_strided_slice %147 {offsets = [0, 0], sizes = [8, 128], strides = [1, 1]} : vector<8x512xf32> to vector<8x128xf32>
    %cst_62 = arith.constant 5.000000e-01 : f32
    %149 = vector.broadcast %cst_62 : f32 to vector<8x128xf32>
    %150 = arith.mulf %149, %148 : vector<8x128xf32>
    %151 = math.tanh %150 : vector<8x128xf32>
    %cst_63 = arith.constant 5.000000e-01 : f32
    %152 = vector.broadcast %cst_63 : f32 to vector<8x128xf32>
    %153 = arith.mulf %152, %151 : vector<8x128xf32>
    %cst_64 = arith.constant 5.000000e-01 : f32
    %154 = vector.broadcast %cst_64 : f32 to vector<8x128xf32>
    %155 = arith.addf %153, %154 : vector<8x128xf32>
    %156 = vector.extract_strided_slice %147 {offsets = [0, 128], sizes = [8, 128], strides = [1, 1]} : vector<8x512xf32> to vector<8x128xf32>
    %cst_65 = arith.constant 5.000000e-01 : f32
    %157 = vector.broadcast %cst_65 : f32 to vector<8x128xf32>
    %158 = arith.mulf %157, %156 : vector<8x128xf32>
    %159 = math.tanh %158 : vector<8x128xf32>
    %cst_66 = arith.constant 5.000000e-01 : f32
    %160 = vector.broadcast %cst_66 : f32 to vector<8x128xf32>
    %161 = arith.mulf %160, %159 : vector<8x128xf32>
    %cst_67 = arith.constant 5.000000e-01 : f32
    %162 = vector.broadcast %cst_67 : f32 to vector<8x128xf32>
    %163 = arith.addf %161, %162 : vector<8x128xf32>
    %164 = vector.extract_strided_slice %147 {offsets = [0, 256], sizes = [8, 128], strides = [1, 1]} : vector<8x512xf32> to vector<8x128xf32>
    %165 = math.tanh %164 : vector<8x128xf32>
    %166 = vector.extract_strided_slice %147 {offsets = [0, 384], sizes = [8, 128], strides = [1, 1]} : vector<8x512xf32> to vector<8x128xf32>
    %cst_68 = arith.constant 5.000000e-01 : f32
    %167 = vector.broadcast %cst_68 : f32 to vector<8x128xf32>
    %168 = arith.mulf %167, %166 : vector<8x128xf32>
    %169 = math.tanh %168 : vector<8x128xf32>
    %cst_69 = arith.constant 5.000000e-01 : f32
    %170 = vector.broadcast %cst_69 : f32 to vector<8x128xf32>
    %171 = arith.mulf %170, %169 : vector<8x128xf32>
    %cst_70 = arith.constant 5.000000e-01 : f32
    %172 = vector.broadcast %cst_70 : f32 to vector<8x128xf32>
    %173 = arith.addf %171, %172 : vector<8x128xf32>
    %174 = arith.mulf %163, %134 : vector<8x128xf32>
    %175 = arith.mulf %155, %165 : vector<8x128xf32>
    %176 = arith.addf %174, %175 : vector<8x128xf32>
    %177 = math.tanh %176 : vector<8x128xf32>
    %178 = arith.mulf %173, %177 : vector<8x128xf32>
    %179 = arith.index_cast %140 : i32 to index
    %c0_71 = arith.constant 0 : index
    %180 = vector.load %arg5[%179, %c0_71] : memref<64x128xf32, #tpu.memory_space<vmem>>, vector<8x128xf32>
    tpu.vector_store %arg5[%179, %c0_71], %178 {strides = array<i32>} : memref<64x128xf32, #tpu.memory_space<vmem>>, vector<8x128xf32>,
    %c4_i32 = arith.constant 4 : i32
    %c8_i32_72 = arith.constant 8 : i32
    %181 = arith.muli %c4_i32, %c8_i32_72 : i32
    %182 = tpu.assume_multiple %181, 8 : i32
    %183 = arith.index_cast %182 : i32 to index
    %c0_73 = arith.constant 0 : index
    %184 = vector.load %arg8[%183, %c0_73] : memref<64x512xbf16, #tpu.memory_space<vmem>>, vector<8x512xbf16>
    %185 = arith.extf %184 : vector<8x512xbf16> to vector<8x512xf32>
    %186 = arith.truncf %178 : vector<8x128xf32> to vector<8x128xbf16>
    %c0_74 = arith.constant 0 : index
    %c0_75 = arith.constant 0 : index
    %187 = vector.load %arg3[%c0_74, %c0_75] : memref<128x512xbf16, #tpu.memory_space<vmem>>, vector<128x512xbf16>
    %cst_76 = arith.constant dense<0.000000e+00> : vector<8x512xf32>
    %188 = tpu.matmul %186, %187, %cst_76 {dimension_numbers = #tpu.dot_dimension_numbers<[1], [0], [0], [1], [0, 0, 1, 1], [], []>} : vector<8x128xbf16>, vector<128x512xbf16>, vector<8x512xf32> -> vector<8x512xf32>
    %189 = arith.addf %185, %188 : vector<8x512xf32>
    %190 = vector.extract_strided_slice %189 {offsets = [0, 0], sizes = [8, 128], strides = [1, 1]} : vector<8x512xf32> to vector<8x128xf32>
    %cst_77 = arith.constant 5.000000e-01 : f32
    %191 = vector.broadcast %cst_77 : f32 to vector<8x128xf32>
    %192 = arith.mulf %191, %190 : vector<8x128xf32>
    %193 = math.tanh %192 : vector<8x128xf32>
    %cst_78 = arith.constant 5.000000e-01 : f32
    %194 = vector.broadcast %cst_78 : f32 to vector<8x128xf32>
    %195 = arith.mulf %194, %193 : vector<8x128xf32>
    %cst_79 = arith.constant 5.000000e-01 : f32
    %196 = vector.broadcast %cst_79 : f32 to vector<8x128xf32>
    %197 = arith.addf %195, %196 : vector<8x128xf32>
    %198 = vector.extract_strided_slice %189 {offsets = [0, 128], sizes = [8, 128], strides = [1, 1]} : vector<8x512xf32> to vector<8x128xf32>
    %cst_80 = arith.constant 5.000000e-01 : f32
    %199 = vector.broadcast %cst_80 : f32 to vector<8x128xf32>
    %200 = arith.mulf %199, %198 : vector<8x128xf32>
    %201 = math.tanh %200 : vector<8x128xf32>
    %cst_81 = arith.constant 5.000000e-01 : f32
    %202 = vector.broadcast %cst_81 : f32 to vector<8x128xf32>
    %203 = arith.mulf %202, %201 : vector<8x128xf32>
    %cst_82 = arith.constant 5.000000e-01 : f32
    %204 = vector.broadcast %cst_82 : f32 to vector<8x128xf32>
    %205 = arith.addf %203, %204 : vector<8x128xf32>
    %206 = vector.extract_strided_slice %189 {offsets = [0, 256], sizes = [8, 128], strides = [1, 1]} : vector<8x512xf32> to vector<8x128xf32>
    %207 = math.tanh %206 : vector<8x128xf32>
    %208 = vector.extract_strided_slice %189 {offsets = [0, 384], sizes = [8, 128], strides = [1, 1]} : vector<8x512xf32> to vector<8x128xf32>
    %cst_83 = arith.constant 5.000000e-01 : f32
    %209 = vector.broadcast %cst_83 : f32 to vector<8x128xf32>
    %210 = arith.mulf %209, %208 : vector<8x128xf32>
    %211 = math.tanh %210 : vector<8x128xf32>
    %cst_84 = arith.constant 5.000000e-01 : f32
    %212 = vector.broadcast %cst_84 : f32 to vector<8x128xf32>
    %213 = arith.mulf %212, %211 : vector<8x128xf32>
    %cst_85 = arith.constant 5.000000e-01 : f32
    %214 = vector.broadcast %cst_85 : f32 to vector<8x128xf32>
    %215 = arith.addf %213, %214 : vector<8x128xf32>
    %216 = arith.mulf %205, %176 : vector<8x128xf32>
    %217 = arith.mulf %197, %207 : vector<8x128xf32>
    %218 = arith.addf %216, %217 : vector<8x128xf32>
    %219 = math.tanh %218 : vector<8x128xf32>
    %220 = arith.mulf %215, %219 : vector<8x128xf32>
    %221 = arith.index_cast %182 : i32 to index
    %c0_86 = arith.constant 0 : index
    %222 = vector.load %arg5[%221, %c0_86] : memref<64x128xf32, #tpu.memory_space<vmem>>, vector<8x128xf32>
    tpu.vector_store %arg5[%221, %c0_86], %220 {strides = array<i32>} : memref<64x128xf32, #tpu.memory_space<vmem>>, vector<8x128xf32>,
    %c5_i32 = arith.constant 5 : i32
    %c8_i32_87 = arith.constant 8 : i32
    %223 = arith.muli %c5_i32, %c8_i32_87 : i32
    %224 = tpu.assume_multiple %223, 8 : i32
    %225 = arith.index_cast %224 : i32 to index
    %c0_88 = arith.constant 0 : index
    %226 = vector.load %arg8[%225, %c0_88] : memref<64x512xbf16, #tpu.memory_space<vmem>>, vector<8x512xbf16>
    %227 = arith.extf %226 : vector<8x512xbf16> to vector<8x512xf32>
    %228 = arith.truncf %220 : vector<8x128xf32> to vector<8x128xbf16>
    %c0_89 = arith.constant 0 : index
    %c0_90 = arith.constant 0 : index
    %229 = vector.load %arg3[%c0_89, %c0_90] : memref<128x512xbf16, #tpu.memory_space<vmem>>, vector<128x512xbf16>
    %cst_91 = arith.constant dense<0.000000e+00> : vector<8x512xf32>
    %230 = tpu.matmul %228, %229, %cst_91 {dimension_numbers = #tpu.dot_dimension_numbers<[1], [0], [0], [1], [0, 0, 1, 1], [], []>} : vector<8x128xbf16>, vector<128x512xbf16>, vector<8x512xf32> -> vector<8x512xf32>
    %231 = arith.addf %227, %230 : vector<8x512xf32>
    %232 = vector.extract_strided_slice %231 {offsets = [0, 0], sizes = [8, 128], strides = [1, 1]} : vector<8x512xf32> to vector<8x128xf32>
    %cst_92 = arith.constant 5.000000e-01 : f32
    %233 = vector.broadcast %cst_92 : f32 to vector<8x128xf32>
    %234 = arith.mulf %233, %232 : vector<8x128xf32>
    %235 = math.tanh %234 : vector<8x128xf32>
    %cst_93 = arith.constant 5.000000e-01 : f32
    %236 = vector.broadcast %cst_93 : f32 to vector<8x128xf32>
    %237 = arith.mulf %236, %235 : vector<8x128xf32>
    %cst_94 = arith.constant 5.000000e-01 : f32
    %238 = vector.broadcast %cst_94 : f32 to vector<8x128xf32>
    %239 = arith.addf %237, %238 : vector<8x128xf32>
    %240 = vector.extract_strided_slice %231 {offsets = [0, 128], sizes = [8, 128], strides = [1, 1]} : vector<8x512xf32> to vector<8x128xf32>
    %cst_95 = arith.constant 5.000000e-01 : f32
    %241 = vector.broadcast %cst_95 : f32 to vector<8x128xf32>
    %242 = arith.mulf %241, %240 : vector<8x128xf32>
    %243 = math.tanh %242 : vector<8x128xf32>
    %cst_96 = arith.constant 5.000000e-01 : f32
    %244 = vector.broadcast %cst_96 : f32 to vector<8x128xf32>
    %245 = arith.mulf %244, %243 : vector<8x128xf32>
    %cst_97 = arith.constant 5.000000e-01 : f32
    %246 = vector.broadcast %cst_97 : f32 to vector<8x128xf32>
    %247 = arith.addf %245, %246 : vector<8x128xf32>
    %248 = vector.extract_strided_slice %231 {offsets = [0, 256], sizes = [8, 128], strides = [1, 1]} : vector<8x512xf32> to vector<8x128xf32>
    %249 = math.tanh %248 : vector<8x128xf32>
    %250 = vector.extract_strided_slice %231 {offsets = [0, 384], sizes = [8, 128], strides = [1, 1]} : vector<8x512xf32> to vector<8x128xf32>
    %cst_98 = arith.constant 5.000000e-01 : f32
    %251 = vector.broadcast %cst_98 : f32 to vector<8x128xf32>
    %252 = arith.mulf %251, %250 : vector<8x128xf32>
    %253 = math.tanh %252 : vector<8x128xf32>
    %cst_99 = arith.constant 5.000000e-01 : f32
    %254 = vector.broadcast %cst_99 : f32 to vector<8x128xf32>
    %255 = arith.mulf %254, %253 : vector<8x128xf32>
    %cst_100 = arith.constant 5.000000e-01 : f32
    %256 = vector.broadcast %cst_100 : f32 to vector<8x128xf32>
    %257 = arith.addf %255, %256 : vector<8x128xf32>
    %258 = arith.mulf %247, %218 : vector<8x128xf32>
    %259 = arith.mulf %239, %249 : vector<8x128xf32>
    %260 = arith.addf %258, %259 : vector<8x128xf32>
    %261 = math.tanh %260 : vector<8x128xf32>
    %262 = arith.mulf %257, %261 : vector<8x128xf32>
    %263 = arith.index_cast %224 : i32 to index
    %c0_101 = arith.constant 0 : index
    %264 = vector.load %arg5[%263, %c0_101] : memref<64x128xf32, #tpu.memory_space<vmem>>, vector<8x128xf32>
    tpu.vector_store %arg5[%263, %c0_101], %262 {strides = array<i32>} : memref<64x128xf32, #tpu.memory_space<vmem>>, vector<8x128xf32>,
    %c6_i32 = arith.constant 6 : i32
    %c8_i32_102 = arith.constant 8 : i32
    %265 = arith.muli %c6_i32, %c8_i32_102 : i32
    %266 = tpu.assume_multiple %265, 8 : i32
    %267 = arith.index_cast %266 : i32 to index
    %c0_103 = arith.constant 0 : index
    %268 = vector.load %arg8[%267, %c0_103] : memref<64x512xbf16, #tpu.memory_space<vmem>>, vector<8x512xbf16>
    %269 = arith.extf %268 : vector<8x512xbf16> to vector<8x512xf32>
    %270 = arith.truncf %262 : vector<8x128xf32> to vector<8x128xbf16>
    %c0_104 = arith.constant 0 : index
    %c0_105 = arith.constant 0 : index
    %271 = vector.load %arg3[%c0_104, %c0_105] : memref<128x512xbf16, #tpu.memory_space<vmem>>, vector<128x512xbf16>
    %cst_106 = arith.constant dense<0.000000e+00> : vector<8x512xf32>
    %272 = tpu.matmul %270, %271, %cst_106 {dimension_numbers = #tpu.dot_dimension_numbers<[1], [0], [0], [1], [0, 0, 1, 1], [], []>} : vector<8x128xbf16>, vector<128x512xbf16>, vector<8x512xf32> -> vector<8x512xf32>
    %273 = arith.addf %269, %272 : vector<8x512xf32>
    %274 = vector.extract_strided_slice %273 {offsets = [0, 0], sizes = [8, 128], strides = [1, 1]} : vector<8x512xf32> to vector<8x128xf32>
    %cst_107 = arith.constant 5.000000e-01 : f32
    %275 = vector.broadcast %cst_107 : f32 to vector<8x128xf32>
    %276 = arith.mulf %275, %274 : vector<8x128xf32>
    %277 = math.tanh %276 : vector<8x128xf32>
    %cst_108 = arith.constant 5.000000e-01 : f32
    %278 = vector.broadcast %cst_108 : f32 to vector<8x128xf32>
    %279 = arith.mulf %278, %277 : vector<8x128xf32>
    %cst_109 = arith.constant 5.000000e-01 : f32
    %280 = vector.broadcast %cst_109 : f32 to vector<8x128xf32>
    %281 = arith.addf %279, %280 : vector<8x128xf32>
    %282 = vector.extract_strided_slice %273 {offsets = [0, 128], sizes = [8, 128], strides = [1, 1]} : vector<8x512xf32> to vector<8x128xf32>
    %cst_110 = arith.constant 5.000000e-01 : f32
    %283 = vector.broadcast %cst_110 : f32 to vector<8x128xf32>
    %284 = arith.mulf %283, %282 : vector<8x128xf32>
    %285 = math.tanh %284 : vector<8x128xf32>
    %cst_111 = arith.constant 5.000000e-01 : f32
    %286 = vector.broadcast %cst_111 : f32 to vector<8x128xf32>
    %287 = arith.mulf %286, %285 : vector<8x128xf32>
    %cst_112 = arith.constant 5.000000e-01 : f32
    %288 = vector.broadcast %cst_112 : f32 to vector<8x128xf32>
    %289 = arith.addf %287, %288 : vector<8x128xf32>
    %290 = vector.extract_strided_slice %273 {offsets = [0, 256], sizes = [8, 128], strides = [1, 1]} : vector<8x512xf32> to vector<8x128xf32>
    %291 = math.tanh %290 : vector<8x128xf32>
    %292 = vector.extract_strided_slice %273 {offsets = [0, 384], sizes = [8, 128], strides = [1, 1]} : vector<8x512xf32> to vector<8x128xf32>
    %cst_113 = arith.constant 5.000000e-01 : f32
    %293 = vector.broadcast %cst_113 : f32 to vector<8x128xf32>
    %294 = arith.mulf %293, %292 : vector<8x128xf32>
    %295 = math.tanh %294 : vector<8x128xf32>
    %cst_114 = arith.constant 5.000000e-01 : f32
    %296 = vector.broadcast %cst_114 : f32 to vector<8x128xf32>
    %297 = arith.mulf %296, %295 : vector<8x128xf32>
    %cst_115 = arith.constant 5.000000e-01 : f32
    %298 = vector.broadcast %cst_115 : f32 to vector<8x128xf32>
    %299 = arith.addf %297, %298 : vector<8x128xf32>
    %300 = arith.mulf %289, %260 : vector<8x128xf32>
    %301 = arith.mulf %281, %291 : vector<8x128xf32>
    %302 = arith.addf %300, %301 : vector<8x128xf32>
    %303 = math.tanh %302 : vector<8x128xf32>
    %304 = arith.mulf %299, %303 : vector<8x128xf32>
    %305 = arith.index_cast %266 : i32 to index
    %c0_116 = arith.constant 0 : index
    %306 = vector.load %arg5[%305, %c0_116] : memref<64x128xf32, #tpu.memory_space<vmem>>, vector<8x128xf32>
    tpu.vector_store %arg5[%305, %c0_116], %304 {strides = array<i32>} : memref<64x128xf32, #tpu.memory_space<vmem>>, vector<8x128xf32>,
    %c7_i32 = arith.constant 7 : i32
    %c8_i32_117 = arith.constant 8 : i32
    %307 = arith.muli %c7_i32, %c8_i32_117 : i32
    %308 = tpu.assume_multiple %307, 8 : i32
    %309 = arith.index_cast %308 : i32 to index
    %c0_118 = arith.constant 0 : index
    %310 = vector.load %arg8[%309, %c0_118] : memref<64x512xbf16, #tpu.memory_space<vmem>>, vector<8x512xbf16>
    %311 = arith.extf %310 : vector<8x512xbf16> to vector<8x512xf32>
    %312 = arith.truncf %304 : vector<8x128xf32> to vector<8x128xbf16>
    %c0_119 = arith.constant 0 : index
    %c0_120 = arith.constant 0 : index
    %313 = vector.load %arg3[%c0_119, %c0_120] : memref<128x512xbf16, #tpu.memory_space<vmem>>, vector<128x512xbf16>
    %cst_121 = arith.constant dense<0.000000e+00> : vector<8x512xf32>
    %314 = tpu.matmul %312, %313, %cst_121 {dimension_numbers = #tpu.dot_dimension_numbers<[1], [0], [0], [1], [0, 0, 1, 1], [], []>} : vector<8x128xbf16>, vector<128x512xbf16>, vector<8x512xf32> -> vector<8x512xf32>
    %315 = arith.addf %311, %314 : vector<8x512xf32>
    %316 = vector.extract_strided_slice %315 {offsets = [0, 0], sizes = [8, 128], strides = [1, 1]} : vector<8x512xf32> to vector<8x128xf32>
    %cst_122 = arith.constant 5.000000e-01 : f32
    %317 = vector.broadcast %cst_122 : f32 to vector<8x128xf32>
    %318 = arith.mulf %317, %316 : vector<8x128xf32>
    %319 = math.tanh %318 : vector<8x128xf32>
    %cst_123 = arith.constant 5.000000e-01 : f32
    %320 = vector.broadcast %cst_123 : f32 to vector<8x128xf32>
    %321 = arith.mulf %320, %319 : vector<8x128xf32>
    %cst_124 = arith.constant 5.000000e-01 : f32
    %322 = vector.broadcast %cst_124 : f32 to vector<8x128xf32>
    %323 = arith.addf %321, %322 : vector<8x128xf32>
    %324 = vector.extract_strided_slice %315 {offsets = [0, 128], sizes = [8, 128], strides = [1, 1]} : vector<8x512xf32> to vector<8x128xf32>
    %cst_125 = arith.constant 5.000000e-01 : f32
    %325 = vector.broadcast %cst_125 : f32 to vector<8x128xf32>
    %326 = arith.mulf %325, %324 : vector<8x128xf32>
    %327 = math.tanh %326 : vector<8x128xf32>
    %cst_126 = arith.constant 5.000000e-01 : f32
    %328 = vector.broadcast %cst_126 : f32 to vector<8x128xf32>
    %329 = arith.mulf %328, %327 : vector<8x128xf32>
    %cst_127 = arith.constant 5.000000e-01 : f32
    %330 = vector.broadcast %cst_127 : f32 to vector<8x128xf32>
    %331 = arith.addf %329, %330 : vector<8x128xf32>
    %332 = vector.extract_strided_slice %315 {offsets = [0, 256], sizes = [8, 128], strides = [1, 1]} : vector<8x512xf32> to vector<8x128xf32>
    %333 = math.tanh %332 : vector<8x128xf32>
    %334 = vector.extract_strided_slice %315 {offsets = [0, 384], sizes = [8, 128], strides = [1, 1]} : vector<8x512xf32> to vector<8x128xf32>
    %cst_128 = arith.constant 5.000000e-01 : f32
    %335 = vector.broadcast %cst_128 : f32 to vector<8x128xf32>
    %336 = arith.mulf %335, %334 : vector<8x128xf32>
    %337 = math.tanh %336 : vector<8x128xf32>
    %cst_129 = arith.constant 5.000000e-01 : f32
    %338 = vector.broadcast %cst_129 : f32 to vector<8x128xf32>
    %339 = arith.mulf %338, %337 : vector<8x128xf32>
    %cst_130 = arith.constant 5.000000e-01 : f32
    %340 = vector.broadcast %cst_130 : f32 to vector<8x128xf32>
    %341 = arith.addf %339, %340 : vector<8x128xf32>
    %342 = arith.mulf %331, %302 : vector<8x128xf32>
    %343 = arith.mulf %323, %333 : vector<8x128xf32>
    %344 = arith.addf %342, %343 : vector<8x128xf32>
    %345 = math.tanh %344 : vector<8x128xf32>
    %346 = arith.mulf %341, %345 : vector<8x128xf32>
    %347 = arith.index_cast %308 : i32 to index
    %c0_131 = arith.constant 0 : index
    %348 = vector.load %arg5[%347, %c0_131] : memref<64x128xf32, #tpu.memory_space<vmem>>, vector<8x128xf32>
    tpu.vector_store %arg5[%347, %c0_131], %346 {strides = array<i32>} : memref<64x128xf32, #tpu.memory_space<vmem>>, vector<8x128xf32>,
    %c8_i32_132 = arith.constant 8 : i32
    %c0_133 = arith.constant 0 : index
    %c0_134 = arith.constant 0 : index
    %349 = vector.load %arg6[%c0_133, %c0_134] : memref<8x128xf32, #tpu.memory_space<vmem>>, vector<8x128xf32>
    tpu.vector_store %arg6[%c0_133, %c0_134], %346 {strides = array<i32>} : memref<8x128xf32, #tpu.memory_space<vmem>>, vector<8x128xf32>,
    %c0_135 = arith.constant 0 : index
    %c0_136 = arith.constant 0 : index
    %350 = vector.load %arg7[%c0_135, %c0_136] : memref<8x128xf32, #tpu.memory_space<vmem>>, vector<8x128xf32>
    tpu.vector_store %arg7[%c0_135, %c0_136], %344 {strides = array<i32>} : memref<8x128xf32, #tpu.memory_space<vmem>>, vector<8x128xf32>,
    return
  }
  func.func @transform_0(%arg0: i32) -> (i32, i32) {
    %c0_i32 = arith.constant 0 : i32
    %c0_i32_0 = arith.constant 0 : i32
    return %arg0, %c0_i32 : i32, i32
  }
  func.func @transform_1(%arg0: i32) -> (i32, i32) {
    %c0_i32 = arith.constant 0 : i32
    %c0_i32_0 = arith.constant 0 : i32
    %c0_i32_1 = arith.constant 0 : i32
    return %c0_i32, %c0_i32_0 : i32, i32
  }
  func.func @transform_2(%arg0: i32) -> (i32, i32) {
    %c0_i32 = arith.constant 0 : i32
    %c0_i32_0 = arith.constant 0 : i32
    %c0_i32_1 = arith.constant 0 : i32
    return %c0_i32, %c0_i32_0 : i32, i32
  }
  func.func @transform_3(%arg0: i32) -> (i32, i32) {
    %c0_i32 = arith.constant 0 : i32
    %c0_i32_0 = arith.constant 0 : i32
    %c0_i32_1 = arith.constant 0 : i32
    return %c0_i32, %c0_i32_0 : i32, i32
  }
  func.func @transform_4(%arg0: i32) -> (i32, i32) {
    %c0_i32 = arith.constant 0 : i32
    %c0_i32_0 = arith.constant 0 : i32
    return %arg0, %c0_i32 : i32, i32
  }
}

</mosaic_0001>

<llo_original>
// kernel: tpu_custom_call.1
$region0: #{tpu_custom_call.1}
  #allocation0 [shape = 'u32[]', space=smem, size = 0x4, offset = 0x4, fixed_abs, tag = 'smem constant byte address 0x4 - core index']
  #allocation1 [shape = 'u32[72,128]{1,0:T(1,128)}', space=vmem, size = 0x9000, scoped, tag = 'internal scratch']
  #allocation2 [shape = 'f32[8,128]{1,0:T(8,128)}', space=vmem, size = 0x1000, scoped, tag = 'scratch operand']
  #allocation3 [shape = 'f32[8,128]{1,0:T(8,128)}', space=vmem, size = 0x1000, scoped, tag = 'scratch operand']
  #allocation4 [shape = 'bf16[64,512]{1,0:T(8,128)(2,1)}', space=vmem, size = 0x10000, scoped, tag = 'scratch operand']
  %s0 = inlined_call_operand.vmem [shape: bf16[64,16], index: 0, kind: input, shape index: {}]
  %s1 = inlined_call_operand.vmem [shape: bf16[16,512], index: 1, kind: input, shape index: {}]
  %s2 = inlined_call_operand.hbm [shape: bf16[128,512], index: 2, kind: input, shape index: {}]
  %s3 = inlined_call_operand.vmem [shape: f32[1,512], index: 3, kind: input, shape index: {}]
  %s4 = inlined_call_operand.hbm [shape: f32[64,128], index: 4, kind: output, shape index: {}]
  %s5 = sld [smem:[#allocation0]]
  $region34: #{tpu_custom_call.1} parent=0
    _
  %s7 = ssub.s32 1, %s5
  %s8 = scalar_select 0, %s7, %s5
  $region1: #{tpu_custom_call.1} parent=0
    #allocation5 [shape = 'u8[131072]{0}', space=vmem, size = 0x20000, scoped, tag = 'input window, operand 2, single buffered']
    #allocation6 [shape = 's32[1]{0}', space=sflag, size = 0x4, scoped, tag = 'scoped memory for tpu_custom_call.1']
    #allocation7 [shape = 's32[1]{0}', space=sflag, size = 0x4, scoped, tag = 'scoped memory for tpu_custom_call.1']
    #allocation8 [shape = 'u8[32768]{0}', space=vmem, size = 0x8000, scoped, tag = 'output window, operand 0, single buffered']
    %9 = vsyncpa [#allocation6], 0
    %10 = vsyncpa [#allocation7], 0
    // Predicated region
    $region2: #{tpu_custom_call.1} parent=1 // pred_check
      _
    $region3: #{tpu_custom_call.1} parent=1 // pred_check_branch
      %12 = sbr.rel (0) target = $region5
    $region4: #{tpu_custom_call.1} parent=1 // pred_region
      _
    $region5: #{tpu_custom_call.1} parent=1 // pred_fallthru
      _
    // Predicated region
    $region6: #{tpu_custom_call.1} parent=1 // pred_check
      _
    $region7: #{tpu_custom_call.1} parent=1 // pred_check_branch
      %14 = sbr.rel (0) target = $region9
    $region8: #{tpu_custom_call.1} parent=1 // pred_region
      _
    $region9: #{tpu_custom_call.1} parent=1 // pred_fallthru
      _
    // Predicated region
    $region10: #{tpu_custom_call.1} parent=1 // pred_check
      _
    $region11: #{tpu_custom_call.1} parent=1 // pred_check_branch
      %16 = sbr.rel (0) target = $region13
    $region12: #{tpu_custom_call.1} parent=1 // pred_region
      %18 = vsyncadd [#allocation6], 0
      %s19 = sshll.u32 %s2, 4
      %s20 = int_to_ptr.hbm [resolvable:$true] %s19
      %s21 = sshll.u32 [#allocation5], 4
      %s22 = int_to_ptr.vmem [resolvable:$true] %s21
      %27 = dma.hbm_to_vmem [thread:$0]  %s20, 4096, %s22, [#allocation6], 256, 256, 16
    $region13: #{tpu_custom_call.1} parent=1 // pred_fallthru
      _
    // Predicated region
    $region14: #{tpu_custom_call.1} parent=1 // pred_check
      _
    $region15: #{tpu_custom_call.1} parent=1 // pred_check_branch
      %29 = sbr.rel (0) target = $region17
    $region16: #{tpu_custom_call.1} parent=1 // pred_region
      _
    $region17: #{tpu_custom_call.1} parent=1 // pred_fallthru
      _
    // Predicated region
    $region18: #{tpu_custom_call.1} parent=1 // pred_check
      _
    $region19: #{tpu_custom_call.1} parent=1 // pred_check_branch
      %31 = sbr.rel (0) target = $region21
    $region20: #{tpu_custom_call.1} parent=1 // pred_region
      %33 = dma.done [#allocation6], 4096
    $region21: #{tpu_custom_call.1} parent=1 // pred_fallthru
      _
    %p35 = scmp.eq.s32.totalorder 0, 0
    // Predicated region
    $region22: #{tpu_custom_call.1} parent=1 // pred_check
      %p36 = pneg %p35
    $region23: #{tpu_custom_call.1} parent=1 // pred_check_branch
      %38 = sbr.rel (%p36) target = $region25
    $region24: #{tpu_custom_call.1} parent=1 // pred_region
      %39 = vst [vmem:[#allocation2] sm:$0xff] 0.0
      %40 = vst [vmem:[#allocation3] sm:$0xff] 0.0
    $region25: #{tpu_custom_call.1} parent=1 // pred_fallthru
      _
    %v41 = vld [vmem:[%s0] sm:$0xf]
    %v42 = vld [vmem:[%s0 + $0x4] sm:$0xf]
    %v43 = vld [vmem:[%s0 + $0x8] sm:$0xf]
    %v44 = vld [vmem:[%s0 + $0xc] sm:$0xf]
    %v45 = vld [vmem:[%s0 + $0x10] sm:$0xf]
    %v46 = vld [vmem:[%s0 + $0x14] sm:$0xf]
    %v47 = vld [vmem:[%s0 + $0x18] sm:$0xf]
    %v48 = vld [vmem:[%s0 + $0x1c] sm:$0xf]
    %v49 = vld [vmem:[%s1] sm:$0xff]
    %v50 = vld [vmem:[%s1 + $0x8] sm:$0xff]
    %v51 = vld [vmem:[%s1 + $0x10] sm:$0xff]
    %v52 = vld [vmem:[%s1 + $0x18] sm:$0xff]
    %v53 = vld [vmem:[%s3] sm:$0xf]
    %v55 = vperm.slane %v53, 0
    %v56 = vperm.slane %v53, 1
    %v57 = vperm.slane %v53, 2
    %v58 = vperm.slane %v53, 3
    %v71 = vunpack.c.l.b16 %v41
    %v72 = vunpack.c.l.b16 %v42
    %v73 = vunpack.c.l.b16 %v43
    %v74 = vunpack.c.l.b16 %v44
    %v75 = vunpack.c.l.b16 %v45
    %v76 = vunpack.c.l.b16 %v46
    %v77 = vunpack.c.l.b16 %v47
    %v78 = vunpack.c.l.b16 %v48
    %v79 = vpack.c.b16 %v72, %v71
    %v80 = vpack.c.b16 %v74, %v73
    %v81 = vpack.c.b16 %v76, %v75
    %v82 = vpack.c.b16 %v78, %v77
    %v87 = vunpack.c.l.b16 %v49
    %v88 = vunpack.c.h.b16 %v49
    %v89 = vunpack.c.l.b16 %v50
    %v90 = vunpack.c.h.b16 %v50
    %v91 = vunpack.c.l.b16 %v51
    %v92 = vunpack.c.h.b16 %v51
    %v93 = vunpack.c.l.b16 %v52
    %v94 = vunpack.c.h.b16 %v52
    %v95 = vpack.c.b16 %v91, %v87
    %v96 = vpack.c.b16 %v92, %v88
    %v97 = vpack.c.b16 %v93, %v89
    %v98 = vpack.c.b16 %v94, %v90
    %vm103 = vcmask 130048
    %v105 = vsel %vm103, %v79, 0
    %v108 = vsel %vm103, %v80, 0
    %v111 = vsel %vm103, %v81, 0
    %v114 = vsel %vm103, %v82, 0
    %116 = vmatpush.bf16.msra.mxu0 0
    %117 = vmatpush.bf16.msra.mxu0 0
    %118 = vmatpush.bf16.msra.mxu0 0
    %119 = vmatpush.bf16.msra.mxu0 0
    %120 = vmatpush.bf16.msra.mxu0 0
    %121 = vmatpush.bf16.msra.mxu0 0
    %122 = vmatpush.bf16.msra.mxu0 0
    %123 = vmatpush.bf16.msra.mxu0 %v95
    %124 = vmatmul.bf16.gmra.mxu0 %v105
    %v125 = vpop.f32.mrf.mxu0
    %v126 = vadd.f32 %v55, %v125
    %v127 = vpop.f32.mrf.mxu0
    %v128 = vadd.f32 %v55, %v127
    %129 = vmatmul.bf16.gmra.mxu0 %v108
    %v130 = vpop.f32.mrf.mxu0
    %v131 = vadd.f32 %v55, %v130
    %v132 = vpop.f32.mrf.mxu0
    %v133 = vadd.f32 %v55, %v132
    %134 = vmatmul.bf16.gmra.mxu0 %v111
    %v135 = vpop.f32.mrf.mxu0
    %v136 = vadd.f32 %v55, %v135
    %v137 = vpop.f32.mrf.mxu0
    %v138 = vadd.f32 %v55, %v137
    %139 = vmatmul.bf16.gmra.mxu0 %v114
    %v140 = vpop.f32.mrf.mxu0
    %v141 = vadd.f32 %v55, %v140
    %v142 = vpop.f32.mrf.mxu0
    %v143 = vadd.f32 %v55, %v142
    %144 = vdwg.mxu0
    %145 = vmatpush.bf16.msra.mxu0 0
    %146 = vmatpush.bf16.msra.mxu0 0
    %147 = vmatpush.bf16.msra.mxu0 0
    %148 = vmatpush.bf16.msra.mxu0 0
    %149 = vmatpush.bf16.msra.mxu0 0
    %150 = vmatpush.bf16.msra.mxu0 0
    %151 = vmatpush.bf16.msra.mxu0 0
    %152 = vmatpush.bf16.msra.mxu0 %v96
    %153 = vmatmul.bf16.gmra.mxu0 %v105
    %v154 = vpop.f32.mrf.mxu0
    %v155 = vadd.f32 %v56, %v154
    %v156 = vpop.f32.mrf.mxu0
    %v157 = vadd.f32 %v56, %v156
    %158 = vmatmul.bf16.gmra.mxu0 %v108
    %v159 = vpop.f32.mrf.mxu0
    %v160 = vadd.f32 %v56, %v159
    %v161 = vpop.f32.mrf.mxu0
    %v162 = vadd.f32 %v56, %v161
    %163 = vmatmul.bf16.gmra.mxu0 %v111
    %v164 = vpop.f32.mrf.mxu0
    %v165 = vadd.f32 %v56, %v164
    %v166 = vpop.f32.mrf.mxu0
    %v167 = vadd.f32 %v56, %v166
    %168 = vmatmul.bf16.gmra.mxu0 %v114
    %v169 = vpop.f32.mrf.mxu0
    %v170 = vadd.f32 %v56, %v169
    %v171 = vpop.f32.mrf.mxu0
    %v172 = vadd.f32 %v56, %v171
    %173 = vdwg.mxu0
    %174 = vmatpush.bf16.msra.mxu0 0
    %175 = vmatpush.bf16.msra.mxu0 0
    %176 = vmatpush.bf16.msra.mxu0 0
    %177 = vmatpush.bf16.msra.mxu0 0
    %178 = vmatpush.bf16.msra.mxu0 0
    %179 = vmatpush.bf16.msra.mxu0 0
    %180 = vmatpush.bf16.msra.mxu0 0
    %181 = vmatpush.bf16.msra.mxu0 %v97
    %182 = vmatmul.bf16.gmra.mxu0 %v105
    %v183 = vpop.f32.mrf.mxu0
    %v184 = vadd.f32 %v57, %v183
    %v185 = vpop.f32.mrf.mxu0
    %v186 = vadd.f32 %v57, %v185
    %187 = vmatmul.bf16.gmra.mxu0 %v108
    %v188 = vpop.f32.mrf.mxu0
    %v189 = vadd.f32 %v57, %v188
    %v190 = vpop.f32.mrf.mxu0
    %v191 = vadd.f32 %v57, %v190
    %192 = vmatmul.bf16.gmra.mxu0 %v111
    %v193 = vpop.f32.mrf.mxu0
    %v194 = vadd.f32 %v57, %v193
    %v195 = vpop.f32.mrf.mxu0
    %v196 = vadd.f32 %v57, %v195
    %197 = vmatmul.bf16.gmra.mxu0 %v114
    %v198 = vpop.f32.mrf.mxu0
    %v199 = vadd.f32 %v57, %v198
    %v200 = vpop.f32.mrf.mxu0
    %v201 = vadd.f32 %v57, %v200
    %202 = vdwg.mxu0
    %203 = vmatpush.bf16.msra.mxu0 0
    %204 = vmatpush.bf16.msra.mxu0 0
    %205 = vmatpush.bf16.msra.mxu0 0
    %206 = vmatpush.bf16.msra.mxu0 0
    %207 = vmatpush.bf16.msra.mxu0 0
    %208 = vmatpush.bf16.msra.mxu0 0
    %209 = vmatpush.bf16.msra.mxu0 0
    %210 = vmatpush.bf16.msra.mxu0 %v98
    %211 = vmatmul.bf16.gmra.mxu0 %v105
    %v212 = vpop.f32.mrf.mxu0
    %v213 = vadd.f32 %v58, %v212
    %v214 = vpop.f32.mrf.mxu0
    %v215 = vadd.f32 %v58, %v214
    %216 = vmatmul.bf16.gmra.mxu0 %v108
    %v217 = vpop.f32.mrf.mxu0
    %v218 = vadd.f32 %v58, %v217
    %v219 = vpop.f32.mrf.mxu0
    %v220 = vadd.f32 %v58, %v219
    %221 = vmatmul.bf16.gmra.mxu0 %v111
    %v222 = vpop.f32.mrf.mxu0
    %v223 = vadd.f32 %v58, %v222
    %v224 = vpop.f32.mrf.mxu0
    %v225 = vadd.f32 %v58, %v224
    %226 = vmatmul.bf16.gmra.mxu0 %v114
    %v227 = vpop.f32.mrf.mxu0
    %v228 = vadd.f32 %v58, %v227
    %v229 = vpop.f32.mrf.mxu0
    %v230 = vadd.f32 %v58, %v229
    %231 = vdwg.mxu0
    %v232 = vpack.c.bf16 %v155, %v126
    %v233 = vpack.c.bf16 %v213, %v184
    %v234 = vpack.c.bf16 %v157, %v128
    %v235 = vpack.c.bf16 %v215, %v186
    %v236 = vpack.c.bf16 %v160, %v131
    %v237 = vpack.c.bf16 %v218, %v189
    %v238 = vpack.c.bf16 %v162, %v133
    %v239 = vpack.c.bf16 %v220, %v191
    %v240 = vpack.c.bf16 %v165, %v136
    %v241 = vpack.c.bf16 %v223, %v194
    %v242 = vpack.c.bf16 %v167, %v138
    %v243 = vpack.c.bf16 %v225, %v196
    %v244 = vpack.c.bf16 %v170, %v141
    %v245 = vpack.c.bf16 %v228, %v199
    %v246 = vpack.c.bf16 %v172, %v143
    %v247 = vpack.c.bf16 %v230, %v201
    %248 = vst [vmem:[#allocation4] sm:$0xff] %v232
    %249 = vst [vmem:[#allocation4 + $0x8] sm:$0xff] %v233
    %250 = vst [vmem:[#allocation4 + $0x10] sm:$0xff] %v234
    %251 = vst [vmem:[#allocation4 + $0x18] sm:$0xff] %v235
    %252 = vst [vmem:[#allocation4 + $0x20] sm:$0xff] %v236
    %253 = vst [vmem:[#allocation4 + $0x28] sm:$0xff] %v237
    %254 = vst [vmem:[#allocation4 + $0x30] sm:$0xff] %v238
    %255 = vst [vmem:[#allocation4 + $0x38] sm:$0xff] %v239
    %256 = vst [vmem:[#allocation4 + $0x40] sm:$0xff] %v240
    %257 = vst [vmem:[#allocation4 + $0x48] sm:$0xff] %v241
    %258 = vst [vmem:[#allocation4 + $0x50] sm:$0xff] %v242
    %259 = vst [vmem:[#allocation4 + $0x58] sm:$0xff] %v243
    %260 = vst [vmem:[#allocation4 + $0x60] sm:$0xff] %v244
    %261 = vst [vmem:[#allocation4 + $0x68] sm:$0xff] %v245
    %262 = vst [vmem:[#allocation4 + $0x70] sm:$0xff] %v246
    %263 = vst [vmem:[#allocation4 + $0x78] sm:$0xff] %v247
    %v264 = vld [vmem:[#allocation2] sm:$0xff]
    %v265 = vld [vmem:[#allocation3] sm:$0xff]
    %s266 = smul.u32 0, 4
    %s267 = smul.addr %s266, 4
    %s268 = scalar_lea.vmem [#allocation4], %s267
    %v269 = vld [vmem:[%s268] sm:$0xff]
    %v270 = vld [vmem:[%s268 + $0x8] sm:$0xff]
    %v271 = vunpack.c.l.bf16 %v269
    %v272 = vunpack.c.h.bf16 %v269
    %v273 = vunpack.c.l.bf16 %v270
    %v274 = vunpack.c.h.bf16 %v270
    %v275 = vpack.c.bf16 %v264, %v264
    %v276 = vld [vmem:[#allocation5] sm:$0xff]
    %v277 = vld [vmem:[#allocation5 + $0x8] sm:$0xff]
    %v278 = vld [vmem:[#allocation5 + $0x10] sm:$0xff]
    %v279 = vld [vmem:[#allocation5 + $0x18] sm:$0xff]
    %v280 = vld [vmem:[#allocation5 + $0x20] sm:$0xff]
    %v281 = vld [vmem:[#allocation5 + $0x28] sm:$0xff]
    %v282 = vld [vmem:[#allocation5 + $0x30] sm:$0xff]
    %v283 = vld [vmem:[#allocation5 + $0x38] sm:$0xff]
    %v284 = vld [vmem:[#allocation5 + $0x40] sm:$0xff]
    %v285 = vld [vmem:[#allocation5 + $0x48] sm:$0xff]
    %v286 = vld [vmem:[#allocation5 + $0x50] sm:$0xff]
    %v287 = vld [vmem:[#allocation5 + $0x58] sm:$0xff]
    %v288 = vld [vmem:[#allocation5 + $0x60] sm:$0xff]
    %v289 = vld [vmem:[#allocation5 + $0x68] sm:$0xff]
    %v290 = vld [vmem:[#allocation5 + $0x70] sm:$0xff]
    %v291 = vld [vmem:[#allocation5 + $0x78] sm:$0xff]
    %v292 = vld [vmem:[#allocation5 + $0x80] sm:$0xff]
    %v293 = vld [vmem:[#allocation5 + $0x88] sm:$0xff]
    %v294 = vld [vmem:[#allocation5 + $0x90] sm:$0xff]
    %v295 = vld [vmem:[#allocation5 + $0x98] sm:$0xff]
    %v296 = vld [vmem:[#allocation5 + $0xa0] sm:$0xff]
    %v297 = vld [vmem:[#allocation5 + $0xa8] sm:$0xff]
    %v298 = vld [vmem:[#allocation5 + $0xb0] sm:$0xff]
    %v299 = vld [vmem:[#allocation5 + $0xb8] sm:$0xff]
    %v300 = vld [vmem:[#allocation5 + $0xc0] sm:$0xff]
    %v301 = vld [vmem:[#allocation5 + $0xc8] sm:$0xff]
    %v302 = vld [vmem:[#allocation5 + $0xd0] sm:$0xff]
    %v303 = vld [vmem:[#allocation5 + $0xd8] sm:$0xff]
    %v304 = vld [vmem:[#allocation5 + $0xe0] sm:$0xff]
    %v305 = vld [vmem:[#allocation5 + $0xe8] sm:$0xff]
    %v306 = vld [vmem:[#allocation5 + $0xf0] sm:$0xff]
    %v307 = vld [vmem:[#allocation5 + $0xf8] sm:$0xff]
    %v340 = vunpack.c.l.b16 %v276
    %v341 = vunpack.c.h.b16 %v276
    %v342 = vunpack.c.l.b16 %v277
    %v343 = vunpack.c.h.b16 %v277
    %v344 = vunpack.c.l.b16 %v278
    %v345 = vunpack.c.h.b16 %v278
    %v346 = vunpack.c.l.b16 %v279
    %v347 = vunpack.c.h.b16 %v279
    %v348 = vunpack.c.l.b16 %v280
    %v349 = vunpack.c.h.b16 %v280
    %v350 = vunpack.c.l.b16 %v281
    %v351 = vunpack.c.h.b16 %v281
    %v352 = vunpack.c.l.b16 %v282
    %v353 = vunpack.c.h.b16 %v282
    %v354 = vunpack.c.l.b16 %v283
    %v355 = vunpack.c.h.b16 %v283
    %v356 = vunpack.c.l.b16 %v284
    %v357 = vunpack.c.h.b16 %v284
    %v358 = vunpack.c.l.b16 %v285
    %v359 = vunpack.c.h.b16 %v285
    %v360 = vunpack.c.l.b16 %v286
    %v361 = vunpack.c.h.b16 %v286
    %v362 = vunpack.c.l.b16 %v287
    %v363 = vunpack.c.h.b16 %v287
    %v364 = vunpack.c.l.b16 %v288
    %v365 = vunpack.c.h.b16 %v288
    %v366 = vunpack.c.l.b16 %v289
    %v367 = vunpack.c.h.b16 %v289
    %v368 = vunpack.c.l.b16 %v290
    %v369 = vunpack.c.h.b16 %v290
    %v370 = vunpack.c.l.b16 %v291
    %v371 = vunpack.c.h.b16 %v291
    %v372 = vunpack.c.l.b16 %v292
    %v373 = vunpack.c.h.b16 %v292
    %v374 = vunpack.c.l.b16 %v293
    %v375 = vunpack.c.h.b16 %v293
    %v376 = vunpack.c.l.b16 %v294
    %v377 = vunpack.c.h.b16 %v294
    %v378 = vunpack.c.l.b16 %v295
    %v379 = vunpack.c.h.b16 %v295
    %v380 = vunpack.c.l.b16 %v296
    %v381 = vunpack.c.h.b16 %v296
    %v382 = vunpack.c.l.b16 %v297
    %v383 = vunpack.c.h.b16 %v297
    %v384 = vunpack.c.l.b16 %v298
    %v385 = vunpack.c.h.b16 %v298
    %v386 = vunpack.c.l.b16 %v299
    %v387 = vunpack.c.h.b16 %v299
    %v388 = vunpack.c.l.b16 %v300
    %v389 = vunpack.c.h.b16 %v300
    %v390 = vunpack.c.l.b16 %v301
    %v391 = vunpack.c.h.b16 %v301
    %v392 = vunpack.c.l.b16 %v302
    %v393 = vunpack.c.h.b16 %v302
    %v394 = vunpack.c.l.b16 %v303
    %v395 = vunpack.c.h.b16 %v303
    %v396 = vunpack.c.l.b16 %v304
    %v397 = vunpack.c.h.b16 %v304
    %v398 = vunpack.c.l.b16 %v305
    %v399 = vunpack.c.h.b16 %v305
    %v400 = vunpack.c.l.b16 %v306
    %v401 = vunpack.c.h.b16 %v306
    %v402 = vunpack.c.l.b16 %v307
    %v403 = vunpack.c.h.b16 %v307
    %v404 = vpack.c.b16 %v344, %v340
    %v405 = vpack.c.b16 %v345, %v341
    %v406 = vpack.c.b16 %v346, %v342
    %v407 = vpack.c.b16 %v347, %v343
    %v408 = vpack.c.b16 %v352, %v348
    %v409 = vpack.c.b16 %v353, %v349
    %v410 = vpack.c.b16 %v354, %v350
    %v411 = vpack.c.b16 %v355, %v351
    %v412 = vpack.c.b16 %v360, %v356
    %v413 = vpack.c.b16 %v361, %v357
    %v414 = vpack.c.b16 %v362, %v358
    %v415 = vpack.c.b16 %v363, %v359
    %v416 = vpack.c.b16 %v368, %v364
    %v417 = vpack.c.b16 %v369, %v365
    %v418 = vpack.c.b16 %v370, %v366
    %v419 = vpack.c.b16 %v371, %v367
    %v420 = vpack.c.b16 %v376, %v372
    %v421 = vpack.c.b16 %v377, %v373
    %v422 = vpack.c.b16 %v378, %v374
    %v423 = vpack.c.b16 %v379, %v375
    %v424 = vpack.c.b16 %v384, %v380
    %v425 = vpack.c.b16 %v385, %v381
    %v426 = vpack.c.b16 %v386, %v382
    %v427 = vpack.c.b16 %v387, %v383
    %v428 = vpack.c.b16 %v392, %v388
    %v429 = vpack.c.b16 %v393, %v389
    %v430 = vpack.c.b16 %v394, %v390
    %v431 = vpack.c.b16 %v395, %v391
    %v432 = vpack.c.b16 %v400, %v396
    %v433 = vpack.c.b16 %v401, %v397
    %v434 = vpack.c.b16 %v402, %v398
    %v435 = vpack.c.b16 %v403, %v399
    %468 = vmatpush.bf16.msra.mxu0 %v432
    %469 = vmatpush.bf16.msra.mxu0 %v428
    %470 = vmatpush.bf16.msra.mxu0 %v424
    %471 = vmatpush.bf16.msra.mxu0 %v420
    %472 = vmatpush.bf16.msra.mxu0 %v416
    %473 = vmatpush.bf16.msra.mxu0 %v412
    %474 = vmatpush.bf16.msra.mxu0 %v408
    %475 = vmatpush.bf16.msra.mxu0 %v404
    %476 = vmatmul.bf16.gmra.mxu0 %v275
    %v477 = vpop.f32.mrf.mxu0
    %v478 = vadd.f32 0.0, %v477
    %v479 = vpop.f32.mrf.mxu0
    %480 = vdwg.mxu0
    %481 = vmatpush.bf16.msra.mxu0 %v433
    %482 = vmatpush.bf16.msra.mxu0 %v429
    %483 = vmatpush.bf16.msra.mxu0 %v425
    %484 = vmatpush.bf16.msra.mxu0 %v421
    %485 = vmatpush.bf16.msra.mxu0 %v417
    %486 = vmatpush.bf16.msra.mxu0 %v413
    %487 = vmatpush.bf16.msra.mxu0 %v409
    %488 = vmatpush.bf16.msra.mxu0 %v405
    %489 = vmatmul.bf16.gmra.mxu0 %v275
    %v490 = vpop.f32.mrf.mxu0
    %v491 = vadd.f32 0.0, %v490
    %v492 = vpop.f32.mrf.mxu0
    %493 = vdwg.mxu0
    %494 = vmatpush.bf16.msra.mxu0 %v434
    %495 = vmatpush.bf16.msra.mxu0 %v430
    %496 = vmatpush.bf16.msra.mxu0 %v426
    %497 = vmatpush.bf16.msra.mxu0 %v422
    %498 = vmatpush.bf16.msra.mxu0 %v418
    %499 = vmatpush.bf16.msra.mxu0 %v414
    %500 = vmatpush.bf16.msra.mxu0 %v410
    %501 = vmatpush.bf16.msra.mxu0 %v406
    %502 = vmatmul.bf16.gmra.mxu0 %v275
    %v503 = vpop.f32.mrf.mxu0
    %v504 = vadd.f32 0.0, %v503
    %v505 = vpop.f32.mrf.mxu0
    %506 = vdwg.mxu0
    %507 = vmatpush.bf16.msra.mxu0 %v435
    %508 = vmatpush.bf16.msra.mxu0 %v431
    %509 = vmatpush.bf16.msra.mxu0 %v427
    %510 = vmatpush.bf16.msra.mxu0 %v423
    %511 = vmatpush.bf16.msra.mxu0 %v419
    %512 = vmatpush.bf16.msra.mxu0 %v415
    %513 = vmatpush.bf16.msra.mxu0 %v411
    %514 = vmatpush.bf16.msra.mxu0 %v407
    %515 = vmatmul.bf16.gmra.mxu0 %v275
    %v516 = vpop.f32.mrf.mxu0
    %v517 = vadd.f32 0.0, %v516
    %v518 = vpop.f32.mrf.mxu0
    %519 = vdwg.mxu0
    %v520 = vadd.f32 %v271, %v478
    %v521 = vadd.f32 %v272, %v491
    %v522 = vadd.f32 %v273, %v504
    %v523 = vadd.f32 %v274, %v517
    %v524 = vmul.f32 %v520, 0.5
    %v525 = vtanh.pop %v524
    %v526 = vmul.f32 %v525, 0.5
    %v527 = vadd.f32 %v526, 0.5
    %v528 = vmul.f32 %v521, 0.5
    %v529 = vtanh.pop %v528
    %v530 = vmul.f32 %v529, 0.5
    %v531 = vadd.f32 %v530, 0.5
    %v532 = vtanh.pop %v522
    %v533 = vmul.f32 %v523, 0.5
    %v534 = vtanh.pop %v533
    %v535 = vmul.f32 %v534, 0.5
    %v536 = vadd.f32 %v535, 0.5
    %v537 = vmul.f32 %v531, %v265
    %v538 = vmul.f32 %v527, %v532
    %v539 = vadd.f32 %v537, %v538
    %v540 = vtanh.pop %v539
    %v541 = vmul.f32 %v536, %v540
    %542 = vst [vmem:[#allocation8] sm:$0xff] %v541
    %s543 = smul.u32 1, 4
    %s544 = smul.addr %s543, 4
    %s545 = scalar_lea.vmem [#allocation4], %s544
    %v546 = vld [vmem:[%s545] sm:$0xff]
    %v547 = vld [vmem:[%s545 + $0x8] sm:$0xff]
    %v548 = vunpack.c.l.bf16 %v546
    %v549 = vunpack.c.h.bf16 %v546
    %v550 = vunpack.c.l.bf16 %v547
    %v551 = vunpack.c.h.bf16 %v547
    %v552 = vpack.c.bf16 %v541, %v541
    %v553 = vld [vmem:[#allocation5] sm:$0xff]
    %v554 = vld [vmem:[#allocation5 + $0x8] sm:$0xff]
    %v555 = vld [vmem:[#allocation5 + $0x10] sm:$0xff]
    %v556 = vld [vmem:[#allocation5 + $0x18] sm:$0xff]
    %v557 = vld [vmem:[#allocation5 + $0x20] sm:$0xff]
    %v558 = vld [vmem:[#allocation5 + $0x28] sm:$0xff]
    %v559 = vld [vmem:[#allocation5 + $0x30] sm:$0xff]
    %v560 = vld [vmem:[#allocation5 + $0x38] sm:$0xff]
    %v561 = vld [vmem:[#allocation5 + $0x40] sm:$0xff]
    %v562 = vld [vmem:[#allocation5 + $0x48] sm:$0xff]
    %v563 = vld [vmem:[#allocation5 + $0x50] sm:$0xff]
    %v564 = vld [vmem:[#allocation5 + $0x58] sm:$0xff]
    %v565 = vld [vmem:[#allocation5 + $0x60] sm:$0xff]
    %v566 = vld [vmem:[#allocation5 + $0x68] sm:$0xff]
    %v567 = vld [vmem:[#allocation5 + $0x70] sm:$0xff]
    %v568 = vld [vmem:[#allocation5 + $0x78] sm:$0xff]
    %v569 = vld [vmem:[#allocation5 + $0x80] sm:$0xff]
    %v570 = vld [vmem:[#allocation5 + $0x88] sm:$0xff]
    %v571 = vld [vmem:[#allocation5 + $0x90] sm:$0xff]
    %v572 = vld [vmem:[#allocation5 + $0x98] sm:$0xff]
    %v573 = vld [vmem:[#allocation5 + $0xa0] sm:$0xff]
    %v574 = vld [vmem:[#allocation5 + $0xa8] sm:$0xff]
    %v575 = vld [vmem:[#allocation5 + $0xb0] sm:$0xff]
    %v576 = vld [vmem:[#allocation5 + $0xb8] sm:$0xff]
    %v577 = vld [vmem:[#allocation5 + $0xc0] sm:$0xff]
    %v578 = vld [vmem:[#allocation5 + $0xc8] sm:$0xff]
    %v579 = vld [vmem:[#allocation5 + $0xd0] sm:$0xff]
    %v580 = vld [vmem:[#allocation5 + $0xd8] sm:$0xff]
    %v581 = vld [vmem:[#allocation5 + $0xe0] sm:$0xff]
    %v582 = vld [vmem:[#allocation5 + $0xe8] sm:$0xff]
    %v583 = vld [vmem:[#allocation5 + $0xf0] sm:$0xff]
    %v584 = vld [vmem:[#allocation5 + $0xf8] sm:$0xff]
    %v617 = vunpack.c.l.b16 %v553
    %v618 = vunpack.c.h.b16 %v553
    %v619 = vunpack.c.l.b16 %v554
    %v620 = vunpack.c.h.b16 %v554
    %v621 = vunpack.c.l.b16 %v555
    %v622 = vunpack.c.h.b16 %v555
    %v623 = vunpack.c.l.b16 %v556
    %v624 = vunpack.c.h.b16 %v556
    %v625 = vunpack.c.l.b16 %v557
    %v626 = vunpack.c.h.b16 %v557
    %v627 = vunpack.c.l.b16 %v558
    %v628 = vunpack.c.h.b16 %v558
    %v629 = vunpack.c.l.b16 %v559
    %v630 = vunpack.c.h.b16 %v559
    %v631 = vunpack.c.l.b16 %v560
    %v632 = vunpack.c.h.b16 %v560
    %v633 = vunpack.c.l.b16 %v561
    %v634 = vunpack.c.h.b16 %v561
    %v635 = vunpack.c.l.b16 %v562
    %v636 = vunpack.c.h.b16 %v562
    %v637 = vunpack.c.l.b16 %v563
    %v638 = vunpack.c.h.b16 %v563
    %v639 = vunpack.c.l.b16 %v564
    %v640 = vunpack.c.h.b16 %v564
    %v641 = vunpack.c.l.b16 %v565
    %v642 = vunpack.c.h.b16 %v565
    %v643 = vunpack.c.l.b16 %v566
    %v644 = vunpack.c.h.b16 %v566
    %v645 = vunpack.c.l.b16 %v567
    %v646 = vunpack.c.h.b16 %v567
    %v647 = vunpack.c.l.b16 %v568
    %v648 = vunpack.c.h.b16 %v568
    %v649 = vunpack.c.l.b16 %v569
    %v650 = vunpack.c.h.b16 %v569
    %v651 = vunpack.c.l.b16 %v570
    %v652 = vunpack.c.h.b16 %v570
    %v653 = vunpack.c.l.b16 %v571
    %v654 = vunpack.c.h.b16 %v571
    %v655 = vunpack.c.l.b16 %v572
    %v656 = vunpack.c.h.b16 %v572
    %v657 = vunpack.c.l.b16 %v573
    %v658 = vunpack.c.h.b16 %v573
    %v659 = vunpack.c.l.b16 %v574
    %v660 = vunpack.c.h.b16 %v574
    %v661 = vunpack.c.l.b16 %v575
    %v662 = vunpack.c.h.b16 %v575
    %v663 = vunpack.c.l.b16 %v576
    %v664 = vunpack.c.h.b16 %v576
    %v665 = vunpack.c.l.b16 %v577
    %v666 = vunpack.c.h.b16 %v577
    %v667 = vunpack.c.l.b16 %v578
    %v668 = vunpack.c.h.b16 %v578
    %v669 = vunpack.c.l.b16 %v579
    %v670 = vunpack.c.h.b16 %v579
    %v671 = vunpack.c.l.b16 %v580
    %v672 = vunpack.c.h.b16 %v580
    %v673 = vunpack.c.l.b16 %v581
    %v674 = vunpack.c.h.b16 %v581
    %v675 = vunpack.c.l.b16 %v582
    %v676 = vunpack.c.h.b16 %v582
    %v677 = vunpack.c.l.b16 %v583
    %v678 = vunpack.c.h.b16 %v583
    %v679 = vunpack.c.l.b16 %v584
    %v680 = vunpack.c.h.b16 %v584
    %v681 = vpack.c.b16 %v621, %v617
    %v682 = vpack.c.b16 %v622, %v618
    %v683 = vpack.c.b16 %v623, %v619
    %v684 = vpack.c.b16 %v624, %v620
    %v685 = vpack.c.b16 %v629, %v625
    %v686 = vpack.c.b16 %v630, %v626
    %v687 = vpack.c.b16 %v631, %v627
    %v688 = vpack.c.b16 %v632, %v628
    %v689 = vpack.c.b16 %v637, %v633
    %v690 = vpack.c.b16 %v638, %v634
    %v691 = vpack.c.b16 %v639, %v635
    %v692 = vpack.c.b16 %v640, %v636
    %v693 = vpack.c.b16 %v645, %v641
    %v694 = vpack.c.b16 %v646, %v642
    %v695 = vpack.c.b16 %v647, %v643
    %v696 = vpack.c.b16 %v648, %v644
    %v697 = vpack.c.b16 %v653, %v649
    %v698 = vpack.c.b16 %v654, %v650
    %v699 = vpack.c.b16 %v655, %v651
    %v700 = vpack.c.b16 %v656, %v652
    %v701 = vpack.c.b16 %v661, %v657
    %v702 = vpack.c.b16 %v662, %v658
    %v703 = vpack.c.b16 %v663, %v659
    %v704 = vpack.c.b16 %v664, %v660
    %v705 = vpack.c.b16 %v669, %v665
    %v706 = vpack.c.b16 %v670, %v666
    %v707 = vpack.c.b16 %v671, %v667
    %v708 = vpack.c.b16 %v672, %v668
    %v709 = vpack.c.b16 %v677, %v673
    %v710 = vpack.c.b16 %v678, %v674
    %v711 = vpack.c.b16 %v679, %v675
    %v712 = vpack.c.b16 %v680, %v676
    %745 = vmatpush.bf16.msra.mxu0 %v709
    %746 = vmatpush.bf16.msra.mxu0 %v705
    %747 = vmatpush.bf16.msra.mxu0 %v701
    %748 = vmatpush.bf16.msra.mxu0 %v697
    %749 = vmatpush.bf16.msra.mxu0 %v693
    %750 = vmatpush.bf16.msra.mxu0 %v689
    %751 = vmatpush.bf16.msra.mxu0 %v685
    %752 = vmatpush.bf16.msra.mxu0 %v681
    %753 = vmatmul.bf16.gmra.mxu0 %v552
    %v754 = vpop.f32.mrf.mxu0
    %v755 = vadd.f32 0.0, %v754
    %v756 = vpop.f32.mrf.mxu0
    %757 = vdwg.mxu0
    %758 = vmatpush.bf16.msra.mxu0 %v710
    %759 = vmatpush.bf16.msra.mxu0 %v706
    %760 = vmatpush.bf16.msra.mxu0 %v702
    %761 = vmatpush.bf16.msra.mxu0 %v698
    %762 = vmatpush.bf16.msra.mxu0 %v694
    %763 = vmatpush.bf16.msra.mxu0 %v690
    %764 = vmatpush.bf16.msra.mxu0 %v686
    %765 = vmatpush.bf16.msra.mxu0 %v682
    %766 = vmatmul.bf16.gmra.mxu0 %v552
    %v767 = vpop.f32.mrf.mxu0
    %v768 = vadd.f32 0.0, %v767
    %v769 = vpop.f32.mrf.mxu0
    %770 = vdwg.mxu0
    %771 = vmatpush.bf16.msra.mxu0 %v711
    %772 = vmatpush.bf16.msra.mxu0 %v707
    %773 = vmatpush.bf16.msra.mxu0 %v703
    %774 = vmatpush.bf16.msra.mxu0 %v699
    %775 = vmatpush.bf16.msra.mxu0 %v695
    %776 = vmatpush.bf16.msra.mxu0 %v691
    %777 = vmatpush.bf16.msra.mxu0 %v687
    %778 = vmatpush.bf16.msra.mxu0 %v683
    %779 = vmatmul.bf16.gmra.mxu0 %v552
    %v780 = vpop.f32.mrf.mxu0
    %v781 = vadd.f32 0.0, %v780
    %v782 = vpop.f32.mrf.mxu0
    %783 = vdwg.mxu0
    %784 = vmatpush.bf16.msra.mxu0 %v712
    %785 = vmatpush.bf16.msra.mxu0 %v708
    %786 = vmatpush.bf16.msra.mxu0 %v704
    %787 = vmatpush.bf16.msra.mxu0 %v700
    %788 = vmatpush.bf16.msra.mxu0 %v696
    %789 = vmatpush.bf16.msra.mxu0 %v692
    %790 = vmatpush.bf16.msra.mxu0 %v688
    %791 = vmatpush.bf16.msra.mxu0 %v684
    %792 = vmatmul.bf16.gmra.mxu0 %v552
    %v793 = vpop.f32.mrf.mxu0
    %v794 = vadd.f32 0.0, %v793
    %v795 = vpop.f32.mrf.mxu0
    %796 = vdwg.mxu0
    %v797 = vadd.f32 %v548, %v755
    %v798 = vadd.f32 %v549, %v768
    %v799 = vadd.f32 %v550, %v781
    %v800 = vadd.f32 %v551, %v794
    %v801 = vmul.f32 %v797, 0.5
    %v802 = vtanh.pop %v801
    %v803 = vmul.f32 %v802, 0.5
    %v804 = vadd.f32 %v803, 0.5
    %v805 = vmul.f32 %v798, 0.5
    %v806 = vtanh.pop %v805
    %v807 = vmul.f32 %v806, 0.5
    %v808 = vadd.f32 %v807, 0.5
    %v809 = vtanh.pop %v799
    %v810 = vmul.f32 %v800, 0.5
    %v811 = vtanh.pop %v810
    %v812 = vmul.f32 %v811, 0.5
    %v813 = vadd.f32 %v812, 0.5
    %v814 = vmul.f32 %v808, %v539
    %v815 = vmul.f32 %v804, %v809
    %v816 = vadd.f32 %v814, %v815
    %v817 = vtanh.pop %v816
    %v818 = vmul.f32 %v813, %v817
    %s819 = scalar_lea.vmem [#allocation8], 8
    %820 = vst [vmem:[%s819] sm:$0xff] %v818
    %s821 = smul.u32 2, 4
    %s822 = smul.addr %s821, 4
    %s823 = scalar_lea.vmem [#allocation4], %s822
    %v824 = vld [vmem:[%s823] sm:$0xff]
    %v825 = vld [vmem:[%s823 + $0x8] sm:$0xff]
    %v826 = vunpack.c.l.bf16 %v824
    %v827 = vunpack.c.h.bf16 %v824
    %v828 = vunpack.c.l.bf16 %v825
    %v829 = vunpack.c.h.bf16 %v825
    %v830 = vpack.c.bf16 %v818, %v818
    %v831 = vld [vmem:[#allocation5] sm:$0xff]
    %v832 = vld [vmem:[#allocation5 + $0x8] sm:$0xff]
    %v833 = vld [vmem:[#allocation5 + $0x10] sm:$0xff]
    %v834 = vld [vmem:[#allocation5 + $0x18] sm:$0xff]
    %v835 = vld [vmem:[#allocation5 + $0x20] sm:$0xff]
    %v836 = vld [vmem:[#allocation5 + $0x28] sm:$0xff]
    %v837 = vld [vmem:[#allocation5 + $0x30] sm:$0xff]
    %v838 = vld [vmem:[#allocation5 + $0x38] sm:$0xff]
    %v839 = vld [vmem:[#allocation5 + $0x40] sm:$0xff]
    %v840 = vld [vmem:[#allocation5 + $0x48] sm:$0xff]
    %v841 = vld [vmem:[#allocation5 + $0x50] sm:$0xff]
    %v842 = vld [vmem:[#allocation5 + $0x58] sm:$0xff]
    %v843 = vld [vmem:[#allocation5 + $0x60] sm:$0xff]
    %v844 = vld [vmem:[#allocation5 + $0x68] sm:$0xff]
    %v845 = vld [vmem:[#allocation5 + $0x70] sm:$0xff]
    %v846 = vld [vmem:[#allocation5 + $0x78] sm:$0xff]
    %v847 = vld [vmem:[#allocation5 + $0x80] sm:$0xff]
    %v848 = vld [vmem:[#allocation5 + $0x88] sm:$0xff]
    %v849 = vld [vmem:[#allocation5 + $0x90] sm:$0xff]
    %v850 = vld [vmem:[#allocation5 + $0x98] sm:$0xff]
    %v851 = vld [vmem:[#allocation5 + $0xa0] sm:$0xff]
    %v852 = vld [vmem:[#allocation5 + $0xa8] sm:$0xff]
    %v853 = vld [vmem:[#allocation5 + $0xb0] sm:$0xff]
    %v854 = vld [vmem:[#allocation5 + $0xb8] sm:$0xff]
    %v855 = vld [vmem:[#allocation5 + $0xc0] sm:$0xff]
    %v856 = vld [vmem:[#allocation5 + $0xc8] sm:$0xff]
    %v857 = vld [vmem:[#allocation5 + $0xd0] sm:$0xff]
    %v858 = vld [vmem:[#allocation5 + $0xd8] sm:$0xff]
    %v859 = vld [vmem:[#allocation5 + $0xe0] sm:$0xff]
    %v860 = vld [vmem:[#allocation5 + $0xe8] sm:$0xff]
    %v861 = vld [vmem:[#allocation5 + $0xf0] sm:$0xff]
    %v862 = vld [vmem:[#allocation5 + $0xf8] sm:$0xff]
    %v895 = vunpack.c.l.b16 %v831
    %v896 = vunpack.c.h.b16 %v831
    %v897 = vunpack.c.l.b16 %v832
    %v898 = vunpack.c.h.b16 %v832
    %v899 = vunpack.c.l.b16 %v833
    %v900 = vunpack.c.h.b16 %v833
    %v901 = vunpack.c.l.b16 %v834
    %v902 = vunpack.c.h.b16 %v834
    %v903 = vunpack.c.l.b16 %v835
    %v904 = vunpack.c.h.b16 %v835
    %v905 = vunpack.c.l.b16 %v836
    %v906 = vunpack.c.h.b16 %v836
    %v907 = vunpack.c.l.b16 %v837
    %v908 = vunpack.c.h.b16 %v837
    %v909 = vunpack.c.l.b16 %v838
    %v910 = vunpack.c.h.b16 %v838
    %v911 = vunpack.c.l.b16 %v839
    %v912 = vunpack.c.h.b16 %v839
    %v913 = vunpack.c.l.b16 %v840
    %v914 = vunpack.c.h.b16 %v840
    %v915 = vunpack.c.l.b16 %v841
    %v916 = vunpack.c.h.b16 %v841
    %v917 = vunpack.c.l.b16 %v842
    %v918 = vunpack.c.h.b16 %v842
    %v919 = vunpack.c.l.b16 %v843
    %v920 = vunpack.c.h.b16 %v843
    %v921 = vunpack.c.l.b16 %v844
    %v922 = vunpack.c.h.b16 %v844
    %v923 = vunpack.c.l.b16 %v845
    %v924 = vunpack.c.h.b16 %v845
    %v925 = vunpack.c.l.b16 %v846
    %v926 = vunpack.c.h.b16 %v846
    %v927 = vunpack.c.l.b16 %v847
    %v928 = vunpack.c.h.b16 %v847
    %v929 = vunpack.c.l.b16 %v848
    %v930 = vunpack.c.h.b16 %v848
    %v931 = vunpack.c.l.b16 %v849
    %v932 = vunpack.c.h.b16 %v849
    %v933 = vunpack.c.l.b16 %v850
    %v934 = vunpack.c.h.b16 %v850
    %v935 = vunpack.c.l.b16 %v851
    %v936 = vunpack.c.h.b16 %v851
    %v937 = vunpack.c.l.b16 %v852
    %v938 = vunpack.c.h.b16 %v852
    %v939 = vunpack.c.l.b16 %v853
    %v940 = vunpack.c.h.b16 %v853
    %v941 = vunpack.c.l.b16 %v854
    %v942 = vunpack.c.h.b16 %v854
    %v943 = vunpack.c.l.b16 %v855
    %v944 = vunpack.c.h.b16 %v855
    %v945 = vunpack.c.l.b16 %v856
    %v946 = vunpack.c.h.b16 %v856
    %v947 = vunpack.c.l.b16 %v857
    %v948 = vunpack.c.h.b16 %v857
    %v949 = vunpack.c.l.b16 %v858
    %v950 = vunpack.c.h.b16 %v858
    %v951 = vunpack.c.l.b16 %v859
    %v952 = vunpack.c.h.b16 %v859
    %v953 = vunpack.c.l.b16 %v860
    %v954 = vunpack.c.h.b16 %v860
    %v955 = vunpack.c.l.b16 %v861
    %v956 = vunpack.c.h.b16 %v861
    %v957 = vunpack.c.l.b16 %v862
    %v958 = vunpack.c.h.b16 %v862
    %v959 = vpack.c.b16 %v899, %v895
    %v960 = vpack.c.b16 %v900, %v896
    %v961 = vpack.c.b16 %v901, %v897
    %v962 = vpack.c.b16 %v902, %v898
    %v963 = vpack.c.b16 %v907, %v903
    %v964 = vpack.c.b16 %v908, %v904
    %v965 = vpack.c.b16 %v909, %v905
    %v966 = vpack.c.b16 %v910, %v906
    %v967 = vpack.c.b16 %v915, %v911
    %v968 = vpack.c.b16 %v916, %v912
    %v969 = vpack.c.b16 %v917, %v913
    %v970 = vpack.c.b16 %v918, %v914
    %v971 = vpack.c.b16 %v923, %v919
    %v972 = vpack.c.b16 %v924, %v920
    %v973 = vpack.c.b16 %v925, %v921
    %v974 = vpack.c.b16 %v926, %v922
    %v975 = vpack.c.b16 %v931, %v927
    %v976 = vpack.c.b16 %v932, %v928
    %v977 = vpack.c.b16 %v933, %v929
    %v978 = vpack.c.b16 %v934, %v930
    %v979 = vpack.c.b16 %v939, %v935
    %v980 = vpack.c.b16 %v940, %v936
    %v981 = vpack.c.b16 %v941, %v937
    %v982 = vpack.c.b16 %v942, %v938
    %v983 = vpack.c.b16 %v947, %v943
    %v984 = vpack.c.b16 %v948, %v944
    %v985 = vpack.c.b16 %v949, %v945
    %v986 = vpack.c.b16 %v950, %v946
    %v987 = vpack.c.b16 %v955, %v951
    %v988 = vpack.c.b16 %v956, %v952
    %v989 = vpack.c.b16 %v957, %v953
    %v990 = vpack.c.b16 %v958, %v954
    %1023 = vmatpush.bf16.msra.mxu0 %v987
    %1024 = vmatpush.bf16.msra.mxu0 %v983
    %1025 = vmatpush.bf16.msra.mxu0 %v979
    %1026 = vmatpush.bf16.msra.mxu0 %v975
    %1027 = vmatpush.bf16.msra.mxu0 %v971
    %1028 = vmatpush.bf16.msra.mxu0 %v967
    %1029 = vmatpush.bf16.msra.mxu0 %v963
    %1030 = vmatpush.bf16.msra.mxu0 %v959
    %1031 = vmatmul.bf16.gmra.mxu0 %v830
    %v1032 = vpop.f32.mrf.mxu0
    %v1033 = vadd.f32 0.0, %v1032
    %v1034 = vpop.f32.mrf.mxu0
    %1035 = vdwg.mxu0
    %1036 = vmatpush.bf16.msra.mxu0 %v988
    %1037 = vmatpush.bf16.msra.mxu0 %v984
    %1038 = vmatpush.bf16.msra.mxu0 %v980
    %1039 = vmatpush.bf16.msra.mxu0 %v976
    %1040 = vmatpush.bf16.msra.mxu0 %v972
    %1041 = vmatpush.bf16.msra.mxu0 %v968
    %1042 = vmatpush.bf16.msra.mxu0 %v964
    %1043 = vmatpush.bf16.msra.mxu0 %v960
    %1044 = vmatmul.bf16.gmra.mxu0 %v830
    %v1045 = vpop.f32.mrf.mxu0
    %v1046 = vadd.f32 0.0, %v1045
    %v1047 = vpop.f32.mrf.mxu0
    %1048 = vdwg.mxu0
    %1049 = vmatpush.bf16.msra.mxu0 %v989
    %1050 = vmatpush.bf16.msra.mxu0 %v985
    %1051 = vmatpush.bf16.msra.mxu0 %v981
    %1052 = vmatpush.bf16.msra.mxu0 %v977
    %1053 = vmatpush.bf16.msra.mxu0 %v973
    %1054 = vmatpush.bf16.msra.mxu0 %v969
    %1055 = vmatpush.bf16.msra.mxu0 %v965
    %1056 = vmatpush.bf16.msra.mxu0 %v961
    %1057 = vmatmul.bf16.gmra.mxu0 %v830
    %v1058 = vpop.f32.mrf.mxu0
    %v1059 = vadd.f32 0.0, %v1058
    %v1060 = vpop.f32.mrf.mxu0
    %1061 = vdwg.mxu0
    %1062 = vmatpush.bf16.msra.mxu0 %v990
    %1063 = vmatpush.bf16.msra.mxu0 %v986
    %1064 = vmatpush.bf16.msra.mxu0 %v982
    %1065 = vmatpush.bf16.msra.mxu0 %v978
    %1066 = vmatpush.bf16.msra.mxu0 %v974
    %1067 = vmatpush.bf16.msra.mxu0 %v970
    %1068 = vmatpush.bf16.msra.mxu0 %v966
    %1069 = vmatpush.bf16.msra.mxu0 %v962
    %1070 = vmatmul.bf16.gmra.mxu0 %v830
    %v1071 = vpop.f32.mrf.mxu0
    %v1072 = vadd.f32 0.0, %v1071
    %v1073 = vpop.f32.mrf.mxu0
    %1074 = vdwg.mxu0
    %v1075 = vadd.f32 %v826, %v1033
    %v1076 = vadd.f32 %v827, %v1046
    %v1077 = vadd.f32 %v828, %v1059
    %v1078 = vadd.f32 %v829, %v1072
    %v1079 = vmul.f32 %v1075, 0.5
    %v1080 = vtanh.pop %v1079
    %v1081 = vmul.f32 %v1080, 0.5
    %v1082 = vadd.f32 %v1081, 0.5
    %v1083 = vmul.f32 %v1076, 0.5
    %v1084 = vtanh.pop %v1083
    %v1085 = vmul.f32 %v1084, 0.5
    %v1086 = vadd.f32 %v1085, 0.5
    %v1087 = vtanh.pop %v1077
    %v1088 = vmul.f32 %v1078, 0.5
    %v1089 = vtanh.pop %v1088
    %v1090 = vmul.f32 %v1089, 0.5
    %v1091 = vadd.f32 %v1090, 0.5
    %v1092 = vmul.f32 %v1086, %v816
    %v1093 = vmul.f32 %v1082, %v1087
    %v1094 = vadd.f32 %v1092, %v1093
    %v1095 = vtanh.pop %v1094
    %v1096 = vmul.f32 %v1091, %v1095
    %s1097 = scalar_lea.vmem [#allocation8], 16
    %1098 = vst [vmem:[%s1097] sm:$0xff] %v1096
    %s1099 = smul.u32 3, 4
    %s1100 = smul.addr %s1099, 4
    %s1101 = scalar_lea.vmem [#allocation4], %s1100
    %v1102 = vld [vmem:[%s1101] sm:$0xff]
    %v1103 = vld [vmem:[%s1101 + $0x8] sm:$0xff]
    %v1104 = vunpack.c.l.bf16 %v1102
    %v1105 = vunpack.c.h.bf16 %v1102
    %v1106 = vunpack.c.l.bf16 %v1103
    %v1107 = vunpack.c.h.bf16 %v1103
    %v1108 = vpack.c.bf16 %v1096, %v1096
    %v1109 = vld [vmem:[#allocation5] sm:$0xff]
    %v1110 = vld [vmem:[#allocation5 + $0x8] sm:$0xff]
    %v1111 = vld [vmem:[#allocation5 + $0x10] sm:$0xff]
    %v1112 = vld [vmem:[#allocation5 + $0x18] sm:$0xff]
    %v1113 = vld [vmem:[#allocation5 + $0x20] sm:$0xff]
    %v1114 = vld [vmem:[#allocation5 + $0x28] sm:$0xff]
    %v1115 = vld [vmem:[#allocation5 + $0x30] sm:$0xff]
    %v1116 = vld [vmem:[#allocation5 + $0x38] sm:$0xff]
    %v1117 = vld [vmem:[#allocation5 + $0x40] sm:$0xff]
    %v1118 = vld [vmem:[#allocation5 + $0x48] sm:$0xff]
    %v1119 = vld [vmem:[#allocation5 + $0x50] sm:$0xff]
    %v1120 = vld [vmem:[#allocation5 + $0x58] sm:$0xff]
    %v1121 = vld [vmem:[#allocation5 + $0x60] sm:$0xff]
    %v1122 = vld [vmem:[#allocation5 + $0x68] sm:$0xff]
    %v1123 = vld [vmem:[#allocation5 + $0x70] sm:$0xff]
    %v1124 = vld [vmem:[#allocation5 + $0x78] sm:$0xff]
    %v1125 = vld [vmem:[#allocation5 + $0x80] sm:$0xff]
    %v1126 = vld [vmem:[#allocation5 + $0x88] sm:$0xff]
    %v1127 = vld [vmem:[#allocation5 + $0x90] sm:$0xff]
    %v1128 = vld [vmem:[#allocation5 + $0x98] sm:$0xff]
    %v1129 = vld [vmem:[#allocation5 + $0xa0] sm:$0xff]
    %v1130 = vld [vmem:[#allocation5 + $0xa8] sm:$0xff]
    %v1131 = vld [vmem:[#allocation5 + $0xb0] sm:$0xff]
    %v1132 = vld [vmem:[#allocation5 + $0xb8] sm:$0xff]
    %v1133 = vld [vmem:[#allocation5 + $0xc0] sm:$0xff]
    %v1134 = vld [vmem:[#allocation5 + $0xc8] sm:$0xff]
    %v1135 = vld [vmem:[#allocation5 + $0xd0] sm:$0xff]
    %v1136 = vld [vmem:[#allocation5 + $0xd8] sm:$0xff]
    %v1137 = vld [vmem:[#allocation5 + $0xe0] sm:$0xff]
    %v1138 = vld [vmem:[#allocation5 + $0xe8] sm:$0xff]
    %v1139 = vld [vmem:[#allocation5 + $0xf0] sm:$0xff]
    %v1140 = vld [vmem:[#allocation5 + $0xf8] sm:$0xff]
    %v1173 = vunpack.c.l.b16 %v1109
    %v1174 = vunpack.c.h.b16 %v1109
    %v1175 = vunpack.c.l.b16 %v1110
    %v1176 = vunpack.c.h.b16 %v1110
    %v1177 = vunpack.c.l.b16 %v1111
    %v1178 = vunpack.c.h.b16 %v1111
    %v1179 = vunpack.c.l.b16 %v1112
    %v1180 = vunpack.c.h.b16 %v1112
    %v1181 = vunpack.c.l.b16 %v1113
    %v1182 = vunpack.c.h.b16 %v1113
    %v1183 = vunpack.c.l.b16 %v1114
    %v1184 = vunpack.c.h.b16 %v1114
    %v1185 = vunpack.c.l.b16 %v1115
    %v1186 = vunpack.c.h.b16 %v1115
    %v1187 = vunpack.c.l.b16 %v1116
    %v1188 = vunpack.c.h.b16 %v1116
    %v1189 = vunpack.c.l.b16 %v1117
    %v1190 = vunpack.c.h.b16 %v1117
    %v1191 = vunpack.c.l.b16 %v1118
    %v1192 = vunpack.c.h.b16 %v1118
    %v1193 = vunpack.c.l.b16 %v1119
    %v1194 = vunpack.c.h.b16 %v1119
    %v1195 = vunpack.c.l.b16 %v1120
    %v1196 = vunpack.c.h.b16 %v1120
    %v1197 = vunpack.c.l.b16 %v1121
    %v1198 = vunpack.c.h.b16 %v1121
    %v1199 = vunpack.c.l.b16 %v1122
    %v1200 = vunpack.c.h.b16 %v1122
    %v1201 = vunpack.c.l.b16 %v1123
    %v1202 = vunpack.c.h.b16 %v1123
    %v1203 = vunpack.c.l.b16 %v1124
    %v1204 = vunpack.c.h.b16 %v1124
    %v1205 = vunpack.c.l.b16 %v1125
    %v1206 = vunpack.c.h.b16 %v1125
    %v1207 = vunpack.c.l.b16 %v1126
    %v1208 = vunpack.c.h.b16 %v1126
    %v1209 = vunpack.c.l.b16 %v1127
    %v1210 = vunpack.c.h.b16 %v1127
    %v1211 = vunpack.c.l.b16 %v1128
    %v1212 = vunpack.c.h.b16 %v1128
    %v1213 = vunpack.c.l.b16 %v1129
    %v1214 = vunpack.c.h.b16 %v1129
    %v1215 = vunpack.c.l.b16 %v1130
    %v1216 = vunpack.c.h.b16 %v1130
    %v1217 = vunpack.c.l.b16 %v1131
    %v1218 = vunpack.c.h.b16 %v1131
    %v1219 = vunpack.c.l.b16 %v1132
    %v1220 = vunpack.c.h.b16 %v1132
    %v1221 = vunpack.c.l.b16 %v1133
    %v1222 = vunpack.c.h.b16 %v1133
    %v1223 = vunpack.c.l.b16 %v1134
    %v1224 = vunpack.c.h.b16 %v1134
    %v1225 = vunpack.c.l.b16 %v1135
    %v1226 = vunpack.c.h.b16 %v1135
    %v1227 = vunpack.c.l.b16 %v1136
    %v1228 = vunpack.c.h.b16 %v1136
    %v1229 = vunpack.c.l.b16 %v1137
    %v1230 = vunpack.c.h.b16 %v1137
    %v1231 = vunpack.c.l.b16 %v1138
    %v1232 = vunpack.c.h.b16 %v1138
    %v1233 = vunpack.c.l.b16 %v1139
    %v1234 = vunpack.c.h.b16 %v1139
    %v1235 = vunpack.c.l.b16 %v1140
    %v1236 = vunpack.c.h.b16 %v1140
    %v1237 = vpack.c.b16 %v1177, %v1173
    %v1238 = vpack.c.b16 %v1178, %v1174
    %v1239 = vpack.c.b16 %v1179, %v1175
    %v1240 = vpack.c.b16 %v1180, %v1176
    %v1241 = vpack.c.b16 %v1185, %v1181
    %v1242 = vpack.c.b16 %v1186, %v1182
    %v1243 = vpack.c.b16 %v1187, %v1183
    %v1244 = vpack.c.b16 %v1188, %v1184
    %v1245 = vpack.c.b16 %v1193, %v1189
    %v1246 = vpack.c.b16 %v1194, %v1190
    %v1247 = vpack.c.b16 %v1195, %v1191
    %v1248 = vpack.c.b16 %v1196, %v1192
    %v1249 = vpack.c.b16 %v1201, %v1197
    %v1250 = vpack.c.b16 %v1202, %v1198
    %v1251 = vpack.c.b16 %v1203, %v1199
    %v1252 = vpack.c.b16 %v1204, %v1200
    %v1253 = vpack.c.b16 %v1209, %v1205
    %v1254 = vpack.c.b16 %v1210, %v1206
    %v1255 = vpack.c.b16 %v1211, %v1207
    %v1256 = vpack.c.b16 %v1212, %v1208
    %v1257 = vpack.c.b16 %v1217, %v1213
    %v1258 = vpack.c.b16 %v1218, %v1214
    %v1259 = vpack.c.b16 %v1219, %v1215
    %v1260 = vpack.c.b16 %v1220, %v1216
    %v1261 = vpack.c.b16 %v1225, %v1221
    %v1262 = vpack.c.b16 %v1226, %v1222
    %v1263 = vpack.c.b16 %v1227, %v1223
    %v1264 = vpack.c.b16 %v1228, %v1224
    %v1265 = vpack.c.b16 %v1233, %v1229
    %v1266 = vpack.c.b16 %v1234, %v1230
    %v1267 = vpack.c.b16 %v1235, %v1231
    %v1268 = vpack.c.b16 %v1236, %v1232
    %1301 = vmatpush.bf16.msra.mxu0 %v1265
    %1302 = vmatpush.bf16.msra.mxu0 %v1261
    %1303 = vmatpush.bf16.msra.mxu0 %v1257
    %1304 = vmatpush.bf16.msra.mxu0 %v1253
    %1305 = vmatpush.bf16.msra.mxu0 %v1249
    %1306 = vmatpush.bf16.msra.mxu0 %v1245
    %1307 = vmatpush.bf16.msra.mxu0 %v1241
    %1308 = vmatpush.bf16.msra.mxu0 %v1237
    %1309 = vmatmul.bf16.gmra.mxu0 %v1108
    %v1310 = vpop.f32.mrf.mxu0
    %v1311 = vadd.f32 0.0, %v1310
    %v1312 = vpop.f32.mrf.mxu0
    %1313 = vdwg.mxu0
    %1314 = vmatpush.bf16.msra.mxu0 %v1266
    %1315 = vmatpush.bf16.msra.mxu0 %v1262
    %1316 = vmatpush.bf16.msra.mxu0 %v1258
    %1317 = vmatpush.bf16.msra.mxu0 %v1254
    %1318 = vmatpush.bf16.msra.mxu0 %v1250
    %1319 = vmatpush.bf16.msra.mxu0 %v1246
    %1320 = vmatpush.bf16.msra.mxu0 %v1242
    %1321 = vmatpush.bf16.msra.mxu0 %v1238
    %1322 = vmatmul.bf16.gmra.mxu0 %v1108
    %v1323 = vpop.f32.mrf.mxu0
    %v1324 = vadd.f32 0.0, %v1323
    %v1325 = vpop.f32.mrf.mxu0
    %1326 = vdwg.mxu0
    %1327 = vmatpush.bf16.msra.mxu0 %v1267
    %1328 = vmatpush.bf16.msra.mxu0 %v1263
    %1329 = vmatpush.bf16.msra.mxu0 %v1259
    %1330 = vmatpush.bf16.msra.mxu0 %v1255
    %1331 = vmatpush.bf16.msra.mxu0 %v1251
    %1332 = vmatpush.bf16.msra.mxu0 %v1247
    %1333 = vmatpush.bf16.msra.mxu0 %v1243
    %1334 = vmatpush.bf16.msra.mxu0 %v1239
    %1335 = vmatmul.bf16.gmra.mxu0 %v1108
    %v1336 = vpop.f32.mrf.mxu0
    %v1337 = vadd.f32 0.0, %v1336
    %v1338 = vpop.f32.mrf.mxu0
    %1339 = vdwg.mxu0
    %1340 = vmatpush.bf16.msra.mxu0 %v1268
    %1341 = vmatpush.bf16.msra.mxu0 %v1264
    %1342 = vmatpush.bf16.msra.mxu0 %v1260
    %1343 = vmatpush.bf16.msra.mxu0 %v1256
    %1344 = vmatpush.bf16.msra.mxu0 %v1252
    %1345 = vmatpush.bf16.msra.mxu0 %v1248
    %1346 = vmatpush.bf16.msra.mxu0 %v1244
    %1347 = vmatpush.bf16.msra.mxu0 %v1240
    %1348 = vmatmul.bf16.gmra.mxu0 %v1108
    %v1349 = vpop.f32.mrf.mxu0
    %v1350 = vadd.f32 0.0, %v1349
    %v1351 = vpop.f32.mrf.mxu0
    %1352 = vdwg.mxu0
    %v1353 = vadd.f32 %v1104, %v1311
    %v1354 = vadd.f32 %v1105, %v1324
    %v1355 = vadd.f32 %v1106, %v1337
    %v1356 = vadd.f32 %v1107, %v1350
    %v1357 = vmul.f32 %v1353, 0.5
    %v1358 = vtanh.pop %v1357
    %v1359 = vmul.f32 %v1358, 0.5
    %v1360 = vadd.f32 %v1359, 0.5
    %v1361 = vmul.f32 %v1354, 0.5
    %v1362 = vtanh.pop %v1361
    %v1363 = vmul.f32 %v1362, 0.5
    %v1364 = vadd.f32 %v1363, 0.5
    %v1365 = vtanh.pop %v1355
    %v1366 = vmul.f32 %v1356, 0.5
    %v1367 = vtanh.pop %v1366
    %v1368 = vmul.f32 %v1367, 0.5
    %v1369 = vadd.f32 %v1368, 0.5
    %v1370 = vmul.f32 %v1364, %v1094
    %v1371 = vmul.f32 %v1360, %v1365
    %v1372 = vadd.f32 %v1370, %v1371
    %v1373 = vtanh.pop %v1372
    %v1374 = vmul.f32 %v1369, %v1373
    %s1375 = scalar_lea.vmem [#allocation8], 24
    %1376 = vst [vmem:[%s1375] sm:$0xff] %v1374
    %s1377 = smul.u32 4, 4
    %s1378 = smul.addr %s1377, 4
    %s1379 = scalar_lea.vmem [#allocation4], %s1378
    %v1380 = vld [vmem:[%s1379] sm:$0xff]
    %v1381 = vld [vmem:[%s1379 + $0x8] sm:$0xff]
    %v1382 = vunpack.c.l.bf16 %v1380
    %v1383 = vunpack.c.h.bf16 %v1380
    %v1384 = vunpack.c.l.bf16 %v1381
    %v1385 = vunpack.c.h.bf16 %v1381
    %v1386 = vpack.c.bf16 %v1374, %v1374
    %v1387 = vld [vmem:[#allocation5] sm:$0xff]
    %v1388 = vld [vmem:[#allocation5 + $0x8] sm:$0xff]
    %v1389 = vld [vmem:[#allocation5 + $0x10] sm:$0xff]
    %v1390 = vld [vmem:[#allocation5 + $0x18] sm:$0xff]
    %v1391 = vld [vmem:[#allocation5 + $0x20] sm:$0xff]
    %v1392 = vld [vmem:[#allocation5 + $0x28] sm:$0xff]
    %v1393 = vld [vmem:[#allocation5 + $0x30] sm:$0xff]
    %v1394 = vld [vmem:[#allocation5 + $0x38] sm:$0xff]
    %v1395 = vld [vmem:[#allocation5 + $0x40] sm:$0xff]
    %v1396 = vld [vmem:[#allocation5 + $0x48] sm:$0xff]
    %v1397 = vld [vmem:[#allocation5 + $0x50] sm:$0xff]
    %v1398 = vld [vmem:[#allocation5 + $0x58] sm:$0xff]
    %v1399 = vld [vmem:[#allocation5 + $0x60] sm:$0xff]
    %v1400 = vld [vmem:[#allocation5 + $0x68] sm:$0xff]
    %v1401 = vld [vmem:[#allocation5 + $0x70] sm:$0xff]
    %v1402 = vld [vmem:[#allocation5 + $0x78] sm:$0xff]
    %v1403 = vld [vmem:[#allocation5 + $0x80] sm:$0xff]
    %v1404 = vld [vmem:[#allocation5 + $0x88] sm:$0xff]
    %v1405 = vld [vmem:[#allocation5 + $0x90] sm:$0xff]
    %v1406 = vld [vmem:[#allocation5 + $0x98] sm:$0xff]
    %v1407 = vld [vmem:[#allocation5 + $0xa0] sm:$0xff]
    %v1408 = vld [vmem:[#allocation5 + $0xa8] sm:$0xff]
    %v1409 = vld [vmem:[#allocation5 + $0xb0] sm:$0xff]
    %v1410 = vld [vmem:[#allocation5 + $0xb8] sm:$0xff]
    %v1411 = vld [vmem:[#allocation5 + $0xc0] sm:$0xff]
    %v1412 = vld [vmem:[#allocation5 + $0xc8] sm:$0xff]
    %v1413 = vld [vmem:[#allocation5 + $0xd0] sm:$0xff]
    %v1414 = vld [vmem:[#allocation5 + $0xd8] sm:$0xff]
    %v1415 = vld [vmem:[#allocation5 + $0xe0] sm:$0xff]
    %v1416 = vld [vmem:[#allocation5 + $0xe8] sm:$0xff]
    %v1417 = vld [vmem:[#allocation5 + $0xf0] sm:$0xff]
    %v1418 = vld [vmem:[#allocation5 + $0xf8] sm:$0xff]
    %v1451 = vunpack.c.l.b16 %v1387
    %v1452 = vunpack.c.h.b16 %v1387
    %v1453 = vunpack.c.l.b16 %v1388
    %v1454 = vunpack.c.h.b16 %v1388
    %v1455 = vunpack.c.l.b16 %v1389
    %v1456 = vunpack.c.h.b16 %v1389
    %v1457 = vunpack.c.l.b16 %v1390
    %v1458 = vunpack.c.h.b16 %v1390
    %v1459 = vunpack.c.l.b16 %v1391
    %v1460 = vunpack.c.h.b16 %v1391
    %v1461 = vunpack.c.l.b16 %v1392
    %v1462 = vunpack.c.h.b16 %v1392
    %v1463 = vunpack.c.l.b16 %v1393
    %v1464 = vunpack.c.h.b16 %v1393
    %v1465 = vunpack.c.l.b16 %v1394
    %v1466 = vunpack.c.h.b16 %v1394
    %v1467 = vunpack.c.l.b16 %v1395
    %v1468 = vunpack.c.h.b16 %v1395
    %v1469 = vunpack.c.l.b16 %v1396
    %v1470 = vunpack.c.h.b16 %v1396
    %v1471 = vunpack.c.l.b16 %v1397
    %v1472 = vunpack.c.h.b16 %v1397
    %v1473 = vunpack.c.l.b16 %v1398
    %v1474 = vunpack.c.h.b16 %v1398
    %v1475 = vunpack.c.l.b16 %v1399
    %v1476 = vunpack.c.h.b16 %v1399
    %v1477 = vunpack.c.l.b16 %v1400
    %v1478 = vunpack.c.h.b16 %v1400
    %v1479 = vunpack.c.l.b16 %v1401
    %v1480 = vunpack.c.h.b16 %v1401
    %v1481 = vunpack.c.l.b16 %v1402
    %v1482 = vunpack.c.h.b16 %v1402
    %v1483 = vunpack.c.l.b16 %v1403
    %v1484 = vunpack.c.h.b16 %v1403
    %v1485 = vunpack.c.l.b16 %v1404
    %v1486 = vunpack.c.h.b16 %v1404
    %v1487 = vunpack.c.l.b16 %v1405
    %v1488 = vunpack.c.h.b16 %v1405
    %v1489 = vunpack.c.l.b16 %v1406
    %v1490 = vunpack.c.h.b16 %v1406
    %v1491 = vunpack.c.l.b16 %v1407
    %v1492 = vunpack.c.h.b16 %v1407
    %v1493 = vunpack.c.l.b16 %v1408
    %v1494 = vunpack.c.h.b16 %v1408
    %v1495 = vunpack.c.l.b16 %v1409
    %v1496 = vunpack.c.h.b16 %v1409
    %v1497 = vunpack.c.l.b16 %v1410
    %v1498 = vunpack.c.h.b16 %v1410
    %v1499 = vunpack.c.l.b16 %v1411
    %v1500 = vunpack.c.h.b16 %v1411
    %v1501 = vunpack.c.l.b16 %v1412
    %v1502 = vunpack.c.h.b16 %v1412
    %v1503 = vunpack.c.l.b16 %v1413
    %v1504 = vunpack.c.h.b16 %v1413
    %v1505 = vunpack.c.l.b16 %v1414
    %v1506 = vunpack.c.h.b16 %v1414
    %v1507 = vunpack.c.l.b16 %v1415
    %v1508 = vunpack.c.h.b16 %v1415
    %v1509 = vunpack.c.l.b16 %v1416
    %v1510 = vunpack.c.h.b16 %v1416
    %v1511 = vunpack.c.l.b16 %v1417
    %v1512 = vunpack.c.h.b16 %v1417
    %v1513 = vunpack.c.l.b16 %v1418
    %v1514 = vunpack.c.h.b16 %v1418
    %v1515 = vpack.c.b16 %v1455, %v1451
    %v1516 = vpack.c.b16 %v1456, %v1452
    %v1517 = vpack.c.b16 %v1457, %v1453
    %v1518 = vpack.c.b16 %v1458, %v1454
    %v1519 = vpack.c.b16 %v1463, %v1459
    %v1520 = vpack.c.b16 %v1464, %v1460
    %v1521 = vpack.c.b16 %v1465, %v1461
    %v1522 = vpack.c.b16 %v1466, %v1462
    %v1523 = vpack.c.b16 %v1471, %v1467
    %v1524 = vpack.c.b16 %v1472, %v1468
    %v1525 = vpack.c.b16 %v1473, %v1469
    %v1526 = vpack.c.b16 %v1474, %v1470
    %v1527 = vpack.c.b16 %v1479, %v1475
    %v1528 = vpack.c.b16 %v1480, %v1476
    %v1529 = vpack.c.b16 %v1481, %v1477
    %v1530 = vpack.c.b16 %v1482, %v1478
    %v1531 = vpack.c.b16 %v1487, %v1483
    %v1532 = vpack.c.b16 %v1488, %v1484
    %v1533 = vpack.c.b16 %v1489, %v1485
    %v1534 = vpack.c.b16 %v1490, %v1486
    %v1535 = vpack.c.b16 %v1495, %v1491
    %v1536 = vpack.c.b16 %v1496, %v1492
    %v1537 = vpack.c.b16 %v1497, %v1493
    %v1538 = vpack.c.b16 %v1498, %v1494
    %v1539 = vpack.c.b16 %v1503, %v1499
    %v1540 = vpack.c.b16 %v1504, %v1500
    %v1541 = vpack.c.b16 %v1505, %v1501
    %v1542 = vpack.c.b16 %v1506, %v1502
    %v1543 = vpack.c.b16 %v1511, %v1507
    %v1544 = vpack.c.b16 %v1512, %v1508
    %v1545 = vpack.c.b16 %v1513, %v1509
    %v1546 = vpack.c.b16 %v1514, %v1510
    %1579 = vmatpush.bf16.msra.mxu0 %v1543
    %1580 = vmatpush.bf16.msra.mxu0 %v1539
    %1581 = vmatpush.bf16.msra.mxu0 %v1535
    %1582 = vmatpush.bf16.msra.mxu0 %v1531
    %1583 = vmatpush.bf16.msra.mxu0 %v1527
    %1584 = vmatpush.bf16.msra.mxu0 %v1523
    %1585 = vmatpush.bf16.msra.mxu0 %v1519
    %1586 = vmatpush.bf16.msra.mxu0 %v1515
    %1587 = vmatmul.bf16.gmra.mxu0 %v1386
    %v1588 = vpop.f32.mrf.mxu0
    %v1589 = vadd.f32 0.0, %v1588
    %v1590 = vpop.f32.mrf.mxu0
    %1591 = vdwg.mxu0
    %1592 = vmatpush.bf16.msra.mxu0 %v1544
    %1593 = vmatpush.bf16.msra.mxu0 %v1540
    %1594 = vmatpush.bf16.msra.mxu0 %v1536
    %1595 = vmatpush.bf16.msra.mxu0 %v1532
    %1596 = vmatpush.bf16.msra.mxu0 %v1528
    %1597 = vmatpush.bf16.msra.mxu0 %v1524
    %1598 = vmatpush.bf16.msra.mxu0 %v1520
    %1599 = vmatpush.bf16.msra.mxu0 %v1516
    %1600 = vmatmul.bf16.gmra.mxu0 %v1386
    %v1601 = vpop.f32.mrf.mxu0
    %v1602 = vadd.f32 0.0, %v1601
    %v1603 = vpop.f32.mrf.mxu0
    %1604 = vdwg.mxu0
    %1605 = vmatpush.bf16.msra.mxu0 %v1545
    %1606 = vmatpush.bf16.msra.mxu0 %v1541
    %1607 = vmatpush.bf16.msra.mxu0 %v1537
    %1608 = vmatpush.bf16.msra.mxu0 %v1533
    %1609 = vmatpush.bf16.msra.mxu0 %v1529
    %1610 = vmatpush.bf16.msra.mxu0 %v1525
    %1611 = vmatpush.bf16.msra.mxu0 %v1521
    %1612 = vmatpush.bf16.msra.mxu0 %v1517
    %1613 = vmatmul.bf16.gmra.mxu0 %v1386
    %v1614 = vpop.f32.mrf.mxu0
    %v1615 = vadd.f32 0.0, %v1614
    %v1616 = vpop.f32.mrf.mxu0
    %1617 = vdwg.mxu0
    %1618 = vmatpush.bf16.msra.mxu0 %v1546
    %1619 = vmatpush.bf16.msra.mxu0 %v1542
    %1620 = vmatpush.bf16.msra.mxu0 %v1538
    %1621 = vmatpush.bf16.msra.mxu0 %v1534
    %1622 = vmatpush.bf16.msra.mxu0 %v1530
    %1623 = vmatpush.bf16.msra.mxu0 %v1526
    %1624 = vmatpush.bf16.msra.mxu0 %v1522
    %1625 = vmatpush.bf16.msra.mxu0 %v1518
    %1626 = vmatmul.bf16.gmra.mxu0 %v1386
    %v1627 = vpop.f32.mrf.mxu0
    %v1628 = vadd.f32 0.0, %v1627
    %v1629 = vpop.f32.mrf.mxu0
    %1630 = vdwg.mxu0
    %v1631 = vadd.f32 %v1382, %v1589
    %v1632 = vadd.f32 %v1383, %v1602
    %v1633 = vadd.f32 %v1384, %v1615
    %v1634 = vadd.f32 %v1385, %v1628
    %v1635 = vmul.f32 %v1631, 0.5
    %v1636 = vtanh.pop %v1635
    %v1637 = vmul.f32 %v1636, 0.5
    %v1638 = vadd.f32 %v1637, 0.5
    %v1639 = vmul.f32 %v1632, 0.5
    %v1640 = vtanh.pop %v1639
    %v1641 = vmul.f32 %v1640, 0.5
    %v1642 = vadd.f32 %v1641, 0.5
    %v1643 = vtanh.pop %v1633
    %v1644 = vmul.f32 %v1634, 0.5
    %v1645 = vtanh.pop %v1644
    %v1646 = vmul.f32 %v1645, 0.5
    %v1647 = vadd.f32 %v1646, 0.5
    %v1648 = vmul.f32 %v1642, %v1372
    %v1649 = vmul.f32 %v1638, %v1643
    %v1650 = vadd.f32 %v1648, %v1649
    %v1651 = vtanh.pop %v1650
    %v1652 = vmul.f32 %v1647, %v1651
    %s1653 = scalar_lea.vmem [#allocation8], 32
    %1654 = vst [vmem:[%s1653] sm:$0xff] %v1652
    %s1655 = smul.u32 5, 4
    %s1656 = smul.addr %s1655, 4
    %s1657 = scalar_lea.vmem [#allocation4], %s1656
    %v1658 = vld [vmem:[%s1657] sm:$0xff]
    %v1659 = vld [vmem:[%s1657 + $0x8] sm:$0xff]
    %v1660 = vunpack.c.l.bf16 %v1658
    %v1661 = vunpack.c.h.bf16 %v1658
    %v1662 = vunpack.c.l.bf16 %v1659
    %v1663 = vunpack.c.h.bf16 %v1659
    %v1664 = vpack.c.bf16 %v1652, %v1652
    %v1665 = vld [vmem:[#allocation5] sm:$0xff]
    %v1666 = vld [vmem:[#allocation5 + $0x8] sm:$0xff]
    %v1667 = vld [vmem:[#allocation5 + $0x10] sm:$0xff]
    %v1668 = vld [vmem:[#allocation5 + $0x18] sm:$0xff]
    %v1669 = vld [vmem:[#allocation5 + $0x20] sm:$0xff]
    %v1670 = vld [vmem:[#allocation5 + $0x28] sm:$0xff]
    %v1671 = vld [vmem:[#allocation5 + $0x30] sm:$0xff]
    %v1672 = vld [vmem:[#allocation5 + $0x38] sm:$0xff]
    %v1673 = vld [vmem:[#allocation5 + $0x40] sm:$0xff]
    %v1674 = vld [vmem:[#allocation5 + $0x48] sm:$0xff]
    %v1675 = vld [vmem:[#allocation5 + $0x50] sm:$0xff]
    %v1676 = vld [vmem:[#allocation5 + $0x58] sm:$0xff]
    %v1677 = vld [vmem:[#allocation5 + $0x60] sm:$0xff]
    %v1678 = vld [vmem:[#allocation5 + $0x68] sm:$0xff]
    %v1679 = vld [vmem:[#allocation5 + $0x70] sm:$0xff]
    %v1680 = vld [vmem:[#allocation5 + $0x78] sm:$0xff]
    %v1681 = vld [vmem:[#allocation5 + $0x80] sm:$0xff]
    %v1682 = vld [vmem:[#allocation5 + $0x88] sm:$0xff]
    %v1683 = vld [vmem:[#allocation5 + $0x90] sm:$0xff]
    %v1684 = vld [vmem:[#allocation5 + $0x98] sm:$0xff]
    %v1685 = vld [vmem:[#allocation5 + $0xa0] sm:$0xff]
    %v1686 = vld [vmem:[#allocation5 + $0xa8] sm:$0xff]
    %v1687 = vld [vmem:[#allocation5 + $0xb0] sm:$0xff]
    %v1688 = vld [vmem:[#allocation5 + $0xb8] sm:$0xff]
    %v1689 = vld [vmem:[#allocation5 + $0xc0] sm:$0xff]
    %v1690 = vld [vmem:[#allocation5 + $0xc8] sm:$0xff]
    %v1691 = vld [vmem:[#allocation5 + $0xd0] sm:$0xff]
    %v1692 = vld [vmem:[#allocation5 + $0xd8] sm:$0xff]
    %v1693 = vld [vmem:[#allocation5 + $0xe0] sm:$0xff]
    %v1694 = vld [vmem:[#allocation5 + $0xe8] sm:$0xff]
    %v1695 = vld [vmem:[#allocation5 + $0xf0] sm:$0xff]
    %v1696 = vld [vmem:[#allocation5 + $0xf8] sm:$0xff]
    %v1729 = vunpack.c.l.b16 %v1665
    %v1730 = vunpack.c.h.b16 %v1665
    %v1731 = vunpack.c.l.b16 %v1666
    %v1732 = vunpack.c.h.b16 %v1666
    %v1733 = vunpack.c.l.b16 %v1667
    %v1734 = vunpack.c.h.b16 %v1667
    %v1735 = vunpack.c.l.b16 %v1668
    %v1736 = vunpack.c.h.b16 %v1668
    %v1737 = vunpack.c.l.b16 %v1669
    %v1738 = vunpack.c.h.b16 %v1669
    %v1739 = vunpack.c.l.b16 %v1670
    %v1740 = vunpack.c.h.b16 %v1670
    %v1741 = vunpack.c.l.b16 %v1671
    %v1742 = vunpack.c.h.b16 %v1671
    %v1743 = vunpack.c.l.b16 %v1672
    %v1744 = vunpack.c.h.b16 %v1672
    %v1745 = vunpack.c.l.b16 %v1673
    %v1746 = vunpack.c.h.b16 %v1673
    %v1747 = vunpack.c.l.b16 %v1674
    %v1748 = vunpack.c.h.b16 %v1674
    %v1749 = vunpack.c.l.b16 %v1675
    %v1750 = vunpack.c.h.b16 %v1675
    %v1751 = vunpack.c.l.b16 %v1676
    %v1752 = vunpack.c.h.b16 %v1676
    %v1753 = vunpack.c.l.b16 %v1677
    %v1754 = vunpack.c.h.b16 %v1677
    %v1755 = vunpack.c.l.b16 %v1678
    %v1756 = vunpack.c.h.b16 %v1678
    %v1757 = vunpack.c.l.b16 %v1679
    %v1758 = vunpack.c.h.b16 %v1679
    %v1759 = vunpack.c.l.b16 %v1680
    %v1760 = vunpack.c.h.b16 %v1680
    %v1761 = vunpack.c.l.b16 %v1681
    %v1762 = vunpack.c.h.b16 %v1681
    %v1763 = vunpack.c.l.b16 %v1682
    %v1764 = vunpack.c.h.b16 %v1682
    %v1765 = vunpack.c.l.b16 %v1683
    %v1766 = vunpack.c.h.b16 %v1683
    %v1767 = vunpack.c.l.b16 %v1684
    %v1768 = vunpack.c.h.b16 %v1684
    %v1769 = vunpack.c.l.b16 %v1685
    %v1770 = vunpack.c.h.b16 %v1685
    %v1771 = vunpack.c.l.b16 %v1686
    %v1772 = vunpack.c.h.b16 %v1686
    %v1773 = vunpack.c.l.b16 %v1687
    %v1774 = vunpack.c.h.b16 %v1687
    %v1775 = vunpack.c.l.b16 %v1688
    %v1776 = vunpack.c.h.b16 %v1688
    %v1777 = vunpack.c.l.b16 %v1689
    %v1778 = vunpack.c.h.b16 %v1689
    %v1779 = vunpack.c.l.b16 %v1690
    %v1780 = vunpack.c.h.b16 %v1690
    %v1781 = vunpack.c.l.b16 %v1691
    %v1782 = vunpack.c.h.b16 %v1691
    %v1783 = vunpack.c.l.b16 %v1692
    %v1784 = vunpack.c.h.b16 %v1692
    %v1785 = vunpack.c.l.b16 %v1693
    %v1786 = vunpack.c.h.b16 %v1693
    %v1787 = vunpack.c.l.b16 %v1694
    %v1788 = vunpack.c.h.b16 %v1694
    %v1789 = vunpack.c.l.b16 %v1695
    %v1790 = vunpack.c.h.b16 %v1695
    %v1791 = vunpack.c.l.b16 %v1696
    %v1792 = vunpack.c.h.b16 %v1696
    %v1793 = vpack.c.b16 %v1733, %v1729
    %v1794 = vpack.c.b16 %v1734, %v1730
    %v1795 = vpack.c.b16 %v1735, %v1731
    %v1796 = vpack.c.b16 %v1736, %v1732
    %v1797 = vpack.c.b16 %v1741, %v1737
    %v1798 = vpack.c.b16 %v1742, %v1738
    %v1799 = vpack.c.b16 %v1743, %v1739
    %v1800 = vpack.c.b16 %v1744, %v1740
    %v1801 = vpack.c.b16 %v1749, %v1745
    %v1802 = vpack.c.b16 %v1750, %v1746
    %v1803 = vpack.c.b16 %v1751, %v1747
    %v1804 = vpack.c.b16 %v1752, %v1748
    %v1805 = vpack.c.b16 %v1757, %v1753
    %v1806 = vpack.c.b16 %v1758, %v1754
    %v1807 = vpack.c.b16 %v1759, %v1755
    %v1808 = vpack.c.b16 %v1760, %v1756
    %v1809 = vpack.c.b16 %v1765, %v1761
    %v1810 = vpack.c.b16 %v1766, %v1762
    %v1811 = vpack.c.b16 %v1767, %v1763
    %v1812 = vpack.c.b16 %v1768, %v1764
    %v1813 = vpack.c.b16 %v1773, %v1769
    %v1814 = vpack.c.b16 %v1774, %v1770
    %v1815 = vpack.c.b16 %v1775, %v1771
    %v1816 = vpack.c.b16 %v1776, %v1772
    %v1817 = vpack.c.b16 %v1781, %v1777
    %v1818 = vpack.c.b16 %v1782, %v1778
    %v1819 = vpack.c.b16 %v1783, %v1779
    %v1820 = vpack.c.b16 %v1784, %v1780
    %v1821 = vpack.c.b16 %v1789, %v1785
    %v1822 = vpack.c.b16 %v1790, %v1786
    %v1823 = vpack.c.b16 %v1791, %v1787
    %v1824 = vpack.c.b16 %v1792, %v1788
    %1857 = vmatpush.bf16.msra.mxu0 %v1821
    %1858 = vmatpush.bf16.msra.mxu0 %v1817
    %1859 = vmatpush.bf16.msra.mxu0 %v1813
    %1860 = vmatpush.bf16.msra.mxu0 %v1809
    %1861 = vmatpush.bf16.msra.mxu0 %v1805
    %1862 = vmatpush.bf16.msra.mxu0 %v1801
    %1863 = vmatpush.bf16.msra.mxu0 %v1797
    %1864 = vmatpush.bf16.msra.mxu0 %v1793
    %1865 = vmatmul.bf16.gmra.mxu0 %v1664
    %v1866 = vpop.f32.mrf.mxu0
    %v1867 = vadd.f32 0.0, %v1866
    %v1868 = vpop.f32.mrf.mxu0
    %1869 = vdwg.mxu0
    %1870 = vmatpush.bf16.msra.mxu0 %v1822
    %1871 = vmatpush.bf16.msra.mxu0 %v1818
    %1872 = vmatpush.bf16.msra.mxu0 %v1814
    %1873 = vmatpush.bf16.msra.mxu0 %v1810
    %1874 = vmatpush.bf16.msra.mxu0 %v1806
    %1875 = vmatpush.bf16.msra.mxu0 %v1802
    %1876 = vmatpush.bf16.msra.mxu0 %v1798
    %1877 = vmatpush.bf16.msra.mxu0 %v1794
    %1878 = vmatmul.bf16.gmra.mxu0 %v1664
    %v1879 = vpop.f32.mrf.mxu0
    %v1880 = vadd.f32 0.0, %v1879
    %v1881 = vpop.f32.mrf.mxu0
    %1882 = vdwg.mxu0
    %1883 = vmatpush.bf16.msra.mxu0 %v1823
    %1884 = vmatpush.bf16.msra.mxu0 %v1819
    %1885 = vmatpush.bf16.msra.mxu0 %v1815
    %1886 = vmatpush.bf16.msra.mxu0 %v1811
    %1887 = vmatpush.bf16.msra.mxu0 %v1807
    %1888 = vmatpush.bf16.msra.mxu0 %v1803
    %1889 = vmatpush.bf16.msra.mxu0 %v1799
    %1890 = vmatpush.bf16.msra.mxu0 %v1795
    %1891 = vmatmul.bf16.gmra.mxu0 %v1664
    %v1892 = vpop.f32.mrf.mxu0
    %v1893 = vadd.f32 0.0, %v1892
    %v1894 = vpop.f32.mrf.mxu0
    %1895 = vdwg.mxu0
    %1896 = vmatpush.bf16.msra.mxu0 %v1824
    %1897 = vmatpush.bf16.msra.mxu0 %v1820
    %1898 = vmatpush.bf16.msra.mxu0 %v1816
    %1899 = vmatpush.bf16.msra.mxu0 %v1812
    %1900 = vmatpush.bf16.msra.mxu0 %v1808
    %1901 = vmatpush.bf16.msra.mxu0 %v1804
    %1902 = vmatpush.bf16.msra.mxu0 %v1800
    %1903 = vmatpush.bf16.msra.mxu0 %v1796
    %1904 = vmatmul.bf16.gmra.mxu0 %v1664
    %v1905 = vpop.f32.mrf.mxu0
    %v1906 = vadd.f32 0.0, %v1905
    %v1907 = vpop.f32.mrf.mxu0
    %1908 = vdwg.mxu0
    %v1909 = vadd.f32 %v1660, %v1867
    %v1910 = vadd.f32 %v1661, %v1880
    %v1911 = vadd.f32 %v1662, %v1893
    %v1912 = vadd.f32 %v1663, %v1906
    %v1913 = vmul.f32 %v1909, 0.5
    %v1914 = vtanh.pop %v1913
    %v1915 = vmul.f32 %v1914, 0.5
    %v1916 = vadd.f32 %v1915, 0.5
    %v1917 = vmul.f32 %v1910, 0.5
    %v1918 = vtanh.pop %v1917
    %v1919 = vmul.f32 %v1918, 0.5
    %v1920 = vadd.f32 %v1919, 0.5
    %v1921 = vtanh.pop %v1911
    %v1922 = vmul.f32 %v1912, 0.5
    %v1923 = vtanh.pop %v1922
    %v1924 = vmul.f32 %v1923, 0.5
    %v1925 = vadd.f32 %v1924, 0.5
    %v1926 = vmul.f32 %v1920, %v1650
    %v1927 = vmul.f32 %v1916, %v1921
    %v1928 = vadd.f32 %v1926, %v1927
    %v1929 = vtanh.pop %v1928
    %v1930 = vmul.f32 %v1925, %v1929
    %s1931 = scalar_lea.vmem [#allocation8], 40
    %1932 = vst [vmem:[%s1931] sm:$0xff] %v1930
    %s1933 = smul.u32 6, 4
    %s1934 = smul.addr %s1933, 4
    %s1935 = scalar_lea.vmem [#allocation4], %s1934
    %v1936 = vld [vmem:[%s1935] sm:$0xff]
    %v1937 = vld [vmem:[%s1935 + $0x8] sm:$0xff]
    %v1938 = vunpack.c.l.bf16 %v1936
    %v1939 = vunpack.c.h.bf16 %v1936
    %v1940 = vunpack.c.l.bf16 %v1937
    %v1941 = vunpack.c.h.bf16 %v1937
    %v1942 = vpack.c.bf16 %v1930, %v1930
    %v1943 = vld [vmem:[#allocation5] sm:$0xff]
    %v1944 = vld [vmem:[#allocation5 + $0x8] sm:$0xff]
    %v1945 = vld [vmem:[#allocation5 + $0x10] sm:$0xff]
    %v1946 = vld [vmem:[#allocation5 + $0x18] sm:$0xff]
    %v1947 = vld [vmem:[#allocation5 + $0x20] sm:$0xff]
    %v1948 = vld [vmem:[#allocation5 + $0x28] sm:$0xff]
    %v1949 = vld [vmem:[#allocation5 + $0x30] sm:$0xff]
    %v1950 = vld [vmem:[#allocation5 + $0x38] sm:$0xff]
    %v1951 = vld [vmem:[#allocation5 + $0x40] sm:$0xff]
    %v1952 = vld [vmem:[#allocation5 + $0x48] sm:$0xff]
    %v1953 = vld [vmem:[#allocation5 + $0x50] sm:$0xff]
    %v1954 = vld [vmem:[#allocation5 + $0x58] sm:$0xff]
    %v1955 = vld [vmem:[#allocation5 + $0x60] sm:$0xff]
    %v1956 = vld [vmem:[#allocation5 + $0x68] sm:$0xff]
    %v1957 = vld [vmem:[#allocation5 + $0x70] sm:$0xff]
    %v1958 = vld [vmem:[#allocation5 + $0x78] sm:$0xff]
    %v1959 = vld [vmem:[#allocation5 + $0x80] sm:$0xff]
    %v1960 = vld [vmem:[#allocation5 + $0x88] sm:$0xff]
    %v1961 = vld [vmem:[#allocation5 + $0x90] sm:$0xff]
    %v1962 = vld [vmem:[#allocation5 + $0x98] sm:$0xff]
    %v1963 = vld [vmem:[#allocation5 + $0xa0] sm:$0xff]
    %v1964 = vld [vmem:[#allocation5 + $0xa8] sm:$0xff]
    %v1965 = vld [vmem:[#allocation5 + $0xb0] sm:$0xff]
    %v1966 = vld [vmem:[#allocation5 + $0xb8] sm:$0xff]
    %v1967 = vld [vmem:[#allocation5 + $0xc0] sm:$0xff]
    %v1968 = vld [vmem:[#allocation5 + $0xc8] sm:$0xff]
    %v1969 = vld [vmem:[#allocation5 + $0xd0] sm:$0xff]
    %v1970 = vld [vmem:[#allocation5 + $0xd8] sm:$0xff]
    %v1971 = vld [vmem:[#allocation5 + $0xe0] sm:$0xff]
    %v1972 = vld [vmem:[#allocation5 + $0xe8] sm:$0xff]
    %v1973 = vld [vmem:[#allocation5 + $0xf0] sm:$0xff]
    %v1974 = vld [vmem:[#allocation5 + $0xf8] sm:$0xff]
    %v2007 = vunpack.c.l.b16 %v1943
    %v2008 = vunpack.c.h.b16 %v1943
    %v2009 = vunpack.c.l.b16 %v1944
    %v2010 = vunpack.c.h.b16 %v1944
    %v2011 = vunpack.c.l.b16 %v1945
    %v2012 = vunpack.c.h.b16 %v1945
    %v2013 = vunpack.c.l.b16 %v1946
    %v2014 = vunpack.c.h.b16 %v1946
    %v2015 = vunpack.c.l.b16 %v1947
    %v2016 = vunpack.c.h.b16 %v1947
    %v2017 = vunpack.c.l.b16 %v1948
    %v2018 = vunpack.c.h.b16 %v1948
    %v2019 = vunpack.c.l.b16 %v1949
    %v2020 = vunpack.c.h.b16 %v1949
    %v2021 = vunpack.c.l.b16 %v1950
    %v2022 = vunpack.c.h.b16 %v1950
    %v2023 = vunpack.c.l.b16 %v1951
    %v2024 = vunpack.c.h.b16 %v1951
    %v2025 = vunpack.c.l.b16 %v1952
    %v2026 = vunpack.c.h.b16 %v1952
    %v2027 = vunpack.c.l.b16 %v1953
    %v2028 = vunpack.c.h.b16 %v1953
    %v2029 = vunpack.c.l.b16 %v1954
    %v2030 = vunpack.c.h.b16 %v1954
    %v2031 = vunpack.c.l.b16 %v1955
    %v2032 = vunpack.c.h.b16 %v1955
    %v2033 = vunpack.c.l.b16 %v1956
    %v2034 = vunpack.c.h.b16 %v1956
    %v2035 = vunpack.c.l.b16 %v1957
    %v2036 = vunpack.c.h.b16 %v1957
    %v2037 = vunpack.c.l.b16 %v1958
    %v2038 = vunpack.c.h.b16 %v1958
    %v2039 = vunpack.c.l.b16 %v1959
    %v2040 = vunpack.c.h.b16 %v1959
    %v2041 = vunpack.c.l.b16 %v1960
    %v2042 = vunpack.c.h.b16 %v1960
    %v2043 = vunpack.c.l.b16 %v1961
    %v2044 = vunpack.c.h.b16 %v1961
    %v2045 = vunpack.c.l.b16 %v1962
    %v2046 = vunpack.c.h.b16 %v1962
    %v2047 = vunpack.c.l.b16 %v1963
    %v2048 = vunpack.c.h.b16 %v1963
    %v2049 = vunpack.c.l.b16 %v1964
    %v2050 = vunpack.c.h.b16 %v1964
    %v2051 = vunpack.c.l.b16 %v1965
    %v2052 = vunpack.c.h.b16 %v1965
    %v2053 = vunpack.c.l.b16 %v1966
    %v2054 = vunpack.c.h.b16 %v1966
    %v2055 = vunpack.c.l.b16 %v1967
    %v2056 = vunpack.c.h.b16 %v1967
    %v2057 = vunpack.c.l.b16 %v1968
    %v2058 = vunpack.c.h.b16 %v1968
    %v2059 = vunpack.c.l.b16 %v1969
    %v2060 = vunpack.c.h.b16 %v1969
    %v2061 = vunpack.c.l.b16 %v1970
    %v2062 = vunpack.c.h.b16 %v1970
    %v2063 = vunpack.c.l.b16 %v1971
    %v2064 = vunpack.c.h.b16 %v1971
    %v2065 = vunpack.c.l.b16 %v1972
    %v2066 = vunpack.c.h.b16 %v1972
    %v2067 = vunpack.c.l.b16 %v1973
    %v2068 = vunpack.c.h.b16 %v1973
    %v2069 = vunpack.c.l.b16 %v1974
    %v2070 = vunpack.c.h.b16 %v1974
    %v2071 = vpack.c.b16 %v2011, %v2007
    %v2072 = vpack.c.b16 %v2012, %v2008
    %v2073 = vpack.c.b16 %v2013, %v2009
    %v2074 = vpack.c.b16 %v2014, %v2010
    %v2075 = vpack.c.b16 %v2019, %v2015
    %v2076 = vpack.c.b16 %v2020, %v2016
    %v2077 = vpack.c.b16 %v2021, %v2017
    %v2078 = vpack.c.b16 %v2022, %v2018
    %v2079 = vpack.c.b16 %v2027, %v2023
    %v2080 = vpack.c.b16 %v2028, %v2024
    %v2081 = vpack.c.b16 %v2029, %v2025
    %v2082 = vpack.c.b16 %v2030, %v2026
    %v2083 = vpack.c.b16 %v2035, %v2031
    %v2084 = vpack.c.b16 %v2036, %v2032
    %v2085 = vpack.c.b16 %v2037, %v2033
    %v2086 = vpack.c.b16 %v2038, %v2034
    %v2087 = vpack.c.b16 %v2043, %v2039
    %v2088 = vpack.c.b16 %v2044, %v2040
    %v2089 = vpack.c.b16 %v2045, %v2041
    %v2090 = vpack.c.b16 %v2046, %v2042
    %v2091 = vpack.c.b16 %v2051, %v2047
    %v2092 = vpack.c.b16 %v2052, %v2048
    %v2093 = vpack.c.b16 %v2053, %v2049
    %v2094 = vpack.c.b16 %v2054, %v2050
    %v2095 = vpack.c.b16 %v2059, %v2055
    %v2096 = vpack.c.b16 %v2060, %v2056
    %v2097 = vpack.c.b16 %v2061, %v2057
    %v2098 = vpack.c.b16 %v2062, %v2058
    %v2099 = vpack.c.b16 %v2067, %v2063
    %v2100 = vpack.c.b16 %v2068, %v2064
    %v2101 = vpack.c.b16 %v2069, %v2065
    %v2102 = vpack.c.b16 %v2070, %v2066
    %2135 = vmatpush.bf16.msra.mxu0 %v2099
    %2136 = vmatpush.bf16.msra.mxu0 %v2095
    %2137 = vmatpush.bf16.msra.mxu0 %v2091
    %2138 = vmatpush.bf16.msra.mxu0 %v2087
    %2139 = vmatpush.bf16.msra.mxu0 %v2083
    %2140 = vmatpush.bf16.msra.mxu0 %v2079
    %2141 = vmatpush.bf16.msra.mxu0 %v2075
    %2142 = vmatpush.bf16.msra.mxu0 %v2071
    %2143 = vmatmul.bf16.gmra.mxu0 %v1942
    %v2144 = vpop.f32.mrf.mxu0
    %v2145 = vadd.f32 0.0, %v2144
    %v2146 = vpop.f32.mrf.mxu0
    %2147 = vdwg.mxu0
    %2148 = vmatpush.bf16.msra.mxu0 %v2100
    %2149 = vmatpush.bf16.msra.mxu0 %v2096
    %2150 = vmatpush.bf16.msra.mxu0 %v2092
    %2151 = vmatpush.bf16.msra.mxu0 %v2088
    %2152 = vmatpush.bf16.msra.mxu0 %v2084
    %2153 = vmatpush.bf16.msra.mxu0 %v2080
    %2154 = vmatpush.bf16.msra.mxu0 %v2076
    %2155 = vmatpush.bf16.msra.mxu0 %v2072
    %2156 = vmatmul.bf16.gmra.mxu0 %v1942
    %v2157 = vpop.f32.mrf.mxu0
    %v2158 = vadd.f32 0.0, %v2157
    %v2159 = vpop.f32.mrf.mxu0
    %2160 = vdwg.mxu0
    %2161 = vmatpush.bf16.msra.mxu0 %v2101
    %2162 = vmatpush.bf16.msra.mxu0 %v2097
    %2163 = vmatpush.bf16.msra.mxu0 %v2093
    %2164 = vmatpush.bf16.msra.mxu0 %v2089
    %2165 = vmatpush.bf16.msra.mxu0 %v2085
    %2166 = vmatpush.bf16.msra.mxu0 %v2081
    %2167 = vmatpush.bf16.msra.mxu0 %v2077
    %2168 = vmatpush.bf16.msra.mxu0 %v2073
    %2169 = vmatmul.bf16.gmra.mxu0 %v1942
    %v2170 = vpop.f32.mrf.mxu0
    %v2171 = vadd.f32 0.0, %v2170
    %v2172 = vpop.f32.mrf.mxu0
    %2173 = vdwg.mxu0
    %2174 = vmatpush.bf16.msra.mxu0 %v2102
    %2175 = vmatpush.bf16.msra.mxu0 %v2098
    %2176 = vmatpush.bf16.msra.mxu0 %v2094
    %2177 = vmatpush.bf16.msra.mxu0 %v2090
    %2178 = vmatpush.bf16.msra.mxu0 %v2086
    %2179 = vmatpush.bf16.msra.mxu0 %v2082
    %2180 = vmatpush.bf16.msra.mxu0 %v2078
    %2181 = vmatpush.bf16.msra.mxu0 %v2074
    %2182 = vmatmul.bf16.gmra.mxu0 %v1942
    %v2183 = vpop.f32.mrf.mxu0
    %v2184 = vadd.f32 0.0, %v2183
    %v2185 = vpop.f32.mrf.mxu0
    %2186 = vdwg.mxu0
    %v2187 = vadd.f32 %v1938, %v2145
    %v2188 = vadd.f32 %v1939, %v2158
    %v2189 = vadd.f32 %v1940, %v2171
    %v2190 = vadd.f32 %v1941, %v2184
    %v2191 = vmul.f32 %v2187, 0.5
    %v2192 = vtanh.pop %v2191
    %v2193 = vmul.f32 %v2192, 0.5
    %v2194 = vadd.f32 %v2193, 0.5
    %v2195 = vmul.f32 %v2188, 0.5
    %v2196 = vtanh.pop %v2195
    %v2197 = vmul.f32 %v2196, 0.5
    %v2198 = vadd.f32 %v2197, 0.5
    %v2199 = vtanh.pop %v2189
    %v2200 = vmul.f32 %v2190, 0.5
    %v2201 = vtanh.pop %v2200
    %v2202 = vmul.f32 %v2201, 0.5
    %v2203 = vadd.f32 %v2202, 0.5
    %v2204 = vmul.f32 %v2198, %v1928
    %v2205 = vmul.f32 %v2194, %v2199
    %v2206 = vadd.f32 %v2204, %v2205
    %v2207 = vtanh.pop %v2206
    %v2208 = vmul.f32 %v2203, %v2207
    %s2209 = scalar_lea.vmem [#allocation8], 48
    %2210 = vst [vmem:[%s2209] sm:$0xff] %v2208
    %s2211 = smul.u32 7, 4
    %s2212 = smul.addr %s2211, 4
    %s2213 = scalar_lea.vmem [#allocation4], %s2212
    %v2214 = vld [vmem:[%s2213] sm:$0xff]
    %v2215 = vld [vmem:[%s2213 + $0x8] sm:$0xff]
    %v2216 = vunpack.c.l.bf16 %v2214
    %v2217 = vunpack.c.h.bf16 %v2214
    %v2218 = vunpack.c.l.bf16 %v2215
    %v2219 = vunpack.c.h.bf16 %v2215
    %v2220 = vpack.c.bf16 %v2208, %v2208
    %v2221 = vld [vmem:[#allocation5] sm:$0xff]
    %v2222 = vld [vmem:[#allocation5 + $0x8] sm:$0xff]
    %v2223 = vld [vmem:[#allocation5 + $0x10] sm:$0xff]
    %v2224 = vld [vmem:[#allocation5 + $0x18] sm:$0xff]
    %v2225 = vld [vmem:[#allocation5 + $0x20] sm:$0xff]
    %v2226 = vld [vmem:[#allocation5 + $0x28] sm:$0xff]
    %v2227 = vld [vmem:[#allocation5 + $0x30] sm:$0xff]
    %v2228 = vld [vmem:[#allocation5 + $0x38] sm:$0xff]
    %v2229 = vld [vmem:[#allocation5 + $0x40] sm:$0xff]
    %v2230 = vld [vmem:[#allocation5 + $0x48] sm:$0xff]
    %v2231 = vld [vmem:[#allocation5 + $0x50] sm:$0xff]
    %v2232 = vld [vmem:[#allocation5 + $0x58] sm:$0xff]
    %v2233 = vld [vmem:[#allocation5 + $0x60] sm:$0xff]
    %v2234 = vld [vmem:[#allocation5 + $0x68] sm:$0xff]
    %v2235 = vld [vmem:[#allocation5 + $0x70] sm:$0xff]
    %v2236 = vld [vmem:[#allocation5 + $0x78] sm:$0xff]
    %v2237 = vld [vmem:[#allocation5 + $0x80] sm:$0xff]
    %v2238 = vld [vmem:[#allocation5 + $0x88] sm:$0xff]
    %v2239 = vld [vmem:[#allocation5 + $0x90] sm:$0xff]
    %v2240 = vld [vmem:[#allocation5 + $0x98] sm:$0xff]
    %v2241 = vld [vmem:[#allocation5 + $0xa0] sm:$0xff]
    %v2242 = vld [vmem:[#allocation5 + $0xa8] sm:$0xff]
    %v2243 = vld [vmem:[#allocation5 + $0xb0] sm:$0xff]
    %v2244 = vld [vmem:[#allocation5 + $0xb8] sm:$0xff]
    %v2245 = vld [vmem:[#allocation5 + $0xc0] sm:$0xff]
    %v2246 = vld [vmem:[#allocation5 + $0xc8] sm:$0xff]
    %v2247 = vld [vmem:[#allocation5 + $0xd0] sm:$0xff]
    %v2248 = vld [vmem:[#allocation5 + $0xd8] sm:$0xff]
    %v2249 = vld [vmem:[#allocation5 + $0xe0] sm:$0xff]
    %v2250 = vld [vmem:[#allocation5 + $0xe8] sm:$0xff]
    %v2251 = vld [vmem:[#allocation5 + $0xf0] sm:$0xff]
    %v2252 = vld [vmem:[#allocation5 + $0xf8] sm:$0xff]
    %v2285 = vunpack.c.l.b16 %v2221
    %v2286 = vunpack.c.h.b16 %v2221
    %v2287 = vunpack.c.l.b16 %v2222
    %v2288 = vunpack.c.h.b16 %v2222
    %v2289 = vunpack.c.l.b16 %v2223
    %v2290 = vunpack.c.h.b16 %v2223
    %v2291 = vunpack.c.l.b16 %v2224
    %v2292 = vunpack.c.h.b16 %v2224
    %v2293 = vunpack.c.l.b16 %v2225
    %v2294 = vunpack.c.h.b16 %v2225
    %v2295 = vunpack.c.l.b16 %v2226
    %v2296 = vunpack.c.h.b16 %v2226
    %v2297 = vunpack.c.l.b16 %v2227
    %v2298 = vunpack.c.h.b16 %v2227
    %v2299 = vunpack.c.l.b16 %v2228
    %v2300 = vunpack.c.h.b16 %v2228
    %v2301 = vunpack.c.l.b16 %v2229
    %v2302 = vunpack.c.h.b16 %v2229
    %v2303 = vunpack.c.l.b16 %v2230
    %v2304 = vunpack.c.h.b16 %v2230
    %v2305 = vunpack.c.l.b16 %v2231
    %v2306 = vunpack.c.h.b16 %v2231
    %v2307 = vunpack.c.l.b16 %v2232
    %v2308 = vunpack.c.h.b16 %v2232
    %v2309 = vunpack.c.l.b16 %v2233
    %v2310 = vunpack.c.h.b16 %v2233
    %v2311 = vunpack.c.l.b16 %v2234
    %v2312 = vunpack.c.h.b16 %v2234
    %v2313 = vunpack.c.l.b16 %v2235
    %v2314 = vunpack.c.h.b16 %v2235
    %v2315 = vunpack.c.l.b16 %v2236
    %v2316 = vunpack.c.h.b16 %v2236
    %v2317 = vunpack.c.l.b16 %v2237
    %v2318 = vunpack.c.h.b16 %v2237
    %v2319 = vunpack.c.l.b16 %v2238
    %v2320 = vunpack.c.h.b16 %v2238
    %v2321 = vunpack.c.l.b16 %v2239
    %v2322 = vunpack.c.h.b16 %v2239
    %v2323 = vunpack.c.l.b16 %v2240
    %v2324 = vunpack.c.h.b16 %v2240
    %v2325 = vunpack.c.l.b16 %v2241
    %v2326 = vunpack.c.h.b16 %v2241
    %v2327 = vunpack.c.l.b16 %v2242
    %v2328 = vunpack.c.h.b16 %v2242
    %v2329 = vunpack.c.l.b16 %v2243
    %v2330 = vunpack.c.h.b16 %v2243
    %v2331 = vunpack.c.l.b16 %v2244
    %v2332 = vunpack.c.h.b16 %v2244
    %v2333 = vunpack.c.l.b16 %v2245
    %v2334 = vunpack.c.h.b16 %v2245
    %v2335 = vunpack.c.l.b16 %v2246
    %v2336 = vunpack.c.h.b16 %v2246
    %v2337 = vunpack.c.l.b16 %v2247
    %v2338 = vunpack.c.h.b16 %v2247
    %v2339 = vunpack.c.l.b16 %v2248
    %v2340 = vunpack.c.h.b16 %v2248
    %v2341 = vunpack.c.l.b16 %v2249
    %v2342 = vunpack.c.h.b16 %v2249
    %v2343 = vunpack.c.l.b16 %v2250
    %v2344 = vunpack.c.h.b16 %v2250
    %v2345 = vunpack.c.l.b16 %v2251
    %v2346 = vunpack.c.h.b16 %v2251
    %v2347 = vunpack.c.l.b16 %v2252
    %v2348 = vunpack.c.h.b16 %v2252
    %v2349 = vpack.c.b16 %v2289, %v2285
    %v2350 = vpack.c.b16 %v2290, %v2286
    %v2351 = vpack.c.b16 %v2291, %v2287
    %v2352 = vpack.c.b16 %v2292, %v2288
    %v2353 = vpack.c.b16 %v2297, %v2293
    %v2354 = vpack.c.b16 %v2298, %v2294
    %v2355 = vpack.c.b16 %v2299, %v2295
    %v2356 = vpack.c.b16 %v2300, %v2296
    %v2357 = vpack.c.b16 %v2305, %v2301
    %v2358 = vpack.c.b16 %v2306, %v2302
    %v2359 = vpack.c.b16 %v2307, %v2303
    %v2360 = vpack.c.b16 %v2308, %v2304
    %v2361 = vpack.c.b16 %v2313, %v2309
    %v2362 = vpack.c.b16 %v2314, %v2310
    %v2363 = vpack.c.b16 %v2315, %v2311
    %v2364 = vpack.c.b16 %v2316, %v2312
    %v2365 = vpack.c.b16 %v2321, %v2317
    %v2366 = vpack.c.b16 %v2322, %v2318
    %v2367 = vpack.c.b16 %v2323, %v2319
    %v2368 = vpack.c.b16 %v2324, %v2320
    %v2369 = vpack.c.b16 %v2329, %v2325
    %v2370 = vpack.c.b16 %v2330, %v2326
    %v2371 = vpack.c.b16 %v2331, %v2327
    %v2372 = vpack.c.b16 %v2332, %v2328
    %v2373 = vpack.c.b16 %v2337, %v2333
    %v2374 = vpack.c.b16 %v2338, %v2334
    %v2375 = vpack.c.b16 %v2339, %v2335
    %v2376 = vpack.c.b16 %v2340, %v2336
    %v2377 = vpack.c.b16 %v2345, %v2341
    %v2378 = vpack.c.b16 %v2346, %v2342
    %v2379 = vpack.c.b16 %v2347, %v2343
    %v2380 = vpack.c.b16 %v2348, %v2344
    %2413 = vmatpush.bf16.msra.mxu0 %v2377
    %2414 = vmatpush.bf16.msra.mxu0 %v2373
    %2415 = vmatpush.bf16.msra.mxu0 %v2369
    %2416 = vmatpush.bf16.msra.mxu0 %v2365
    %2417 = vmatpush.bf16.msra.mxu0 %v2361
    %2418 = vmatpush.bf16.msra.mxu0 %v2357
    %2419 = vmatpush.bf16.msra.mxu0 %v2353
    %2420 = vmatpush.bf16.msra.mxu0 %v2349
    %2421 = vmatmul.bf16.gmra.mxu0 %v2220
    %v2422 = vpop.f32.mrf.mxu0
    %v2423 = vadd.f32 0.0, %v2422
    %v2424 = vpop.f32.mrf.mxu0
    %2425 = vdwg.mxu0
    %2426 = vmatpush.bf16.msra.mxu0 %v2378
    %2427 = vmatpush.bf16.msra.mxu0 %v2374
    %2428 = vmatpush.bf16.msra.mxu0 %v2370
    %2429 = vmatpush.bf16.msra.mxu0 %v2366
    %2430 = vmatpush.bf16.msra.mxu0 %v2362
    %2431 = vmatpush.bf16.msra.mxu0 %v2358
    %2432 = vmatpush.bf16.msra.mxu0 %v2354
    %2433 = vmatpush.bf16.msra.mxu0 %v2350
    %2434 = vmatmul.bf16.gmra.mxu0 %v2220
    %v2435 = vpop.f32.mrf.mxu0
    %v2436 = vadd.f32 0.0, %v2435
    %v2437 = vpop.f32.mrf.mxu0
    %2438 = vdwg.mxu0
    %2439 = vmatpush.bf16.msra.mxu0 %v2379
    %2440 = vmatpush.bf16.msra.mxu0 %v2375
    %2441 = vmatpush.bf16.msra.mxu0 %v2371
    %2442 = vmatpush.bf16.msra.mxu0 %v2367
    %2443 = vmatpush.bf16.msra.mxu0 %v2363
    %2444 = vmatpush.bf16.msra.mxu0 %v2359
    %2445 = vmatpush.bf16.msra.mxu0 %v2355
    %2446 = vmatpush.bf16.msra.mxu0 %v2351
    %2447 = vmatmul.bf16.gmra.mxu0 %v2220
    %v2448 = vpop.f32.mrf.mxu0
    %v2449 = vadd.f32 0.0, %v2448
    %v2450 = vpop.f32.mrf.mxu0
    %2451 = vdwg.mxu0
    %2452 = vmatpush.bf16.msra.mxu0 %v2380
    %2453 = vmatpush.bf16.msra.mxu0 %v2376
    %2454 = vmatpush.bf16.msra.mxu0 %v2372
    %2455 = vmatpush.bf16.msra.mxu0 %v2368
    %2456 = vmatpush.bf16.msra.mxu0 %v2364
    %2457 = vmatpush.bf16.msra.mxu0 %v2360
    %2458 = vmatpush.bf16.msra.mxu0 %v2356
    %2459 = vmatpush.bf16.msra.mxu0 %v2352
    %2460 = vmatmul.bf16.gmra.mxu0 %v2220
    %v2461 = vpop.f32.mrf.mxu0
    %v2462 = vadd.f32 0.0, %v2461
    %v2463 = vpop.f32.mrf.mxu0
    %2464 = vdwg.mxu0
    %v2465 = vadd.f32 %v2216, %v2423
    %v2466 = vadd.f32 %v2217, %v2436
    %v2467 = vadd.f32 %v2218, %v2449
    %v2468 = vadd.f32 %v2219, %v2462
    %v2469 = vmul.f32 %v2465, 0.5
    %v2470 = vtanh.pop %v2469
    %v2471 = vmul.f32 %v2470, 0.5
    %v2472 = vadd.f32 %v2471, 0.5
    %v2473 = vmul.f32 %v2466, 0.5
    %v2474 = vtanh.pop %v2473
    %v2475 = vmul.f32 %v2474, 0.5
    %v2476 = vadd.f32 %v2475, 0.5
    %v2477 = vtanh.pop %v2467
    %v2478 = vmul.f32 %v2468, 0.5
    %v2479 = vtanh.pop %v2478
    %v2480 = vmul.f32 %v2479, 0.5
    %v2481 = vadd.f32 %v2480, 0.5
    %v2482 = vmul.f32 %v2476, %v2206
    %v2483 = vmul.f32 %v2472, %v2477
    %v2484 = vadd.f32 %v2482, %v2483
    %v2485 = vtanh.pop %v2484
    %v2486 = vmul.f32 %v2481, %v2485
    %s2487 = scalar_lea.vmem [#allocation8], 56
    %2488 = vst [vmem:[%s2487] sm:$0xff] %v2486
    %2489 = vst [vmem:[#allocation2] sm:$0xff] %v2486
    %2490 = vst [vmem:[#allocation3] sm:$0xff] %v2484
    // Predicated region
    $region26: #{tpu_custom_call.1} parent=1 // pred_check
      _
    $region27: #{tpu_custom_call.1} parent=1 // pred_check_branch
      %2492 = sbr.rel (0) target = $region29
    $region28: #{tpu_custom_call.1} parent=1 // pred_region
      %2494 = vsyncadd [#allocation7], 0
      %s2495 = sshll.u32 [#allocation8], 4
      %s2496 = int_to_ptr.vmem [resolvable:$true] %s2495
      %s2497 = sshll.u32 %s4, 4
      %s2498 = int_to_ptr.hbm [resolvable:$true] %s2497
      %2503 = dma.vmem_to_hbm [thread:$0]  %s2496, 1024, %s2498, [#allocation7], 128, 128, 8
    $region29: #{tpu_custom_call.1} parent=1 // pred_fallthru
      _
    // Predicated region
    $region30: #{tpu_custom_call.1} parent=1 // pred_check
      _
    $region31: #{tpu_custom_call.1} parent=1 // pred_check_branch
      %2505 = sbr.rel (0) target = $region33
    $region32: #{tpu_custom_call.1} parent=1 // pred_region
      %2507 = dma.done [#allocation7], 1024
    $region33: #{tpu_custom_call.1} parent=1 // pred_fallthru
      _
    %2508 = vsyncpa [#allocation6], 1
    %2509 = vsyncpa [#allocation7], 1

// kernel: tpu_custom_call.1
$region0: #{tpu_custom_call.1}
  #allocation0 [shape = 'u32[]', space=smem, size = 0x4, offset = 0x4, fixed_abs, tag = 'smem constant byte address 0x4 - core index']
  #allocation1 [shape = 'u32[72,128]{1,0:T(1,128)}', space=vmem, size = 0x9000, scoped, tag = 'internal scratch']
  #allocation2 [shape = 'f32[8,128]{1,0:T(8,128)}', space=vmem, size = 0x1000, scoped, tag = 'scratch operand']
  #allocation3 [shape = 'f32[8,128]{1,0:T(8,128)}', space=vmem, size = 0x1000, scoped, tag = 'scratch operand']
  #allocation4 [shape = 'bf16[64,512]{1,0:T(8,128)(2,1)}', space=vmem, size = 0x10000, scoped, tag = 'scratch operand']
  %s0 = inlined_call_operand.vmem [shape: bf16[64,16], index: 0, kind: input, shape index: {}]
  %s1 = inlined_call_operand.vmem [shape: bf16[16,512], index: 1, kind: input, shape index: {}]
  %s2 = inlined_call_operand.hbm [shape: bf16[128,512], index: 2, kind: input, shape index: {}]
  %s3 = inlined_call_operand.vmem [shape: f32[1,512], index: 3, kind: input, shape index: {}]
  %s4 = inlined_call_operand.hbm [shape: f32[64,128], index: 4, kind: output, shape index: {}]
  %s5 = sld [smem:[#allocation0]]
  $region34: #{tpu_custom_call.1} parent=0
    _
  %s7 = ssub.s32 1, %s5
  %s8 = scalar_select 0, %s7, %s5
  $region1: #{tpu_custom_call.1} parent=0
    #allocation5 [shape = 'u8[131072]{0}', space=vmem, size = 0x20000, scoped, tag = 'input window, operand 2, single buffered']
    #allocation6 [shape = 's32[1]{0}', space=sflag, size = 0x4, scoped, tag = 'scoped memory for tpu_custom_call.1']
    #allocation7 [shape = 's32[1]{0}', space=sflag, size = 0x4, scoped, tag = 'scoped memory for tpu_custom_call.1']
    #allocation8 [shape = 'u8[32768]{0}', space=vmem, size = 0x8000, scoped, tag = 'output window, operand 0, single buffered']
    %9 = vsyncpa [#allocation6], 0
    %10 = vsyncpa [#allocation7], 0
    // Predicated region
    $region2: #{tpu_custom_call.1} parent=1 // pred_check
      _
    $region3: #{tpu_custom_call.1} parent=1 // pred_check_branch
      %12 = sbr.rel (0) target = $region5
    $region4: #{tpu_custom_call.1} parent=1 // pred_region
      _
    $region5: #{tpu_custom_call.1} parent=1 // pred_fallthru
      _
    // Predicated region
    $region6: #{tpu_custom_call.1} parent=1 // pred_check
      _
    $region7: #{tpu_custom_call.1} parent=1 // pred_check_branch
      %14 = sbr.rel (0) target = $region9
    $region8: #{tpu_custom_call.1} parent=1 // pred_region
      _
    $region9: #{tpu_custom_call.1} parent=1 // pred_fallthru
      _
    // Predicated region
    $region10: #{tpu_custom_call.1} parent=1 // pred_check
      _
    $region11: #{tpu_custom_call.1} parent=1 // pred_check_branch
      %16 = sbr.rel (0) target = $region13
    $region12: #{tpu_custom_call.1} parent=1 // pred_region
      %18 = vsyncadd [#allocation6], 0
      %s19 = sshll.u32 %s2, 4
      %s20 = int_to_ptr.hbm [resolvable:$true] %s19
      %s21 = sshll.u32 [#allocation5], 4
      %s22 = int_to_ptr.vmem [resolvable:$true] %s21
      %27 = dma.hbm_to_vmem [thread:$0]  %s20, 4096, %s22, [#allocation6], 256, 256, 16
    $region13: #{tpu_custom_call.1} parent=1 // pred_fallthru
      _
    // Predicated region
    $region14: #{tpu_custom_call.1} parent=1 // pred_check
      _
    $region15: #{tpu_custom_call.1} parent=1 // pred_check_branch
      %29 = sbr.rel (0) target = $region17
    $region16: #{tpu_custom_call.1} parent=1 // pred_region
      _
    $region17: #{tpu_custom_call.1} parent=1 // pred_fallthru
      _
    // Predicated region
    $region18: #{tpu_custom_call.1} parent=1 // pred_check
      _
    $region19: #{tpu_custom_call.1} parent=1 // pred_check_branch
      %31 = sbr.rel (0) target = $region21
    $region20: #{tpu_custom_call.1} parent=1 // pred_region
      %33 = dma.done [#allocation6], 4096
    $region21: #{tpu_custom_call.1} parent=1 // pred_fallthru
      _
    %p35 = scmp.eq.s32.totalorder 0, 0
    // Predicated region
    $region22: #{tpu_custom_call.1} parent=1 // pred_check
      %p36 = pneg %p35
    $region23: #{tpu_custom_call.1} parent=1 // pred_check_branch
      %38 = sbr.rel (%p36) target = $region25
    $region24: #{tpu_custom_call.1} parent=1 // pred_region
      %39 = vst [vmem:[#allocation2] sm:$0xff] 0.0
      %40 = vst [vmem:[#allocation3] sm:$0xff] 0.0
    $region25: #{tpu_custom_call.1} parent=1 // pred_fallthru
      _
    %v41 = vld [vmem:[%s0] sm:$0xf]
    %v42 = vld [vmem:[%s0 + $0x4] sm:$0xf]
    %v43 = vld [vmem:[%s0 + $0x8] sm:$0xf]
    %v44 = vld [vmem:[%s0 + $0xc] sm:$0xf]
    %v45 = vld [vmem:[%s0 + $0x10] sm:$0xf]
    %v46 = vld [vmem:[%s0 + $0x14] sm:$0xf]
    %v47 = vld [vmem:[%s0 + $0x18] sm:$0xf]
    %v48 = vld [vmem:[%s0 + $0x1c] sm:$0xf]
    %v49 = vld [vmem:[%s1] sm:$0xff]
    %v50 = vld [vmem:[%s1 + $0x8] sm:$0xff]
    %v51 = vld [vmem:[%s1 + $0x10] sm:$0xff]
    %v52 = vld [vmem:[%s1 + $0x18] sm:$0xff]
    %v53 = vld [vmem:[%s3] sm:$0xf]
    %v55 = vperm.slane %v53, 0
    %v56 = vperm.slane %v53, 1
    %v57 = vperm.slane %v53, 2
    %v58 = vperm.slane %v53, 3
    %v71 = vunpack.c.l.b16 %v41
    %v72 = vunpack.c.l.b16 %v42
    %v73 = vunpack.c.l.b16 %v43
    %v74 = vunpack.c.l.b16 %v44
    %v75 = vunpack.c.l.b16 %v45
    %v76 = vunpack.c.l.b16 %v46
    %v77 = vunpack.c.l.b16 %v47
    %v78 = vunpack.c.l.b16 %v48
    %v79 = vpack.c.b16 %v72, %v71
    %v80 = vpack.c.b16 %v74, %v73
    %v81 = vpack.c.b16 %v76, %v75
    %v82 = vpack.c.b16 %v78, %v77
    %v87 = vunpack.c.l.b16 %v49
    %v88 = vunpack.c.h.b16 %v49
    %v89 = vunpack.c.l.b16 %v50
    %v90 = vunpack.c.h.b16 %v50
    %v91 = vunpack.c.l.b16 %v51
    %v92 = vunpack.c.h.b16 %v51
    %v93 = vunpack.c.l.b16 %v52
    %v94 = vunpack.c.h.b16 %v52
    %v95 = vpack.c.b16 %v91, %v87
    %v96 = vpack.c.b16 %v92, %v88
    %v97 = vpack.c.b16 %v93, %v89
    %v98 = vpack.c.b16 %v94, %v90
    %vm103 = vcmask 130048
    %v105 = vsel %vm103, %v79, 0
    %v108 = vsel %vm103, %v80, 0
    %v111 = vsel %vm103, %v81, 0
    %v114 = vsel %vm103, %v82, 0
    %116 = vmatpush.bf16.msra.mxu0 0
    %117 = vmatpush.bf16.msra.mxu0 0
    %118 = vmatpush.bf16.msra.mxu0 0
    %119 = vmatpush.bf16.msra.mxu0 0
    %120 = vmatpush.bf16.msra.mxu0 0
    %121 = vmatpush.bf16.msra.mxu0 0
    %122 = vmatpush.bf16.msra.mxu0 0
    %123 = vmatpush.bf16.msra.mxu0 %v95
    %124 = vmatmul.bf16.gmra.mxu0 %v105
    %v125 = vpop.f32.mrf.mxu0
    %v126 = vadd.f32 %v55, %v125
    %v127 = vpop.f32.mrf.mxu0
    %v128 = vadd.f32 %v55, %v127
    %129 = vmatmul.bf16.gmra.mxu0 %v108
    %v130 = vpop.f32.mrf.mxu0
    %v131 = vadd.f32 %v55, %v130
    %v132 = vpop.f32.mrf.mxu0
    %v133 = vadd.f32 %v55, %v132
    %134 = vmatmul.bf16.gmra.mxu0 %v111
    %v135 = vpop.f32.mrf.mxu0
    %v136 = vadd.f32 %v55, %v135
    %v137 = vpop.f32.mrf.mxu0
    %v138 = vadd.f32 %v55, %v137
    %139 = vmatmul.bf16.gmra.mxu0 %v114
    %v140 = vpop.f32.mrf.mxu0
    %v141 = vadd.f32 %v55, %v140
    %v142 = vpop.f32.mrf.mxu0
    %v143 = vadd.f32 %v55, %v142
    %144 = vdwg.mxu0
    %145 = vmatpush.bf16.msra.mxu0 0
    %146 = vmatpush.bf16.msra.mxu0 0
    %147 = vmatpush.bf16.msra.mxu0 0
    %148 = vmatpush.bf16.msra.mxu0 0
    %149 = vmatpush.bf16.msra.mxu0 0
    %150 = vmatpush.bf16.msra.mxu0 0
    %151 = vmatpush.bf16.msra.mxu0 0
    %152 = vmatpush.bf16.msra.mxu0 %v96
    %153 = vmatmul.bf16.gmra.mxu0 %v105
    %v154 = vpop.f32.mrf.mxu0
    %v155 = vadd.f32 %v56, %v154
    %v156 = vpop.f32.mrf.mxu0
    %v157 = vadd.f32 %v56, %v156
    %158 = vmatmul.bf16.gmra.mxu0 %v108
    %v159 = vpop.f32.mrf.mxu0
    %v160 = vadd.f32 %v56, %v159
    %v161 = vpop.f32.mrf.mxu0
    %v162 = vadd.f32 %v56, %v161
    %163 = vmatmul.bf16.gmra.mxu0 %v111
    %v164 = vpop.f32.mrf.mxu0
    %v165 = vadd.f32 %v56, %v164
    %v166 = vpop.f32.mrf.mxu0
    %v167 = vadd.f32 %v56, %v166
    %168 = vmatmul.bf16.gmra.mxu0 %v114
    %v169 = vpop.f32.mrf.mxu0
    %v170 = vadd.f32 %v56, %v169
    %v171 = vpop.f32.mrf.mxu0
    %v172 = vadd.f32 %v56, %v171
    %173 = vdwg.mxu0
    %174 = vmatpush.bf16.msra.mxu0 0
    %175 = vmatpush.bf16.msra.mxu0 0
    %176 = vmatpush.bf16.msra.mxu0 0
    %177 = vmatpush.bf16.msra.mxu0 0
    %178 = vmatpush.bf16.msra.mxu0 0
    %179 = vmatpush.bf16.msra.mxu0 0
    %180 = vmatpush.bf16.msra.mxu0 0
    %181 = vmatpush.bf16.msra.mxu0 %v97
    %182 = vmatmul.bf16.gmra.mxu0 %v105
    %v183 = vpop.f32.mrf.mxu0
    %v184 = vadd.f32 %v57, %v183
    %v185 = vpop.f32.mrf.mxu0
    %v186 = vadd.f32 %v57, %v185
    %187 = vmatmul.bf16.gmra.mxu0 %v108
    %v188 = vpop.f32.mrf.mxu0
    %v189 = vadd.f32 %v57, %v188
    %v190 = vpop.f32.mrf.mxu0
    %v191 = vadd.f32 %v57, %v190
    %192 = vmatmul.bf16.gmra.mxu0 %v111
    %v193 = vpop.f32.mrf.mxu0
    %v194 = vadd.f32 %v57, %v193
    %v195 = vpop.f32.mrf.mxu0
    %v196 = vadd.f32 %v57, %v195
    %197 = vmatmul.bf16.gmra.mxu0 %v114
    %v198 = vpop.f32.mrf.mxu0
    %v199 = vadd.f32 %v57, %v198
    %v200 = vpop.f32.mrf.mxu0
    %v201 = vadd.f32 %v57, %v200
    %202 = vdwg.mxu0
    %203 = vmatpush.bf16.msra.mxu0 0
    %204 = vmatpush.bf16.msra.mxu0 0
    %205 = vmatpush.bf16.msra.mxu0 0
    %206 = vmatpush.bf16.msra.mxu0 0
    %207 = vmatpush.bf16.msra.mxu0 0
    %208 = vmatpush.bf16.msra.mxu0 0
    %209 = vmatpush.bf16.msra.mxu0 0
    %210 = vmatpush.bf16.msra.mxu0 %v98
    %211 = vmatmul.bf16.gmra.mxu0 %v105
    %v212 = vpop.f32.mrf.mxu0
    %v213 = vadd.f32 %v58, %v212
    %v214 = vpop.f32.mrf.mxu0
    %v215 = vadd.f32 %v58, %v214
    %216 = vmatmul.bf16.gmra.mxu0 %v108
    %v217 = vpop.f32.mrf.mxu0
    %v218 = vadd.f32 %v58, %v217
    %v219 = vpop.f32.mrf.mxu0
    %v220 = vadd.f32 %v58, %v219
    %221 = vmatmul.bf16.gmra.mxu0 %v111
    %v222 = vpop.f32.mrf.mxu0
    %v223 = vadd.f32 %v58, %v222
    %v224 = vpop.f32.mrf.mxu0
    %v225 = vadd.f32 %v58, %v224
    %226 = vmatmul.bf16.gmra.mxu0 %v114
    %v227 = vpop.f32.mrf.mxu0
    %v228 = vadd.f32 %v58, %v227
    %v229 = vpop.f32.mrf.mxu0
    %v230 = vadd.f32 %v58, %v229
    %231 = vdwg.mxu0
    %v232 = vpack.c.bf16 %v155, %v126
    %v233 = vpack.c.bf16 %v213, %v184
    %v234 = vpack.c.bf16 %v157, %v128
    %v235 = vpack.c.bf16 %v215, %v186
    %v236 = vpack.c.bf16 %v160, %v131
    %v237 = vpack.c.bf16 %v218, %v189
    %v238 = vpack.c.bf16 %v162, %v133
    %v239 = vpack.c.bf16 %v220, %v191
    %v240 = vpack.c.bf16 %v165, %v136
    %v241 = vpack.c.bf16 %v223, %v194
    %v242 = vpack.c.bf16 %v167, %v138
    %v243 = vpack.c.bf16 %v225, %v196
    %v244 = vpack.c.bf16 %v170, %v141
    %v245 = vpack.c.bf16 %v228, %v199
    %v246 = vpack.c.bf16 %v172, %v143
    %v247 = vpack.c.bf16 %v230, %v201
    %248 = vst [vmem:[#allocation4] sm:$0xff] %v232
    %249 = vst [vmem:[#allocation4 + $0x8] sm:$0xff] %v233
    %250 = vst [vmem:[#allocation4 + $0x10] sm:$0xff] %v234
    %251 = vst [vmem:[#allocation4 + $0x18] sm:$0xff] %v235
    %252 = vst [vmem:[#allocation4 + $0x20] sm:$0xff] %v236
    %253 = vst [vmem:[#allocation4 + $0x28] sm:$0xff] %v237
    %254 = vst [vmem:[#allocation4 + $0x30] sm:$0xff] %v238
    %255 = vst [vmem:[#allocation4 + $0x38] sm:$0xff] %v239
    %256 = vst [vmem:[#allocation4 + $0x40] sm:$0xff] %v240
    %257 = vst [vmem:[#allocation4 + $0x48] sm:$0xff] %v241
    %258 = vst [vmem:[#allocation4 + $0x50] sm:$0xff] %v242
    %259 = vst [vmem:[#allocation4 + $0x58] sm:$0xff] %v243
    %260 = vst [vmem:[#allocation4 + $0x60] sm:$0xff] %v244
    %261 = vst [vmem:[#allocation4 + $0x68] sm:$0xff] %v245
    %262 = vst [vmem:[#allocation4 + $0x70] sm:$0xff] %v246
    %263 = vst [vmem:[#allocation4 + $0x78] sm:$0xff] %v247
    %v264 = vld [vmem:[#allocation2] sm:$0xff]
    %v265 = vld [vmem:[#allocation3] sm:$0xff]
    %s266 = smul.u32 0, 4
    %s267 = smul.addr %s266, 4
    %s268 = scalar_lea.vmem [#allocation4], %s267
    %v269 = vld [vmem:[%s268] sm:$0xff]
    %v270 = vld [vmem:[%s268 + $0x8] sm:$0xff]
    %v271 = vunpack.c.l.bf16 %v269
    %v272 = vunpack.c.h.bf16 %v269
    %v273 = vunpack.c.l.bf16 %v270
    %v274 = vunpack.c.h.bf16 %v270
    %v275 = vpack.c.bf16 %v264, %v264
    %v276 = vld [vmem:[#allocation5] sm:$0xff]
    %v277 = vld [vmem:[#allocation5 + $0x8] sm:$0xff]
    %v278 = vld [vmem:[#allocation5 + $0x10] sm:$0xff]
    %v279 = vld [vmem:[#allocation5 + $0x18] sm:$0xff]
    %v280 = vld [vmem:[#allocation5 + $0x20] sm:$0xff]
    %v281 = vld [vmem:[#allocation5 + $0x28] sm:$0xff]
    %v282 = vld [vmem:[#allocation5 + $0x30] sm:$0xff]
    %v283 = vld [vmem:[#allocation5 + $0x38] sm:$0xff]
    %v284 = vld [vmem:[#allocation5 + $0x40] sm:$0xff]
    %v285 = vld [vmem:[#allocation5 + $0x48] sm:$0xff]
    %v286 = vld [vmem:[#allocation5 + $0x50] sm:$0xff]
    %v287 = vld [vmem:[#allocation5 + $0x58] sm:$0xff]
    %v288 = vld [vmem:[#allocation5 + $0x60] sm:$0xff]
    %v289 = vld [vmem:[#allocation5 + $0x68] sm:$0xff]
    %v290 = vld [vmem:[#allocation5 + $0x70] sm:$0xff]
    %v291 = vld [vmem:[#allocation5 + $0x78] sm:$0xff]
    %v292 = vld [vmem:[#allocation5 + $0x80] sm:$0xff]
    %v293 = vld [vmem:[#allocation5 + $0x88] sm:$0xff]
    %v294 = vld [vmem:[#allocation5 + $0x90] sm:$0xff]
    %v295 = vld [vmem:[#allocation5 + $0x98] sm:$0xff]
    %v296 = vld [vmem:[#allocation5 + $0xa0] sm:$0xff]
    %v297 = vld [vmem:[#allocation5 + $0xa8] sm:$0xff]
    %v298 = vld [vmem:[#allocation5 + $0xb0] sm:$0xff]
    %v299 = vld [vmem:[#allocation5 + $0xb8] sm:$0xff]
    %v300 = vld [vmem:[#allocation5 + $0xc0] sm:$0xff]
    %v301 = vld [vmem:[#allocation5 + $0xc8] sm:$0xff]
    %v302 = vld [vmem:[#allocation5 + $0xd0] sm:$0xff]
    %v303 = vld [vmem:[#allocation5 + $0xd8] sm:$0xff]
    %v304 = vld [vmem:[#allocation5 + $0xe0] sm:$0xff]
    %v305 = vld [vmem:[#allocation5 + $0xe8] sm:$0xff]
    %v306 = vld [vmem:[#allocation5 + $0xf0] sm:$0xff]
    %v307 = vld [vmem:[#allocation5 + $0xf8] sm:$0xff]
    %v340 = vunpack.c.l.b16 %v276
    %v341 = vunpack.c.h.b16 %v276
    %v342 = vunpack.c.l.b16 %v277
    %v343 = vunpack.c.h.b16 %v277
    %v344 = vunpack.c.l.b16 %v278
    %v345 = vunpack.c.h.b16 %v278
    %v346 = vunpack.c.l.b16 %v279
    %v347 = vunpack.c.h.b16 %v279
    %v348 = vunpack.c.l.b16 %v280
    %v349 = vunpack.c.h.b16 %v280
    %v350 = vunpack.c.l.b16 %v281
    %v351 = vunpack.c.h.b16 %v281
    %v352 = vunpack.c.l.b16 %v282
    %v353 = vunpack.c.h.b16 %v282
    %v354 = vunpack.c.l.b16 %v283
    %v355 = vunpack.c.h.b16 %v283
    %v356 = vunpack.c.l.b16 %v284
    %v357 = vunpack.c.h.b16 %v284
    %v358 = vunpack.c.l.b16 %v285
    %v359 = vunpack.c.h.b16 %v285
    %v360 = vunpack.c.l.b16 %v286
    %v361 = vunpack.c.h.b16 %v286
    %v362 = vunpack.c.l.b16 %v287
    %v363 = vunpack.c.h.b16 %v287
    %v364 = vunpack.c.l.b16 %v288
    %v365 = vunpack.c.h.b16 %v288
    %v366 = vunpack.c.l.b16 %v289
    %v367 = vunpack.c.h.b16 %v289
    %v368 = vunpack.c.l.b16 %v290
    %v369 = vunpack.c.h.b16 %v290
    %v370 = vunpack.c.l.b16 %v291
    %v371 = vunpack.c.h.b16 %v291
    %v372 = vunpack.c.l.b16 %v292
    %v373 = vunpack.c.h.b16 %v292
    %v374 = vunpack.c.l.b16 %v293
    %v375 = vunpack.c.h.b16 %v293
    %v376 = vunpack.c.l.b16 %v294
    %v377 = vunpack.c.h.b16 %v294
    %v378 = vunpack.c.l.b16 %v295
    %v379 = vunpack.c.h.b16 %v295
    %v380 = vunpack.c.l.b16 %v296
    %v381 = vunpack.c.h.b16 %v296
    %v382 = vunpack.c.l.b16 %v297
    %v383 = vunpack.c.h.b16 %v297
    %v384 = vunpack.c.l.b16 %v298
    %v385 = vunpack.c.h.b16 %v298
    %v386 = vunpack.c.l.b16 %v299
    %v387 = vunpack.c.h.b16 %v299
    %v388 = vunpack.c.l.b16 %v300
    %v389 = vunpack.c.h.b16 %v300
    %v390 = vunpack.c.l.b16 %v301
    %v391 = vunpack.c.h.b16 %v301
    %v392 = vunpack.c.l.b16 %v302
    %v393 = vunpack.c.h.b16 %v302
    %v394 = vunpack.c.l.b16 %v303
    %v395 = vunpack.c.h.b16 %v303
    %v396 = vunpack.c.l.b16 %v304
    %v397 = vunpack.c.h.b16 %v304
    %v398 = vunpack.c.l.b16 %v305
    %v399 = vunpack.c.h.b16 %v305
    %v400 = vunpack.c.l.b16 %v306
    %v401 = vunpack.c.h.b16 %v306
    %v402 = vunpack.c.l.b16 %v307
    %v403 = vunpack.c.h.b16 %v307
    %v404 = vpack.c.b16 %v344, %v340
    %v405 = vpack.c.b16 %v345, %v341
    %v406 = vpack.c.b16 %v346, %v342
    %v407 = vpack.c.b16 %v347, %v343
    %v408 = vpack.c.b16 %v352, %v348
    %v409 = vpack.c.b16 %v353, %v349
    %v410 = vpack.c.b16 %v354, %v350
    %v411 = vpack.c.b16 %v355, %v351
    %v412 = vpack.c.b16 %v360, %v356
    %v413 = vpack.c.b16 %v361, %v357
    %v414 = vpack.c.b16 %v362, %v358
    %v415 = vpack.c.b16 %v363, %v359
    %v416 = vpack.c.b16 %v368, %v364
    %v417 = vpack.c.b16 %v369, %v365
    %v418 = vpack.c.b16 %v370, %v366
    %v419 = vpack.c.b16 %v371, %v367
    %v420 = vpack.c.b16 %v376, %v372
    %v421 = vpack.c.b16 %v377, %v373
    %v422 = vpack.c.b16 %v378, %v374
    %v423 = vpack.c.b16 %v379, %v375
    %v424 = vpack.c.b16 %v384, %v380
    %v425 = vpack.c.b16 %v385, %v381
    %v426 = vpack.c.b16 %v386, %v382
    %v427 = vpack.c.b16 %v387, %v383
    %v428 = vpack.c.b16 %v392, %v388
    %v429 = vpack.c.b16 %v393, %v389
    %v430 = vpack.c.b16 %v394, %v390
    %v431 = vpack.c.b16 %v395, %v391
    %v432 = vpack.c.b16 %v400, %v396
    %v433 = vpack.c.b16 %v401, %v397
    %v434 = vpack.c.b16 %v402, %v398
    %v435 = vpack.c.b16 %v403, %v399
    %468 = vmatpush.bf16.msra.mxu0 %v432
    %469 = vmatpush.bf16.msra.mxu0 %v428
    %470 = vmatpush.bf16.msra.mxu0 %v424
    %471 = vmatpush.bf16.msra.mxu0 %v420
    %472 = vmatpush.bf16.msra.mxu0 %v416
    %473 = vmatpush.bf16.msra.mxu0 %v412
    %474 = vmatpush.bf16.msra.mxu0 %v408
    %475 = vmatpush.bf16.msra.mxu0 %v404
    %476 = vmatmul.bf16.gmra.mxu0 %v275
    %v477 = vpop.f32.mrf.mxu0
    %v478 = vadd.f32 0.0, %v477
    %v479 = vpop.f32.mrf.mxu0
    %480 = vdwg.mxu0
    %481 = vmatpush.bf16.msra.mxu0 %v433
    %482 = vmatpush.bf16.msra.mxu0 %v429
    %483 = vmatpush.bf16.msra.mxu0 %v425
    %484 = vmatpush.bf16.msra.mxu0 %v421
    %485 = vmatpush.bf16.msra.mxu0 %v417
    %486 = vmatpush.bf16.msra.mxu0 %v413
    %487 = vmatpush.bf16.msra.mxu0 %v409
    %488 = vmatpush.bf16.msra.mxu0 %v405
    %489 = vmatmul.bf16.gmra.mxu0 %v275
    %v490 = vpop.f32.mrf.mxu0
    %v491 = vadd.f32 0.0, %v490
    %v492 = vpop.f32.mrf.mxu0
    %493 = vdwg.mxu0
    %494 = vmatpush.bf16.msra.mxu0 %v434
    %495 = vmatpush.bf16.msra.mxu0 %v430
    %496 = vmatpush.bf16.msra.mxu0 %v426
    %497 = vmatpush.bf16.msra.mxu0 %v422
    %498 = vmatpush.bf16.msra.mxu0 %v418
    %499 = vmatpush.bf16.msra.mxu0 %v414
    %500 = vmatpush.bf16.msra.mxu0 %v410
    %501 = vmatpush.bf16.msra.mxu0 %v406
    %502 = vmatmul.bf16.gmra.mxu0 %v275
    %v503 = vpop.f32.mrf.mxu0
    %v504 = vadd.f32 0.0, %v503
    %v505 = vpop.f32.mrf.mxu0
    %506 = vdwg.mxu0
    %507 = vmatpush.bf16.msra.mxu0 %v435
    %508 = vmatpush.bf16.msra.mxu0 %v431
    %509 = vmatpush.bf16.msra.mxu0 %v427
    %510 = vmatpush.bf16.msra.mxu0 %v423
    %511 = vmatpush.bf16.msra.mxu0 %v419
    %512 = vmatpush.bf16.msra.mxu0 %v415
    %513 = vmatpush.bf16.msra.mxu0 %v411
    %514 = vmatpush.bf16.msra.mxu0 %v407
    %515 = vmatmul.bf16.gmra.mxu0 %v275
    %v516 = vpop.f32.mrf.mxu0
    %v517 = vadd.f32 0.0, %v516
    %v518 = vpop.f32.mrf.mxu0
    %519 = vdwg.mxu0
    %v520 = vadd.f32 %v271, %v478
    %v521 = vadd.f32 %v272, %v491
    %v522 = vadd.f32 %v273, %v504
    %v523 = vadd.f32 %v274, %v517
    %v524 = vmul.f32 %v520, 0.5
    %v525 = vtanh.pop %v524
    %v526 = vmul.f32 %v525, 0.5
    %v527 = vadd.f32 %v526, 0.5
    %v528 = vmul.f32 %v521, 0.5
    %v529 = vtanh.pop %v528
    %v530 = vmul.f32 %v529, 0.5
    %v531 = vadd.f32 %v530, 0.5
    %v532 = vtanh.pop %v522
    %v533 = vmul.f32 %v523, 0.5
    %v534 = vtanh.pop %v533
    %v535 = vmul.f32 %v534, 0.5
    %v536 = vadd.f32 %v535, 0.5
    %v537 = vmul.f32 %v531, %v265
    %v538 = vmul.f32 %v527, %v532
    %v539 = vadd.f32 %v537, %v538
    %v540 = vtanh.pop %v539
    %v541 = vmul.f32 %v536, %v540
    %542 = vst [vmem:[#allocation8] sm:$0xff] %v541
    %s543 = smul.u32 1, 4
    %s544 = smul.addr %s543, 4
    %s545 = scalar_lea.vmem [#allocation4], %s544
    %v546 = vld [vmem:[%s545] sm:$0xff]
    %v547 = vld [vmem:[%s545 + $0x8] sm:$0xff]
    %v548 = vunpack.c.l.bf16 %v546
    %v549 = vunpack.c.h.bf16 %v546
    %v550 = vunpack.c.l.bf16 %v547
    %v551 = vunpack.c.h.bf16 %v547
    %v552 = vpack.c.bf16 %v541, %v541
    %v553 = vld [vmem:[#allocation5] sm:$0xff]
    %v554 = vld [vmem:[#allocation5 + $0x8] sm:$0xff]
    %v555 = vld [vmem:[#allocation5 + $0x10] sm:$0xff]
    %v556 = vld [vmem:[#allocation5 + $0x18] sm:$0xff]
    %v557 = vld [vmem:[#allocation5 + $0x20] sm:$0xff]
    %v558 = vld [vmem:[#allocation5 + $0x28] sm:$0xff]
    %v559 = vld [vmem:[#allocation5 + $0x30] sm:$0xff]
    %v560 = vld [vmem:[#allocation5 + $0x38] sm:$0xff]
    %v561 = vld [vmem:[#allocation5 + $0x40] sm:$0xff]
    %v562 = vld [vmem:[#allocation5 + $0x48] sm:$0xff]
    %v563 = vld [vmem:[#allocation5 + $0x50] sm:$0xff]
    %v564 = vld [vmem:[#allocation5 + $0x58] sm:$0xff]
    %v565 = vld [vmem:[#allocation5 + $0x60] sm:$0xff]
    %v566 = vld [vmem:[#allocation5 + $0x68] sm:$0xff]
    %v567 = vld [vmem:[#allocation5 + $0x70] sm:$0xff]
    %v568 = vld [vmem:[#allocation5 + $0x78] sm:$0xff]
    %v569 = vld [vmem:[#allocation5 + $0x80] sm:$0xff]
    %v570 = vld [vmem:[#allocation5 + $0x88] sm:$0xff]
    %v571 = vld [vmem:[#allocation5 + $0x90] sm:$0xff]
    %v572 = vld [vmem:[#allocation5 + $0x98] sm:$0xff]
    %v573 = vld [vmem:[#allocation5 + $0xa0] sm:$0xff]
    %v574 = vld [vmem:[#allocation5 + $0xa8] sm:$0xff]
    %v575 = vld [vmem:[#allocation5 + $0xb0] sm:$0xff]
    %v576 = vld [vmem:[#allocation5 + $0xb8] sm:$0xff]
    %v577 = vld [vmem:[#allocation5 + $0xc0] sm:$0xff]
    %v578 = vld [vmem:[#allocation5 + $0xc8] sm:$0xff]
    %v579 = vld [vmem:[#allocation5 + $0xd0] sm:$0xff]
    %v580 = vld [vmem:[#allocation5 + $0xd8] sm:$0xff]
    %v581 = vld [vmem:[#allocation5 + $0xe0] sm:$0xff]
    %v582 = vld [vmem:[#allocation5 + $0xe8] sm:$0xff]
    %v583 = vld [vmem:[#allocation5 + $0xf0] sm:$0xff]
    %v584 = vld [vmem:[#allocation5 + $0xf8] sm:$0xff]
    %v617 = vunpack.c.l.b16 %v553
    %v618 = vunpack.c.h.b16 %v553
    %v619 = vunpack.c.l.b16 %v554
    %v620 = vunpack.c.h.b16 %v554
    %v621 = vunpack.c.l.b16 %v555
    %v622 = vunpack.c.h.b16 %v555
    %v623 = vunpack.c.l.b16 %v556
    %v624 = vunpack.c.h.b16 %v556
    %v625 = vunpack.c.l.b16 %v557
    %v626 = vunpack.c.h.b16 %v557
    %v627 = vunpack.c.l.b16 %v558
    %v628 = vunpack.c.h.b16 %v558
    %v629 = vunpack.c.l.b16 %v559
    %v630 = vunpack.c.h.b16 %v559
    %v631 = vunpack.c.l.b16 %v560
    %v632 = vunpack.c.h.b16 %v560
    %v633 = vunpack.c.l.b16 %v561
    %v634 = vunpack.c.h.b16 %v561
    %v635 = vunpack.c.l.b16 %v562
    %v636 = vunpack.c.h.b16 %v562
    %v637 = vunpack.c.l.b16 %v563
    %v638 = vunpack.c.h.b16 %v563
    %v639 = vunpack.c.l.b16 %v564
    %v640 = vunpack.c.h.b16 %v564
    %v641 = vunpack.c.l.b16 %v565
    %v642 = vunpack.c.h.b16 %v565
    %v643 = vunpack.c.l.b16 %v566
    %v644 = vunpack.c.h.b16 %v566
    %v645 = vunpack.c.l.b16 %v567
    %v646 = vunpack.c.h.b16 %v567
    %v647 = vunpack.c.l.b16 %v568
    %v648 = vunpack.c.h.b16 %v568
    %v649 = vunpack.c.l.b16 %v569
    %v650 = vunpack.c.h.b16 %v569
    %v651 = vunpack.c.l.b16 %v570
    %v652 = vunpack.c.h.b16 %v570
    %v653 = vunpack.c.l.b16 %v571
    %v654 = vunpack.c.h.b16 %v571
    %v655 = vunpack.c.l.b16 %v572
    %v656 = vunpack.c.h.b16 %v572
    %v657 = vunpack.c.l.b16 %v573
    %v658 = vunpack.c.h.b16 %v573
    %v659 = vunpack.c.l.b16 %v574
    %v660 = vunpack.c.h.b16 %v574
    %v661 = vunpack.c.l.b16 %v575
    %v662 = vunpack.c.h.b16 %v575
    %v663 = vunpack.c.l.b16 %v576
    %v664 = vunpack.c.h.b16 %v576
    %v665 = vunpack.c.l.b16 %v577
    %v666 = vunpack.c.h.b16 %v577
    %v667 = vunpack.c.l.b16 %v578
    %v668 = vunpack.c.h.b16 %v578
    %v669 = vunpack.c.l.b16 %v579
    %v670 = vunpack.c.h.b16 %v579
    %v671 = vunpack.c.l.b16 %v580
    %v672 = vunpack.c.h.b16 %v580
    %v673 = vunpack.c.l.b16 %v581
    %v674 = vunpack.c.h.b16 %v581
    %v675 = vunpack.c.l.b16 %v582
    %v676 = vunpack.c.h.b16 %v582
    %v677 = vunpack.c.l.b16 %v583
    %v678 = vunpack.c.h.b16 %v583
    %v679 = vunpack.c.l.b16 %v584
    %v680 = vunpack.c.h.b16 %v584
    %v681 = vpack.c.b16 %v621, %v617
    %v682 = vpack.c.b16 %v622, %v618
    %v683 = vpack.c.b16 %v623, %v619
    %v684 = vpack.c.b16 %v624, %v620
    %v685 = vpack.c.b16 %v629, %v625
    %v686 = vpack.c.b16 %v630, %v626
    %v687 = vpack.c.b16 %v631, %v627
    %v688 = vpack.c.b16 %v632, %v628
    %v689 = vpack.c.b16 %v637, %v633
    %v690 = vpack.c.b16 %v638, %v634
    %v691 = vpack.c.b16 %v639, %v635
    %v692 = vpack.c.b16 %v640, %v636
    %v693 = vpack.c.b16 %v645, %v641
    %v694 = vpack.c.b16 %v646, %v642
    %v695 = vpack.c.b16 %v647, %v643
    %v696 = vpack.c.b16 %v648, %v644
    %v697 = vpack.c.b16 %v653, %v649
    %v698 = vpack.c.b16 %v654, %v650
    %v699 = vpack.c.b16 %v655, %v651
    %v700 = vpack.c.b16 %v656, %v652
    %v701 = vpack.c.b16 %v661, %v657
    %v702 = vpack.c.b16 %v662, %v658
    %v703 = vpack.c.b16 %v663, %v659
    %v704 = vpack.c.b16 %v664, %v660
    %v705 = vpack.c.b16 %v669, %v665
    %v706 = vpack.c.b16 %v670, %v666
    %v707 = vpack.c.b16 %v671, %v667
    %v708 = vpack.c.b16 %v672, %v668
    %v709 = vpack.c.b16 %v677, %v673
    %v710 = vpack.c.b16 %v678, %v674
    %v711 = vpack.c.b16 %v679, %v675
    %v712 = vpack.c.b16 %v680, %v676
    %745 = vmatpush.bf16.msra.mxu0 %v709
    %746 = vmatpush.bf16.msra.mxu0 %v705
    %747 = vmatpush.bf16.msra.mxu0 %v701
    %748 = vmatpush.bf16.msra.mxu0 %v697
    %749 = vmatpush.bf16.msra.mxu0 %v693
    %750 = vmatpush.bf16.msra.mxu0 %v689
    %751 = vmatpush.bf16.msra.mxu0 %v685
    %752 = vmatpush.bf16.msra.mxu0 %v681
    %753 = vmatmul.bf16.gmra.mxu0 %v552
    %v754 = vpop.f32.mrf.mxu0
    %v755 = vadd.f32 0.0, %v754
    %v756 = vpop.f32.mrf.mxu0
    %757 = vdwg.mxu0
    %758 = vmatpush.bf16.msra.mxu0 %v710
    %759 = vmatpush.bf16.msra.mxu0 %v706
    %760 = vmatpush.bf16.msra.mxu0 %v702
    %761 = vmatpush.bf16.msra.mxu0 %v698
    %762 = vmatpush.bf16.msra.mxu0 %v694
    %763 = vmatpush.bf16.msra.mxu0 %v690
    %764 = vmatpush.bf16.msra.mxu0 %v686
    %765 = vmatpush.bf16.msra.mxu0 %v682
    %766 = vmatmul.bf16.gmra.mxu0 %v552
    %v767 = vpop.f32.mrf.mxu0
    %v768 = vadd.f32 0.0, %v767
    %v769 = vpop.f32.mrf.mxu0
    %770 = vdwg.mxu0
    %771 = vmatpush.bf16.msra.mxu0 %v711
    %772 = vmatpush.bf16.msra.mxu0 %v707
    %773 = vmatpush.bf16.msra.mxu0 %v703
    %774 = vmatpush.bf16.msra.mxu0 %v699
    %775 = vmatpush.bf16.msra.mxu0 %v695
    %776 = vmatpush.bf16.msra.mxu0 %v691
    %777 = vmatpush.bf16.msra.mxu0 %v687
    %778 = vmatpush.bf16.msra.mxu0 %v683
    %779 = vmatmul.bf16.gmra.mxu0 %v552
    %v780 = vpop.f32.mrf.mxu0
    %v781 = vadd.f32 0.0, %v780
    %v782 = vpop.f32.mrf.mxu0
    %783 = vdwg.mxu0
    %784 = vmatpush.bf16.msra.mxu0 %v712
    %785 = vmatpush.bf16.msra.mxu0 %v708
    %786 = vmatpush.bf16.msra.mxu0 %v704
    %787 = vmatpush.bf16.msra.mxu0 %v700
    %788 = vmatpush.bf16.msra.mxu0 %v696
    %789 = vmatpush.bf16.msra.mxu0 %v692
    %790 = vmatpush.bf16.msra.mxu0 %v688
    %791 = vmatpush.bf16.msra.mxu0 %v684
    %792 = vmatmul.bf16.gmra.mxu0 %v552
    %v793 = vpop.f32.mrf.mxu0
    %v794 = vadd.f32 0.0, %v793
    %v795 = vpop.f32.mrf.mxu0
    %796 = vdwg.mxu0
    %v797 = vadd.f32 %v548, %v755
    %v798 = vadd.f32 %v549, %v768
    %v799 = vadd.f32 %v550, %v781
    %v800 = vadd.f32 %v551, %v794
    %v801 = vmul.f32 %v797, 0.5
    %v802 = vtanh.pop %v801
    %v803 = vmul.f32 %v802, 0.5
    %v804 = vadd.f32 %v803, 0.5
    %v805 = vmul.f32 %v798, 0.5
    %v806 = vtanh.pop %v805
    %v807 = vmul.f32 %v806, 0.5
    %v808 = vadd.f32 %v807, 0.5
    %v809 = vtanh.pop %v799
    %v810 = vmul.f32 %v800, 0.5
    %v811 = vtanh.pop %v810
    %v812 = vmul.f32 %v811, 0.5
    %v813 = vadd.f32 %v812, 0.5
    %v814 = vmul.f32 %v808, %v539
    %v815 = vmul.f32 %v804, %v809
    %v816 = vadd.f32 %v814, %v815
    %v817 = vtanh.pop %v816
    %v818 = vmul.f32 %v813, %v817
    %s819 = scalar_lea.vmem [#allocation8], 8
    %820 = vst [vmem:[%s819] sm:$0xff] %v818
    %s821 = smul.u32 2, 4
    %s822 = smul.addr %s821, 4
    %s823 = scalar_lea.vmem [#allocation4], %s822
    %v824 = vld [vmem:[%s823] sm:$0xff]
    %v825 = vld [vmem:[%s823 + $0x8] sm:$0xff]
    %v826 = vunpack.c.l.bf16 %v824
    %v827 = vunpack.c.h.bf16 %v824
    %v828 = vunpack.c.l.bf16 %v825
    %v829 = vunpack.c.h.bf16 %v825
    %v830 = vpack.c.bf16 %v818, %v818
    %v831 = vld [vmem:[#allocation5] sm:$0xff]
    %v832 = vld [vmem:[#allocation5 + $0x8] sm:$0xff]
    %v833 = vld [vmem:[#allocation5 + $0x10] sm:$0xff]
    %v834 = vld [vmem:[#allocation5 + $0x18] sm:$0xff]
    %v835 = vld [vmem:[#allocation5 + $0x20] sm:$0xff]
    %v836 = vld [vmem:[#allocation5 + $0x28] sm:$0xff]
    %v837 = vld [vmem:[#allocation5 + $0x30] sm:$0xff]
    %v838 = vld [vmem:[#allocation5 + $0x38] sm:$0xff]
    %v839 = vld [vmem:[#allocation5 + $0x40] sm:$0xff]
    %v840 = vld [vmem:[#allocation5 + $0x48] sm:$0xff]
    %v841 = vld [vmem:[#allocation5 + $0x50] sm:$0xff]
    %v842 = vld [vmem:[#allocation5 + $0x58] sm:$0xff]
    %v843 = vld [vmem:[#allocation5 + $0x60] sm:$0xff]
    %v844 = vld [vmem:[#allocation5 + $0x68] sm:$0xff]
    %v845 = vld [vmem:[#allocation5 + $0x70] sm:$0xff]
    %v846 = vld [vmem:[#allocation5 + $0x78] sm:$0xff]
    %v847 = vld [vmem:[#allocation5 + $0x80] sm:$0xff]
    %v848 = vld [vmem:[#allocation5 + $0x88] sm:$0xff]
    %v849 = vld [vmem:[#allocation5 + $0x90] sm:$0xff]
    %v850 = vld [vmem:[#allocation5 + $0x98] sm:$0xff]
    %v851 = vld [vmem:[#allocation5 + $0xa0] sm:$0xff]
    %v852 = vld [vmem:[#allocation5 + $0xa8] sm:$0xff]
    %v853 = vld [vmem:[#allocation5 + $0xb0] sm:$0xff]
    %v854 = vld [vmem:[#allocation5 + $0xb8] sm:$0xff]
    %v855 = vld [vmem:[#allocation5 + $0xc0] sm:$0xff]
    %v856 = vld [vmem:[#allocation5 + $0xc8] sm:$0xff]
    %v857 = vld [vmem:[#allocation5 + $0xd0] sm:$0xff]
    %v858 = vld [vmem:[#allocation5 + $0xd8] sm:$0xff]
    %v859 = vld [vmem:[#allocation5 + $0xe0] sm:$0xff]
    %v860 = vld [vmem:[#allocation5 + $0xe8] sm:$0xff]
    %v861 = vld [vmem:[#allocation5 + $0xf0] sm:$0xff]
    %v862 = vld [vmem:[#allocation5 + $0xf8] sm:$0xff]
    %v895 = vunpack.c.l.b16 %v831
    %v896 = vunpack.c.h.b16 %v831
    %v897 = vunpack.c.l.b16 %v832
    %v898 = vunpack.c.h.b16 %v832
    %v899 = vunpack.c.l.b16 %v833
    %v900 = vunpack.c.h.b16 %v833
    %v901 = vunpack.c.l.b16 %v834
    %v902 = vunpack.c.h.b16 %v834
    %v903 = vunpack.c.l.b16 %v835
    %v904 = vunpack.c.h.b16 %v835
    %v905 = vunpack.c.l.b16 %v836
    %v906 = vunpack.c.h.b16 %v836
    %v907 = vunpack.c.l.b16 %v837
    %v908 = vunpack.c.h.b16 %v837
    %v909 = vunpack.c.l.b16 %v838
    %v910 = vunpack.c.h.b16 %v838
    %v911 = vunpack.c.l.b16 %v839
    %v912 = vunpack.c.h.b16 %v839
    %v913 = vunpack.c.l.b16 %v840
    %v914 = vunpack.c.h.b16 %v840
    %v915 = vunpack.c.l.b16 %v841
    %v916 = vunpack.c.h.b16 %v841
    %v917 = vunpack.c.l.b16 %v842
    %v918 = vunpack.c.h.b16 %v842
    %v919 = vunpack.c.l.b16 %v843
    %v920 = vunpack.c.h.b16 %v843
    %v921 = vunpack.c.l.b16 %v844
    %v922 = vunpack.c.h.b16 %v844
    %v923 = vunpack.c.l.b16 %v845
    %v924 = vunpack.c.h.b16 %v845
    %v925 = vunpack.c.l.b16 %v846
    %v926 = vunpack.c.h.b16 %v846
    %v927 = vunpack.c.l.b16 %v847
    %v928 = vunpack.c.h.b16 %v847
    %v929 = vunpack.c.l.b16 %v848
    %v930 = vunpack.c.h.b16 %v848
    %v931 = vunpack.c.l.b16 %v849
    %v932 = vunpack.c.h.b16 %v849
    %v933 = vunpack.c.l.b16 %v850
    %v934 = vunpack.c.h.b16 %v850
    %v935 = vunpack.c.l.b16 %v851
    %v936 = vunpack.c.h.b16 %v851
    %v937 = vunpack.c.l.b16 %v852
    %v938 = vunpack.c.h.b16 %v852
    %v939 = vunpack.c.l.b16 %v853
    %v940 = vunpack.c.h.b16 %v853
    %v941 = vunpack.c.l.b16 %v854
    %v942 = vunpack.c.h.b16 %v854
    %v943 = vunpack.c.l.b16 %v855
    %v944 = vunpack.c.h.b16 %v855
    %v945 = vunpack.c.l.b16 %v856
    %v946 = vunpack.c.h.b16 %v856
    %v947 = vunpack.c.l.b16 %v857
    %v948 = vunpack.c.h.b16 %v857
    %v949 = vunpack.c.l.b16 %v858
    %v950 = vunpack.c.h.b16 %v858
    %v951 = vunpack.c.l.b16 %v859
    %v952 = vunpack.c.h.b16 %v859
    %v953 = vunpack.c.l.b16 %v860
    %v954 = vunpack.c.h.b16 %v860
    %v955 = vunpack.c.l.b16 %v861
    %v956 = vunpack.c.h.b16 %v861
    %v957 = vunpack.c.l.b16 %v862
    %v958 = vunpack.c.h.b16 %v862
    %v959 = vpack.c.b16 %v899, %v895
    %v960 = vpack.c.b16 %v900, %v896
    %v961 = vpack.c.b16 %v901, %v897
    %v962 = vpack.c.b16 %v902, %v898
    %v963 = vpack.c.b16 %v907, %v903
    %v964 = vpack.c.b16 %v908, %v904
    %v965 = vpack.c.b16 %v909, %v905
    %v966 = vpack.c.b16 %v910, %v906
    %v967 = vpack.c.b16 %v915, %v911
    %v968 = vpack.c.b16 %v916, %v912
    %v969 = vpack.c.b16 %v917, %v913
    %v970 = vpack.c.b16 %v918, %v914
    %v971 = vpack.c.b16 %v923, %v919
    %v972 = vpack.c.b16 %v924, %v920
    %v973 = vpack.c.b16 %v925, %v921
    %v974 = vpack.c.b16 %v926, %v922
    %v975 = vpack.c.b16 %v931, %v927
    %v976 = vpack.c.b16 %v932, %v928
    %v977 = vpack.c.b16 %v933, %v929
    %v978 = vpack.c.b16 %v934, %v930
    %v979 = vpack.c.b16 %v939, %v935
    %v980 = vpack.c.b16 %v940, %v936
    %v981 = vpack.c.b16 %v941, %v937
    %v982 = vpack.c.b16 %v942, %v938
    %v983 = vpack.c.b16 %v947, %v943
    %v984 = vpack.c.b16 %v948, %v944
    %v985 = vpack.c.b16 %v949, %v945
    %v986 = vpack.c.b16 %v950, %v946
    %v987 = vpack.c.b16 %v955, %v951
    %v988 = vpack.c.b16 %v956, %v952
    %v989 = vpack.c.b16 %v957, %v953
    %v990 = vpack.c.b16 %v958, %v954
    %1023 = vmatpush.bf16.msra.mxu0 %v987
    %1024 = vmatpush.bf16.msra.mxu0 %v983
    %1025 = vmatpush.bf16.msra.mxu0 %v979
    %1026 = vmatpush.bf16.msra.mxu0 %v975
    %1027 = vmatpush.bf16.msra.mxu0 %v971
    %1028 = vmatpush.bf16.msra.mxu0 %v967
    %1029 = vmatpush.bf16.msra.mxu0 %v963
    %1030 = vmatpush.bf16.msra.mxu0 %v959
    %1031 = vmatmul.bf16.gmra.mxu0 %v830
    %v1032 = vpop.f32.mrf.mxu0
    %v1033 = vadd.f32 0.0, %v1032
    %v1034 = vpop.f32.mrf.mxu0
    %1035 = vdwg.mxu0
    %1036 = vmatpush.bf16.msra.mxu0 %v988
    %1037 = vmatpush.bf16.msra.mxu0 %v984
    %1038 = vmatpush.bf16.msra.mxu0 %v980
    %1039 = vmatpush.bf16.msra.mxu0 %v976
    %1040 = vmatpush.bf16.msra.mxu0 %v972
    %1041 = vmatpush.bf16.msra.mxu0 %v968
    %1042 = vmatpush.bf16.msra.mxu0 %v964
    %1043 = vmatpush.bf16.msra.mxu0 %v960
    %1044 = vmatmul.bf16.gmra.mxu0 %v830
    %v1045 = vpop.f32.mrf.mxu0
    %v1046 = vadd.f32 0.0, %v1045
    %v1047 = vpop.f32.mrf.mxu0
    %1048 = vdwg.mxu0
    %1049 = vmatpush.bf16.msra.mxu0 %v989
    %1050 = vmatpush.bf16.msra.mxu0 %v985
    %1051 = vmatpush.bf16.msra.mxu0 %v981
    %1052 = vmatpush.bf16.msra.mxu0 %v977
    %1053 = vmatpush.bf16.msra.mxu0 %v973
    %1054 = vmatpush.bf16.msra.mxu0 %v969
    %1055 = vmatpush.bf16.msra.mxu0 %v965
    %1056 = vmatpush.bf16.msra.mxu0 %v961
    %1057 = vmatmul.bf16.gmra.mxu0 %v830
    %v1058 = vpop.f32.mrf.mxu0
    %v1059 = vadd.f32 0.0, %v1058
    %v1060 = vpop.f32.mrf.mxu0
    %1061 = vdwg.mxu0
    %1062 = vmatpush.bf16.msra.mxu0 %v990
    %1063 = vmatpush.bf16.msra.mxu0 %v986
    %1064 = vmatpush.bf16.msra.mxu0 %v982
    %1065 = vmatpush.bf16.msra.mxu0 %v978
    %1066 = vmatpush.bf16.msra.mxu0 %v974
    %1067 = vmatpush.bf16.msra.mxu0 %v970
    %1068 = vmatpush.bf16.msra.mxu0 %v966
    %1069 = vmatpush.bf16.msra.mxu0 %v962
    %1070 = vmatmul.bf16.gmra.mxu0 %v830
    %v1071 = vpop.f32.mrf.mxu0
    %v1072 = vadd.f32 0.0, %v1071
    %v1073 = vpop.f32.mrf.mxu0
    %1074 = vdwg.mxu0
    %v1075 = vadd.f32 %v826, %v1033
    %v1076 = vadd.f32 %v827, %v1046
    %v1077 = vadd.f32 %v828, %v1059
    %v1078 = vadd.f32 %v829, %v1072
    %v1079 = vmul.f32 %v1075, 0.5
    %v1080 = vtanh.pop %v1079
    %v1081 = vmul.f32 %v1080, 0.5
    %v1082 = vadd.f32 %v1081, 0.5
    %v1083 = vmul.f32 %v1076, 0.5
    %v1084 = vtanh.pop %v1083
    %v1085 = vmul.f32 %v1084, 0.5
    %v1086 = vadd.f32 %v1085, 0.5
    %v1087 = vtanh.pop %v1077
    %v1088 = vmul.f32 %v1078, 0.5
    %v1089 = vtanh.pop %v1088
    %v1090 = vmul.f32 %v1089, 0.5
    %v1091 = vadd.f32 %v1090, 0.5
    %v1092 = vmul.f32 %v1086, %v816
    %v1093 = vmul.f32 %v1082, %v1087
    %v1094 = vadd.f32 %v1092, %v1093
    %v1095 = vtanh.pop %v1094
    %v1096 = vmul.f32 %v1091, %v1095
    %s1097 = scalar_lea.vmem [#allocation8], 16
    %1098 = vst [vmem:[%s1097] sm:$0xff] %v1096
    %s1099 = smul.u32 3, 4
    %s1100 = smul.addr %s1099, 4
    %s1101 = scalar_lea.vmem [#allocation4], %s1100
    %v1102 = vld [vmem:[%s1101] sm:$0xff]
    %v1103 = vld [vmem:[%s1101 + $0x8] sm:$0xff]
    %v1104 = vunpack.c.l.bf16 %v1102
    %v1105 = vunpack.c.h.bf16 %v1102
    %v1106 = vunpack.c.l.bf16 %v1103
    %v1107 = vunpack.c.h.bf16 %v1103
    %v1108 = vpack.c.bf16 %v1096, %v1096
    %v1109 = vld [vmem:[#allocation5] sm:$0xff]
    %v1110 = vld [vmem:[#allocation5 + $0x8] sm:$0xff]
    %v1111 = vld [vmem:[#allocation5 + $0x10] sm:$0xff]
    %v1112 = vld [vmem:[#allocation5 + $0x18] sm:$0xff]
    %v1113 = vld [vmem:[#allocation5 + $0x20] sm:$0xff]
    %v1114 = vld [vmem:[#allocation5 + $0x28] sm:$0xff]
    %v1115 = vld [vmem:[#allocation5 + $0x30] sm:$0xff]
    %v1116 = vld [vmem:[#allocation5 + $0x38] sm:$0xff]
    %v1117 = vld [vmem:[#allocation5 + $0x40] sm:$0xff]
    %v1118 = vld [vmem:[#allocation5 + $0x48] sm:$0xff]
    %v1119 = vld [vmem:[#allocation5 + $0x50] sm:$0xff]
    %v1120 = vld [vmem:[#allocation5 + $0x58] sm:$0xff]
    %v1121 = vld [vmem:[#allocation5 + $0x60] sm:$0xff]
    %v1122 = vld [vmem:[#allocation5 + $0x68] sm:$0xff]
    %v1123 = vld [vmem:[#allocation5 + $0x70] sm:$0xff]
    %v1124 = vld [vmem:[#allocation5 + $0x78] sm:$0xff]
    %v1125 = vld [vmem:[#allocation5 + $0x80] sm:$0xff]
    %v1126 = vld [vmem:[#allocation5 + $0x88] sm:$0xff]
    %v1127 = vld [vmem:[#allocation5 + $0x90] sm:$0xff]
    %v1128 = vld [vmem:[#allocation5 + $0x98] sm:$0xff]
    %v1129 = vld [vmem:[#allocation5 + $0xa0] sm:$0xff]
    %v1130 = vld [vmem:[#allocation5 + $0xa8] sm:$0xff]
    %v1131 = vld [vmem:[#allocation5 + $0xb0] sm:$0xff]
    %v1132 = vld [vmem:[#allocation5 + $0xb8] sm:$0xff]
    %v1133 = vld [vmem:[#allocation5 + $0xc0] sm:$0xff]
    %v1134 = vld [vmem:[#allocation5 + $0xc8] sm:$0xff]
    %v1135 = vld [vmem:[#allocation5 + $0xd0] sm:$0xff]
    %v1136 = vld [vmem:[#allocation5 + $0xd8] sm:$0xff]
    %v1137 = vld [vmem:[#allocation5 + $0xe0] sm:$0xff]
    %v1138 = vld [vmem:[#allocation5 + $0xe8] sm:$0xff]
    %v1139 = vld [vmem:[#allocation5 + $0xf0] sm:$0xff]
    %v1140 = vld [vmem:[#allocation5 + $0xf8] sm:$0xff]
    %v1173 = vunpack.c.l.b16 %v1109
    %v1174 = vunpack.c.h.b16 %v1109
    %v1175 = vunpack.c.l.b16 %v1110
    %v1176 = vunpack.c.h.b16 %v1110
    %v1177 = vunpack.c.l.b16 %v1111
    %v1178 = vunpack.c.h.b16 %v1111
    %v1179 = vunpack.c.l.b16 %v1112
    %v1180 = vunpack.c.h.b16 %v1112
    %v1181 = vunpack.c.l.b16 %v1113
    %v1182 = vunpack.c.h.b16 %v1113
    %v1183 = vunpack.c.l.b16 %v1114
    %v1184 = vunpack.c.h.b16 %v1114
    %v1185 = vunpack.c.l.b16 %v1115
    %v1186 = vunpack.c.h.b16 %v1115
    %v1187 = vunpack.c.l.b16 %v1116
    %v1188 = vunpack.c.h.b16 %v1116
    %v1189 = vunpack.c.l.b16 %v1117
    %v1190 = vunpack.c.h.b16 %v1117
    %v1191 = vunpack.c.l.b16 %v1118
    %v1192 = vunpack.c.h.b16 %v1118
    %v1193 = vunpack.c.l.b16 %v1119
    %v1194 = vunpack.c.h.b16 %v1119
    %v1195 = vunpack.c.l.b16 %v1120
    %v1196 = vunpack.c.h.b16 %v1120
    %v1197 = vunpack.c.l.b16 %v1121
    %v1198 = vunpack.c.h.b16 %v1121
    %v1199 = vunpack.c.l.b16 %v1122
    %v1200 = vunpack.c.h.b16 %v1122
    %v1201 = vunpack.c.l.b16 %v1123
    %v1202 = vunpack.c.h.b16 %v1123
    %v1203 = vunpack.c.l.b16 %v1124
    %v1204 = vunpack.c.h.b16 %v1124
    %v1205 = vunpack.c.l.b16 %v1125
    %v1206 = vunpack.c.h.b16 %v1125
    %v1207 = vunpack.c.l.b16 %v1126
    %v1208 = vunpack.c.h.b16 %v1126
    %v1209 = vunpack.c.l.b16 %v1127
    %v1210 = vunpack.c.h.b16 %v1127
    %v1211 = vunpack.c.l.b16 %v1128
    %v1212 = vunpack.c.h.b16 %v1128
    %v1213 = vunpack.c.l.b16 %v1129
    %v1214 = vunpack.c.h.b16 %v1129
    %v1215 = vunpack.c.l.b16 %v1130
    %v1216 = vunpack.c.h.b16 %v1130
    %v1217 = vunpack.c.l.b16 %v1131
    %v1218 = vunpack.c.h.b16 %v1131
    %v1219 = vunpack.c.l.b16 %v1132
    %v1220 = vunpack.c.h.b16 %v1132
    %v1221 = vunpack.c.l.b16 %v1133
    %v1222 = vunpack.c.h.b16 %v1133
    %v1223 = vunpack.c.l.b16 %v1134
    %v1224 = vunpack.c.h.b16 %v1134
    %v1225 = vunpack.c.l.b16 %v1135
    %v1226 = vunpack.c.h.b16 %v1135
    %v1227 = vunpack.c.l.b16 %v1136
    %v1228 = vunpack.c.h.b16 %v1136
    %v1229 = vunpack.c.l.b16 %v1137
    %v1230 = vunpack.c.h.b16 %v1137
    %v1231 = vunpack.c.l.b16 %v1138
    %v1232 = vunpack.c.h.b16 %v1138
    %v1233 = vunpack.c.l.b16 %v1139
    %v1234 = vunpack.c.h.b16 %v1139
    %v1235 = vunpack.c.l.b16 %v1140
    %v1236 = vunpack.c.h.b16 %v1140
    %v1237 = vpack.c.b16 %v1177, %v1173
    %v1238 = vpack.c.b16 %v1178, %v1174
    %v1239 = vpack.c.b16 %v1179, %v1175
    %v1240 = vpack.c.b16 %v1180, %v1176
    %v1241 = vpack.c.b16 %v1185, %v1181
    %v1242 = vpack.c.b16 %v1186, %v1182
    %v1243 = vpack.c.b16 %v1187, %v1183
    %v1244 = vpack.c.b16 %v1188, %v1184
    %v1245 = vpack.c.b16 %v1193, %v1189
    %v1246 = vpack.c.b16 %v1194, %v1190
    %v1247 = vpack.c.b16 %v1195, %v1191
    %v1248 = vpack.c.b16 %v1196, %v1192
    %v1249 = vpack.c.b16 %v1201, %v1197
    %v1250 = vpack.c.b16 %v1202, %v1198
    %v1251 = vpack.c.b16 %v1203, %v1199
    %v1252 = vpack.c.b16 %v1204, %v1200
    %v1253 = vpack.c.b16 %v1209, %v1205
    %v1254 = vpack.c.b16 %v1210, %v1206
    %v1255 = vpack.c.b16 %v1211, %v1207
    %v1256 = vpack.c.b16 %v1212, %v1208
    %v1257 = vpack.c.b16 %v1217, %v1213
    %v1258 = vpack.c.b16 %v1218, %v1214
    %v1259 = vpack.c.b16 %v1219, %v1215
    %v1260 = vpack.c.b16 %v1220, %v1216
    %v1261 = vpack.c.b16 %v1225, %v1221
    %v1262 = vpack.c.b16 %v1226, %v1222
    %v1263 = vpack.c.b16 %v1227, %v1223
    %v1264 = vpack.c.b16 %v1228, %v1224
    %v1265 = vpack.c.b16 %v1233, %v1229
    %v1266 = vpack.c.b16 %v1234, %v1230
    %v1267 = vpack.c.b16 %v1235, %v1231
    %v1268 = vpack.c.b16 %v1236, %v1232
    %1301 = vmatpush.bf16.msra.mxu0 %v1265
    %1302 = vmatpush.bf16.msra.mxu0 %v1261
    %1303 = vmatpush.bf16.msra.mxu0 %v1257
    %1304 = vmatpush.bf16.msra.mxu0 %v1253
    %1305 = vmatpush.bf16.msra.mxu0 %v1249
    %1306 = vmatpush.bf16.msra.mxu0 %v1245
    %1307 = vmatpush.bf16.msra.mxu0 %v1241
    %1308 = vmatpush.bf16.msra.mxu0 %v1237
    %1309 = vmatmul.bf16.gmra.mxu0 %v1108
    %v1310 = vpop.f32.mrf.mxu0
    %v1311 = vadd.f32 0.0, %v1310
    %v1312 = vpop.f32.mrf.mxu0
    %1313 = vdwg.mxu0
    %1314 = vmatpush.bf16.msra.mxu0 %v1266
    %1315 = vmatpush.bf16.msra.mxu0 %v1262
    %1316 = vmatpush.bf16.msra.mxu0 %v1258
    %1317 = vmatpush.bf16.msra.mxu0 %v1254
    %1318 = vmatpush.bf16.msra.mxu0 %v1250
    %1319 = vmatpush.bf16.msra.mxu0 %v1246
    %1320 = vmatpush.bf16.msra.mxu0 %v1242
    %1321 = vmatpush.bf16.msra.mxu0 %v1238
    %1322 = vmatmul.bf16.gmra.mxu0 %v1108
    %v1323 = vpop.f32.mrf.mxu0
    %v1324 = vadd.f32 0.0, %v1323
    %v1325 = vpop.f32.mrf.mxu0
    %1326 = vdwg.mxu0
    %1327 = vmatpush.bf16.msra.mxu0 %v1267
    %1328 = vmatpush.bf16.msra.mxu0 %v1263
    %1329 = vmatpush.bf16.msra.mxu0 %v1259
    %1330 = vmatpush.bf16.msra.mxu0 %v1255
    %1331 = vmatpush.bf16.msra.mxu0 %v1251
    %1332 = vmatpush.bf16.msra.mxu0 %v1247
    %1333 = vmatpush.bf16.msra.mxu0 %v1243
    %1334 = vmatpush.bf16.msra.mxu0 %v1239
    %1335 = vmatmul.bf16.gmra.mxu0 %v1108
    %v1336 = vpop.f32.mrf.mxu0
    %v1337 = vadd.f32 0.0, %v1336
    %v1338 = vpop.f32.mrf.mxu0
    %1339 = vdwg.mxu0
    %1340 = vmatpush.bf16.msra.mxu0 %v1268
    %1341 = vmatpush.bf16.msra.mxu0 %v1264
    %1342 = vmatpush.bf16.msra.mxu0 %v1260
    %1343 = vmatpush.bf16.msra.mxu0 %v1256
    %1344 = vmatpush.bf16.msra.mxu0 %v1252
    %1345 = vmatpush.bf16.msra.mxu0 %v1248
    %1346 = vmatpush.bf16.msra.mxu0 %v1244
    %1347 = vmatpush.bf16.msra.mxu0 %v1240
    %1348 = vmatmul.bf16.gmra.mxu0 %v1108
    %v1349 = vpop.f32.mrf.mxu0
    %v1350 = vadd.f32 0.0, %v1349
    %v1351 = vpop.f32.mrf.mxu0
    %1352 = vdwg.mxu0
    %v1353 = vadd.f32 %v1104, %v1311
    %v1354 = vadd.f32 %v1105, %v1324
    %v1355 = vadd.f32 %v1106, %v1337
    %v1356 = vadd.f32 %v1107, %v1350
    %v1357 = vmul.f32 %v1353, 0.5
    %v1358 = vtanh.pop %v1357
    %v1359 = vmul.f32 %v1358, 0.5
    %v1360 = vadd.f32 %v1359, 0.5
    %v1361 = vmul.f32 %v1354, 0.5
    %v1362 = vtanh.pop %v1361
    %v1363 = vmul.f32 %v1362, 0.5
    %v1364 = vadd.f32 %v1363, 0.5
    %v1365 = vtanh.pop %v1355
    %v1366 = vmul.f32 %v1356, 0.5
    %v1367 = vtanh.pop %v1366
    %v1368 = vmul.f32 %v1367, 0.5
    %v1369 = vadd.f32 %v1368, 0.5
    %v1370 = vmul.f32 %v1364, %v1094
    %v1371 = vmul.f32 %v1360, %v1365
    %v1372 = vadd.f32 %v1370, %v1371
    %v1373 = vtanh.pop %v1372
    %v1374 = vmul.f32 %v1369, %v1373
    %s1375 = scalar_lea.vmem [#allocation8], 24
    %1376 = vst [vmem:[%s1375] sm:$0xff] %v1374
    %s1377 = smul.u32 4, 4
    %s1378 = smul.addr %s1377, 4
    %s1379 = scalar_lea.vmem [#allocation4], %s1378
    %v1380 = vld [vmem:[%s1379] sm:$0xff]
    %v1381 = vld [vmem:[%s1379 + $0x8] sm:$0xff]
    %v1382 = vunpack.c.l.bf16 %v1380
    %v1383 = vunpack.c.h.bf16 %v1380
    %v1384 = vunpack.c.l.bf16 %v1381
    %v1385 = vunpack.c.h.bf16 %v1381
    %v1386 = vpack.c.bf16 %v1374, %v1374
    %v1387 = vld [vmem:[#allocation5] sm:$0xff]
    %v1388 = vld [vmem:[#allocation5 + $0x8] sm:$0xff]
    %v1389 = vld [vmem:[#allocation5 + $0x10] sm:$0xff]
    %v1390 = vld [vmem:[#allocation5 + $0x18] sm:$0xff]
    %v1391 = vld [vmem:[#allocation5 + $0x20] sm:$0xff]
    %v1392 = vld [vmem:[#allocation5 + $0x28] sm:$0xff]
    %v1393 = vld [vmem:[#allocation5 + $0x30] sm:$0xff]
    %v1394 = vld [vmem:[#allocation5 + $0x38] sm:$0xff]
    %v1395 = vld [vmem:[#allocation5 + $0x40] sm:$0xff]
    %v1396 = vld [vmem:[#allocation5 + $0x48] sm:$0xff]
    %v1397 = vld [vmem:[#allocation5 + $0x50] sm:$0xff]
    %v1398 = vld [vmem:[#allocation5 + $0x58] sm:$0xff]
    %v1399 = vld [vmem:[#allocation5 + $0x60] sm:$0xff]
    %v1400 = vld [vmem:[#allocation5 + $0x68] sm:$0xff]
    %v1401 = vld [vmem:[#allocation5 + $0x70] sm:$0xff]
    %v1402 = vld [vmem:[#allocation5 + $0x78] sm:$0xff]
    %v1403 = vld [vmem:[#allocation5 + $0x80] sm:$0xff]
    %v1404 = vld [vmem:[#allocation5 + $0x88] sm:$0xff]
    %v1405 = vld [vmem:[#allocation5 + $0x90] sm:$0xff]
    %v1406 = vld [vmem:[#allocation5 + $0x98] sm:$0xff]
    %v1407 = vld [vmem:[#allocation5 + $0xa0] sm:$0xff]
    %v1408 = vld [vmem:[#allocation5 + $0xa8] sm:$0xff]
    %v1409 = vld [vmem:[#allocation5 + $0xb0] sm:$0xff]
    %v1410 = vld [vmem:[#allocation5 + $0xb8] sm:$0xff]
    %v1411 = vld [vmem:[#allocation5 + $0xc0] sm:$0xff]
    %v1412 = vld [vmem:[#allocation5 + $0xc8] sm:$0xff]
    %v1413 = vld [vmem:[#allocation5 + $0xd0] sm:$0xff]
    %v1414 = vld [vmem:[#allocation5 + $0xd8] sm:$0xff]
    %v1415 = vld [vmem:[#allocation5 + $0xe0] sm:$0xff]
    %v1416 = vld [vmem:[#allocation5 + $0xe8] sm:$0xff]
    %v1417 = vld [vmem:[#allocation5 + $0xf0] sm:$0xff]
    %v1418 = vld [vmem:[#allocation5 + $0xf8] sm:$0xff]
    %v1451 = vunpack.c.l.b16 %v1387
    %v1452 = vunpack.c.h.b16 %v1387
    %v1453 = vunpack.c.l.b16 %v1388
    %v1454 = vunpack.c.h.b16 %v1388
    %v1455 = vunpack.c.l.b16 %v1389
    %v1456 = vunpack.c.h.b16 %v1389
    %v1457 = vunpack.c.l.b16 %v1390
    %v1458 = vunpack.c.h.b16 %v1390
    %v1459 = vunpack.c.l.b16 %v1391
    %v1460 = vunpack.c.h.b16 %v1391
    %v1461 = vunpack.c.l.b16 %v1392
    %v1462 = vunpack.c.h.b16 %v1392
    %v1463 = vunpack.c.l.b16 %v1393
    %v1464 = vunpack.c.h.b16 %v1393
    %v1465 = vunpack.c.l.b16 %v1394
    %v1466 = vunpack.c.h.b16 %v1394
    %v1467 = vunpack.c.l.b16 %v1395
    %v1468 = vunpack.c.h.b16 %v1395
    %v1469 = vunpack.c.l.b16 %v1396
    %v1470 = vunpack.c.h.b16 %v1396
    %v1471 = vunpack.c.l.b16 %v1397
    %v1472 = vunpack.c.h.b16 %v1397
    %v1473 = vunpack.c.l.b16 %v1398
    %v1474 = vunpack.c.h.b16 %v1398
    %v1475 = vunpack.c.l.b16 %v1399
    %v1476 = vunpack.c.h.b16 %v1399
    %v1477 = vunpack.c.l.b16 %v1400
    %v1478 = vunpack.c.h.b16 %v1400
    %v1479 = vunpack.c.l.b16 %v1401
    %v1480 = vunpack.c.h.b16 %v1401
    %v1481 = vunpack.c.l.b16 %v1402
    %v1482 = vunpack.c.h.b16 %v1402
    %v1483 = vunpack.c.l.b16 %v1403
    %v1484 = vunpack.c.h.b16 %v1403
    %v1485 = vunpack.c.l.b16 %v1404
    %v1486 = vunpack.c.h.b16 %v1404
    %v1487 = vunpack.c.l.b16 %v1405
    %v1488 = vunpack.c.h.b16 %v1405
    %v1489 = vunpack.c.l.b16 %v1406
    %v1490 = vunpack.c.h.b16 %v1406
    %v1491 = vunpack.c.l.b16 %v1407
    %v1492 = vunpack.c.h.b16 %v1407
    %v1493 = vunpack.c.l.b16 %v1408
    %v1494 = vunpack.c.h.b16 %v1408
    %v1495 = vunpack.c.l.b16 %v1409
    %v1496 = vunpack.c.h.b16 %v1409
    %v1497 = vunpack.c.l.b16 %v1410
    %v1498 = vunpack.c.h.b16 %v1410
    %v1499 = vunpack.c.l.b16 %v1411
    %v1500 = vunpack.c.h.b16 %v1411
    %v1501 = vunpack.c.l.b16 %v1412
    %v1502 = vunpack.c.h.b16 %v1412
    %v1503 = vunpack.c.l.b16 %v1413
    %v1504 = vunpack.c.h.b16 %v1413
    %v1505 = vunpack.c.l.b16 %v1414
    %v1506 = vunpack.c.h.b16 %v1414
    %v1507 = vunpack.c.l.b16 %v1415
    %v1508 = vunpack.c.h.b16 %v1415
    %v1509 = vunpack.c.l.b16 %v1416
    %v1510 = vunpack.c.h.b16 %v1416
    %v1511 = vunpack.c.l.b16 %v1417
    %v1512 = vunpack.c.h.b16 %v1417
    %v1513 = vunpack.c.l.b16 %v1418
    %v1514 = vunpack.c.h.b16 %v1418
    %v1515 = vpack.c.b16 %v1455, %v1451
    %v1516 = vpack.c.b16 %v1456, %v1452
    %v1517 = vpack.c.b16 %v1457, %v1453
    %v1518 = vpack.c.b16 %v1458, %v1454
    %v1519 = vpack.c.b16 %v1463, %v1459
    %v1520 = vpack.c.b16 %v1464, %v1460
    %v1521 = vpack.c.b16 %v1465, %v1461
    %v1522 = vpack.c.b16 %v1466, %v1462
    %v1523 = vpack.c.b16 %v1471, %v1467
    %v1524 = vpack.c.b16 %v1472, %v1468
    %v1525 = vpack.c.b16 %v1473, %v1469
    %v1526 = vpack.c.b16 %v1474, %v1470
    %v1527 = vpack.c.b16 %v1479, %v1475
    %v1528 = vpack.c.b16 %v1480, %v1476
    %v1529 = vpack.c.b16 %v1481, %v1477
    %v1530 = vpack.c.b16 %v1482, %v1478
    %v1531 = vpack.c.b16 %v1487, %v1483
    %v1532 = vpack.c.b16 %v1488, %v1484
    %v1533 = vpack.c.b16 %v1489, %v1485
    %v1534 = vpack.c.b16 %v1490, %v1486
    %v1535 = vpack.c.b16 %v1495, %v1491
    %v1536 = vpack.c.b16 %v1496, %v1492
    %v1537 = vpack.c.b16 %v1497, %v1493
    %v1538 = vpack.c.b16 %v1498, %v1494
    %v1539 = vpack.c.b16 %v1503, %v1499
    %v1540 = vpack.c.b16 %v1504, %v1500
    %v1541 = vpack.c.b16 %v1505, %v1501
    %v1542 = vpack.c.b16 %v1506, %v1502
    %v1543 = vpack.c.b16 %v1511, %v1507
    %v1544 = vpack.c.b16 %v1512, %v1508
    %v1545 = vpack.c.b16 %v1513, %v1509
    %v1546 = vpack.c.b16 %v1514, %v1510
    %1579 = vmatpush.bf16.msra.mxu0 %v1543
    %1580 = vmatpush.bf16.msra.mxu0 %v1539
    %1581 = vmatpush.bf16.msra.mxu0 %v1535
    %1582 = vmatpush.bf16.msra.mxu0 %v1531
    %1583 = vmatpush.bf16.msra.mxu0 %v1527
    %1584 = vmatpush.bf16.msra.mxu0 %v1523
    %1585 = vmatpush.bf16.msra.mxu0 %v1519
    %1586 = vmatpush.bf16.msra.mxu0 %v1515
    %1587 = vmatmul.bf16.gmra.mxu0 %v1386
    %v1588 = vpop.f32.mrf.mxu0
    %v1589 = vadd.f32 0.0, %v1588
    %v1590 = vpop.f32.mrf.mxu0
    %1591 = vdwg.mxu0
    %1592 = vmatpush.bf16.msra.mxu0 %v1544
    %1593 = vmatpush.bf16.msra.mxu0 %v1540
    %1594 = vmatpush.bf16.msra.mxu0 %v1536
    %1595 = vmatpush.bf16.msra.mxu0 %v1532
    %1596 = vmatpush.bf16.msra.mxu0 %v1528
    %1597 = vmatpush.bf16.msra.mxu0 %v1524
    %1598 = vmatpush.bf16.msra.mxu0 %v1520
    %1599 = vmatpush.bf16.msra.mxu0 %v1516
    %1600 = vmatmul.bf16.gmra.mxu0 %v1386
    %v1601 = vpop.f32.mrf.mxu0
    %v1602 = vadd.f32 0.0, %v1601
    %v1603 = vpop.f32.mrf.mxu0
    %1604 = vdwg.mxu0
    %1605 = vmatpush.bf16.msra.mxu0 %v1545
    %1606 = vmatpush.bf16.msra.mxu0 %v1541
    %1607 = vmatpush.bf16.msra.mxu0 %v1537
    %1608 = vmatpush.bf16.msra.mxu0 %v1533
    %1609 = vmatpush.bf16.msra.mxu0 %v1529
    %1610 = vmatpush.bf16.msra.mxu0 %v1525
    %1611 = vmatpush.bf16.msra.mxu0 %v1521
    %1612 = vmatpush.bf16.msra.mxu0 %v1517
    %1613 = vmatmul.bf16.gmra.mxu0 %v1386
    %v1614 = vpop.f32.mrf.mxu0
    %v1615 = vadd.f32 0.0, %v1614
    %v1616 = vpop.f32.mrf.mxu0
    %1617 = vdwg.mxu0
    %1618 = vmatpush.bf16.msra.mxu0 %v1546
    %1619 = vmatpush.bf16.msra.mxu0 %v1542
    %1620 = vmatpush.bf16.msra.mxu0 %v1538
    %1621 = vmatpush.bf16.msra.mxu0 %v1534
    %1622 = vmatpush.bf16.msra.mxu0 %v1530
    %1623 = vmatpush.bf16.msra.mxu0 %v1526
    %1624 = vmatpush.bf16.msra.mxu0 %v1522
    %1625 = vmatpush.bf16.msra.mxu0 %v1518
    %1626 = vmatmul.bf16.gmra.mxu0 %v1386
    %v1627 = vpop.f32.mrf.mxu0
    %v1628 = vadd.f32 0.0, %v1627
    %v1629 = vpop.f32.mrf.mxu0
    %1630 = vdwg.mxu0
    %v1631 = vadd.f32 %v1382, %v1589
    %v1632 = vadd.f32 %v1383, %v1602
    %v1633 = vadd.f32 %v1384, %v1615
    %v1634 = vadd.f32 %v1385, %v1628
    %v1635 = vmul.f32 %v1631, 0.5
    %v1636 = vtanh.pop %v1635
    %v1637 = vmul.f32 %v1636, 0.5
    %v1638 = vadd.f32 %v1637, 0.5
    %v1639 = vmul.f32 %v1632, 0.5
    %v1640 = vtanh.pop %v1639
    %v1641 = vmul.f32 %v1640, 0.5
    %v1642 = vadd.f32 %v1641, 0.5
    %v1643 = vtanh.pop %v1633
    %v1644 = vmul.f32 %v1634, 0.5
    %v1645 = vtanh.pop %v1644
    %v1646 = vmul.f32 %v1645, 0.5
    %v1647 = vadd.f32 %v1646, 0.5
    %v1648 = vmul.f32 %v1642, %v1372
    %v1649 = vmul.f32 %v1638, %v1643
    %v1650 = vadd.f32 %v1648, %v1649
    %v1651 = vtanh.pop %v1650
    %v1652 = vmul.f32 %v1647, %v1651
    %s1653 = scalar_lea.vmem [#allocation8], 32
    %1654 = vst [vmem:[%s1653] sm:$0xff] %v1652
    %s1655 = smul.u32 5, 4
    %s1656 = smul.addr %s1655, 4
    %s1657 = scalar_lea.vmem [#allocation4], %s1656
    %v1658 = vld [vmem:[%s1657] sm:$0xff]
    %v1659 = vld [vmem:[%s1657 + $0x8] sm:$0xff]
    %v1660 = vunpack.c.l.bf16 %v1658
    %v1661 = vunpack.c.h.bf16 %v1658
    %v1662 = vunpack.c.l.bf16 %v1659
    %v1663 = vunpack.c.h.bf16 %v1659
    %v1664 = vpack.c.bf16 %v1652, %v1652
    %v1665 = vld [vmem:[#allocation5] sm:$0xff]
    %v1666 = vld [vmem:[#allocation5 + $0x8] sm:$0xff]
    %v1667 = vld [vmem:[#allocation5 + $0x10] sm:$0xff]
    %v1668 = vld [vmem:[#allocation5 + $0x18] sm:$0xff]
    %v1669 = vld [vmem:[#allocation5 + $0x20] sm:$0xff]
    %v1670 = vld [vmem:[#allocation5 + $0x28] sm:$0xff]
    %v1671 = vld [vmem:[#allocation5 + $0x30] sm:$0xff]
    %v1672 = vld [vmem:[#allocation5 + $0x38] sm:$0xff]
    %v1673 = vld [vmem:[#allocation5 + $0x40] sm:$0xff]
    %v1674 = vld [vmem:[#allocation5 + $0x48] sm:$0xff]
    %v1675 = vld [vmem:[#allocation5 + $0x50] sm:$0xff]
    %v1676 = vld [vmem:[#allocation5 + $0x58] sm:$0xff]
    %v1677 = vld [vmem:[#allocation5 + $0x60] sm:$0xff]
    %v1678 = vld [vmem:[#allocation5 + $0x68] sm:$0xff]
    %v1679 = vld [vmem:[#allocation5 + $0x70] sm:$0xff]
    %v1680 = vld [vmem:[#allocation5 + $0x78] sm:$0xff]
    %v1681 = vld [vmem:[#allocation5 + $0x80] sm:$0xff]
    %v1682 = vld [vmem:[#allocation5 + $0x88] sm:$0xff]
    %v1683 = vld [vmem:[#allocation5 + $0x90] sm:$0xff]
    %v1684 = vld [vmem:[#allocation5 + $0x98] sm:$0xff]
    %v1685 = vld [vmem:[#allocation5 + $0xa0] sm:$0xff]
    %v1686 = vld [vmem:[#allocation5 + $0xa8] sm:$0xff]
    %v1687 = vld [vmem:[#allocation5 + $0xb0] sm:$0xff]
    %v1688 = vld [vmem:[#allocation5 + $0xb8] sm:$0xff]
    %v1689 = vld [vmem:[#allocation5 + $0xc0] sm:$0xff]
    %v1690 = vld [vmem:[#allocation5 + $0xc8] sm:$0xff]
    %v1691 = vld [vmem:[#allocation5 + $0xd0] sm:$0xff]
    %v1692 = vld [vmem:[#allocation5 + $0xd8] sm:$0xff]
    %v1693 = vld [vmem:[#allocation5 + $0xe0] sm:$0xff]
    %v1694 = vld [vmem:[#allocation5 + $0xe8] sm:$0xff]
    %v1695 = vld [vmem:[#allocation5 + $0xf0] sm:$0xff]
    %v1696 = vld [vmem:[#allocation5 + $0xf8] sm:$0xff]
    %v1729 = vunpack.c.l.b16 %v1665
    %v1730 = vunpack.c.h.b16 %v1665
    %v1731 = vunpack.c.l.b16 %v1666
    %v1732 = vunpack.c.h.b16 %v1666
    %v1733 = vunpack.c.l.b16 %v1667
    %v1734 = vunpack.c.h.b16 %v1667
    %v1735 = vunpack.c.l.b16 %v1668
    %v1736 = vunpack.c.h.b16 %v1668
    %v1737 = vunpack.c.l.b16 %v1669
    %v1738 = vunpack.c.h.b16 %v1669
    %v1739 = vunpack.c.l.b16 %v1670
    %v1740 = vunpack.c.h.b16 %v1670
    %v1741 = vunpack.c.l.b16 %v1671
    %v1742 = vunpack.c.h.b16 %v1671
    %v1743 = vunpack.c.l.b16 %v1672
    %v1744 = vunpack.c.h.b16 %v1672
    %v1745 = vunpack.c.l.b16 %v1673
    %v1746 = vunpack.c.h.b16 %v1673
    %v1747 = vunpack.c.l.b16 %v1674
    %v1748 = vunpack.c.h.b16 %v1674
    %v1749 = vunpack.c.l.b16 %v1675
    %v1750 = vunpack.c.h.b16 %v1675
    %v1751 = vunpack.c.l.b16 %v1676
    %v1752 = vunpack.c.h.b16 %v1676
    %v1753 = vunpack.c.l.b16 %v1677
    %v1754 = vunpack.c.h.b16 %v1677
    %v1755 = vunpack.c.l.b16 %v1678
    %v1756 = vunpack.c.h.b16 %v1678
    %v1757 = vunpack.c.l.b16 %v1679
    %v1758 = vunpack.c.h.b16 %v1679
    %v1759 = vunpack.c.l.b16 %v1680
    %v1760 = vunpack.c.h.b16 %v1680
    %v1761 = vunpack.c.l.b16 %v1681
    %v1762 = vunpack.c.h.b16 %v1681
    %v1763 = vunpack.c.l.b16 %v1682
    %v1764 = vunpack.c.h.b16 %v1682
    %v1765 = vunpack.c.l.b16 %v1683
    %v1766 = vunpack.c.h.b16 %v1683
    %v1767 = vunpack.c.l.b16 %v1684
    %v1768 = vunpack.c.h.b16 %v1684
    %v1769 = vunpack.c.l.b16 %v1685
    %v1770 = vunpack.c.h.b16 %v1685
    %v1771 = vunpack.c.l.b16 %v1686
    %v1772 = vunpack.c.h.b16 %v1686
    %v1773 = vunpack.c.l.b16 %v1687
    %v1774 = vunpack.c.h.b16 %v1687
    %v1775 = vunpack.c.l.b16 %v1688
    %v1776 = vunpack.c.h.b16 %v1688
    %v1777 = vunpack.c.l.b16 %v1689
    %v1778 = vunpack.c.h.b16 %v1689
    %v1779 = vunpack.c.l.b16 %v1690
    %v1780 = vunpack.c.h.b16 %v1690
    %v1781 = vunpack.c.l.b16 %v1691
    %v1782 = vunpack.c.h.b16 %v1691
    %v1783 = vunpack.c.l.b16 %v1692
    %v1784 = vunpack.c.h.b16 %v1692
    %v1785 = vunpack.c.l.b16 %v1693
    %v1786 = vunpack.c.h.b16 %v1693
    %v1787 = vunpack.c.l.b16 %v1694
    %v1788 = vunpack.c.h.b16 %v1694
    %v1789 = vunpack.c.l.b16 %v1695
    %v1790 = vunpack.c.h.b16 %v1695
    %v1791 = vunpack.c.l.b16 %v1696
    %v1792 = vunpack.c.h.b16 %v1696
    %v1793 = vpack.c.b16 %v1733, %v1729
    %v1794 = vpack.c.b16 %v1734, %v1730
    %v1795 = vpack.c.b16 %v1735, %v1731
    %v1796 = vpack.c.b16 %v1736, %v1732
    %v1797 = vpack.c.b16 %v1741, %v1737
    %v1798 = vpack.c.b16 %v1742, %v1738
    %v1799 = vpack.c.b16 %v1743, %v1739
    %v1800 = vpack.c.b16 %v1744, %v1740
    %v1801 = vpack.c.b16 %v1749, %v1745
    %v1802 = vpack.c.b16 %v1750, %v1746
    %v1803 = vpack.c.b16 %v1751, %v1747
    %v1804 = vpack.c.b16 %v1752, %v1748
    %v1805 = vpack.c.b16 %v1757, %v1753
    %v1806 = vpack.c.b16 %v1758, %v1754
    %v1807 = vpack.c.b16 %v1759, %v1755
    %v1808 = vpack.c.b16 %v1760, %v1756
    %v1809 = vpack.c.b16 %v1765, %v1761
    %v1810 = vpack.c.b16 %v1766, %v1762
    %v1811 = vpack.c.b16 %v1767, %v1763
    %v1812 = vpack.c.b16 %v1768, %v1764
    %v1813 = vpack.c.b16 %v1773, %v1769
    %v1814 = vpack.c.b16 %v1774, %v1770
    %v1815 = vpack.c.b16 %v1775, %v1771
    %v1816 = vpack.c.b16 %v1776, %v1772
    %v1817 = vpack.c.b16 %v1781, %v1777
    %v1818 = vpack.c.b16 %v1782, %v1778
    %v1819 = vpack.c.b16 %v1783, %v1779
    %v1820 = vpack.c.b16 %v1784, %v1780
    %v1821 = vpack.c.b16 %v1789, %v1785
    %v1822 = vpack.c.b16 %v1790, %v1786
    %v1823 = vpack.c.b16 %v1791, %v1787
    %v1824 = vpack.c.b16 %v1792, %v1788
    %1857 = vmatpush.bf16.msra.mxu0 %v1821
    %1858 = vmatpush.bf16.msra.mxu0 %v1817
    %1859 = vmatpush.bf16.msra.mxu0 %v1813
    %1860 = vmatpush.bf16.msra.mxu0 %v1809
    %1861 = vmatpush.bf16.msra.mxu0 %v1805
    %1862 = vmatpush.bf16.msra.mxu0 %v1801
    %1863 = vmatpush.bf16.msra.mxu0 %v1797
    %1864 = vmatpush.bf16.msra.mxu0 %v1793
    %1865 = vmatmul.bf16.gmra.mxu0 %v1664
    %v1866 = vpop.f32.mrf.mxu0
    %v1867 = vadd.f32 0.0, %v1866
    %v1868 = vpop.f32.mrf.mxu0
    %1869 = vdwg.mxu0
    %1870 = vmatpush.bf16.msra.mxu0 %v1822
    %1871 = vmatpush.bf16.msra.mxu0 %v1818
    %1872 = vmatpush.bf16.msra.mxu0 %v1814
    %1873 = vmatpush.bf16.msra.mxu0 %v1810
    %1874 = vmatpush.bf16.msra.mxu0 %v1806
    %1875 = vmatpush.bf16.msra.mxu0 %v1802
    %1876 = vmatpush.bf16.msra.mxu0 %v1798
    %1877 = vmatpush.bf16.msra.mxu0 %v1794
    %1878 = vmatmul.bf16.gmra.mxu0 %v1664
    %v1879 = vpop.f32.mrf.mxu0
    %v1880 = vadd.f32 0.0, %v1879
    %v1881 = vpop.f32.mrf.mxu0
    %1882 = vdwg.mxu0
    %1883 = vmatpush.bf16.msra.mxu0 %v1823
    %1884 = vmatpush.bf16.msra.mxu0 %v1819
    %1885 = vmatpush.bf16.msra.mxu0 %v1815
    %1886 = vmatpush.bf16.msra.mxu0 %v1811
    %1887 = vmatpush.bf16.msra.mxu0 %v1807
    %1888 = vmatpush.bf16.msra.mxu0 %v1803
    %1889 = vmatpush.bf16.msra.mxu0 %v1799
    %1890 = vmatpush.bf16.msra.mxu0 %v1795
    %1891 = vmatmul.bf16.gmra.mxu0 %v1664
    %v1892 = vpop.f32.mrf.mxu0
    %v1893 = vadd.f32 0.0, %v1892
    %v1894 = vpop.f32.mrf.mxu0
    %1895 = vdwg.mxu0
    %1896 = vmatpush.bf16.msra.mxu0 %v1824
    %1897 = vmatpush.bf16.msra.mxu0 %v1820
    %1898 = vmatpush.bf16.msra.mxu0 %v1816
    %1899 = vmatpush.bf16.msra.mxu0 %v1812
    %1900 = vmatpush.bf16.msra.mxu0 %v1808
    %1901 = vmatpush.bf16.msra.mxu0 %v1804
    %1902 = vmatpush.bf16.msra.mxu0 %v1800
    %1903 = vmatpush.bf16.msra.mxu0 %v1796
    %1904 = vmatmul.bf16.gmra.mxu0 %v1664
    %v1905 = vpop.f32.mrf.mxu0
    %v1906 = vadd.f32 0.0, %v1905
    %v1907 = vpop.f32.mrf.mxu0
    %1908 = vdwg.mxu0
    %v1909 = vadd.f32 %v1660, %v1867
    %v1910 = vadd.f32 %v1661, %v1880
    %v1911 = vadd.f32 %v1662, %v1893
    %v1912 = vadd.f32 %v1663, %v1906
    %v1913 = vmul.f32 %v1909, 0.5
    %v1914 = vtanh.pop %v1913
    %v1915 = vmul.f32 %v1914, 0.5
    %v1916 = vadd.f32 %v1915, 0.5
    %v1917 = vmul.f32 %v1910, 0.5
    %v1918 = vtanh.pop %v1917
    %v1919 = vmul.f32 %v1918, 0.5
    %v1920 = vadd.f32 %v1919, 0.5
    %v1921 = vtanh.pop %v1911
    %v1922 = vmul.f32 %v1912, 0.5
    %v1923 = vtanh.pop %v1922
    %v1924 = vmul.f32 %v1923, 0.5
    %v1925 = vadd.f32 %v1924, 0.5
    %v1926 = vmul.f32 %v1920, %v1650
    %v1927 = vmul.f32 %v1916, %v1921
    %v1928 = vadd.f32 %v1926, %v1927
    %v1929 = vtanh.pop %v1928
    %v1930 = vmul.f32 %v1925, %v1929
    %s1931 = scalar_lea.vmem [#allocation8], 40
    %1932 = vst [vmem:[%s1931] sm:$0xff] %v1930
    %s1933 = smul.u32 6, 4
    %s1934 = smul.addr %s1933, 4
    %s1935 = scalar_lea.vmem [#allocation4], %s1934
    %v1936 = vld [vmem:[%s1935] sm:$0xff]
    %v1937 = vld [vmem:[%s1935 + $0x8] sm:$0xff]
    %v1938 = vunpack.c.l.bf16 %v1936
    %v1939 = vunpack.c.h.bf16 %v1936
    %v1940 = vunpack.c.l.bf16 %v1937
    %v1941 = vunpack.c.h.bf16 %v1937
    %v1942 = vpack.c.bf16 %v1930, %v1930
    %v1943 = vld [vmem:[#allocation5] sm:$0xff]
    %v1944 = vld [vmem:[#allocation5 + $0x8] sm:$0xff]
    %v1945 = vld [vmem:[#allocation5 + $0x10] sm:$0xff]
    %v1946 = vld [vmem:[#allocation5 + $0x18] sm:$0xff]
    %v1947 = vld [vmem:[#allocation5 + $0x20] sm:$0xff]
    %v1948 = vld [vmem:[#allocation5 + $0x28] sm:$0xff]
    %v1949 = vld [vmem:[#allocation5 + $0x30] sm:$0xff]
    %v1950 = vld [vmem:[#allocation5 + $0x38] sm:$0xff]
    %v1951 = vld [vmem:[#allocation5 + $0x40] sm:$0xff]
    %v1952 = vld [vmem:[#allocation5 + $0x48] sm:$0xff]
    %v1953 = vld [vmem:[#allocation5 + $0x50] sm:$0xff]
    %v1954 = vld [vmem:[#allocation5 + $0x58] sm:$0xff]
    %v1955 = vld [vmem:[#allocation5 + $0x60] sm:$0xff]
    %v1956 = vld [vmem:[#allocation5 + $0x68] sm:$0xff]
    %v1957 = vld [vmem:[#allocation5 + $0x70] sm:$0xff]
    %v1958 = vld [vmem:[#allocation5 + $0x78] sm:$0xff]
    %v1959 = vld [vmem:[#allocation5 + $0x80] sm:$0xff]
    %v1960 = vld [vmem:[#allocation5 + $0x88] sm:$0xff]
    %v1961 = vld [vmem:[#allocation5 + $0x90] sm:$0xff]
    %v1962 = vld [vmem:[#allocation5 + $0x98] sm:$0xff]
    %v1963 = vld [vmem:[#allocation5 + $0xa0] sm:$0xff]
    %v1964 = vld [vmem:[#allocation5 + $0xa8] sm:$0xff]
    %v1965 = vld [vmem:[#allocation5 + $0xb0] sm:$0xff]
    %v1966 = vld [vmem:[#allocation5 + $0xb8] sm:$0xff]
    %v1967 = vld [vmem:[#allocation5 + $0xc0] sm:$0xff]
    %v1968 = vld [vmem:[#allocation5 + $0xc8] sm:$0xff]
    %v1969 = vld [vmem:[#allocation5 + $0xd0] sm:$0xff]
    %v1970 = vld [vmem:[#allocation5 + $0xd8] sm:$0xff]
    %v1971 = vld [vmem:[#allocation5 + $0xe0] sm:$0xff]
    %v1972 = vld [vmem:[#allocation5 + $0xe8] sm:$0xff]
    %v1973 = vld [vmem:[#allocation5 + $0xf0] sm:$0xff]
    %v1974 = vld [vmem:[#allocation5 + $0xf8] sm:$0xff]
    %v2007 = vunpack.c.l.b16 %v1943
    %v2008 = vunpack.c.h.b16 %v1943
    %v2009 = vunpack.c.l.b16 %v1944
    %v2010 = vunpack.c.h.b16 %v1944
    %v2011 = vunpack.c.l.b16 %v1945
    %v2012 = vunpack.c.h.b16 %v1945
    %v2013 = vunpack.c.l.b16 %v1946
    %v2014 = vunpack.c.h.b16 %v1946
    %v2015 = vunpack.c.l.b16 %v1947
    %v2016 = vunpack.c.h.b16 %v1947
    %v2017 = vunpack.c.l.b16 %v1948
    %v2018 = vunpack.c.h.b16 %v1948
    %v2019 = vunpack.c.l.b16 %v1949
    %v2020 = vunpack.c.h.b16 %v1949
    %v2021 = vunpack.c.l.b16 %v1950
    %v2022 = vunpack.c.h.b16 %v1950
    %v2023 = vunpack.c.l.b16 %v1951
    %v2024 = vunpack.c.h.b16 %v1951
    %v2025 = vunpack.c.l.b16 %v1952
    %v2026 = vunpack.c.h.b16 %v1952
    %v2027 = vunpack.c.l.b16 %v1953
    %v2028 = vunpack.c.h.b16 %v1953
    %v2029 = vunpack.c.l.b16 %v1954
    %v2030 = vunpack.c.h.b16 %v1954
    %v2031 = vunpack.c.l.b16 %v1955
    %v2032 = vunpack.c.h.b16 %v1955
    %v2033 = vunpack.c.l.b16 %v1956
    %v2034 = vunpack.c.h.b16 %v1956
    %v2035 = vunpack.c.l.b16 %v1957
    %v2036 = vunpack.c.h.b16 %v1957
    %v2037 = vunpack.c.l.b16 %v1958
    %v2038 = vunpack.c.h.b16 %v1958
    %v2039 = vunpack.c.l.b16 %v1959
    %v2040 = vunpack.c.h.b16 %v1959
    %v2041 = vunpack.c.l.b16 %v1960
    %v2042 = vunpack.c.h.b16 %v1960
    %v2043 = vunpack.c.l.b16 %v1961
    %v2044 = vunpack.c.h.b16 %v1961
    %v2045 = vunpack.c.l.b16 %v1962
    %v2046 = vunpack.c.h.b16 %v1962
    %v2047 = vunpack.c.l.b16 %v1963
    %v2048 = vunpack.c.h.b16 %v1963
    %v2049 = vunpack.c.l.b16 %v1964
    %v2050 = vunpack.c.h.b16 %v1964
    %v2051 = vunpack.c.l.b16 %v1965
    %v2052 = vunpack.c.h.b16 %v1965
    %v2053 = vunpack.c.l.b16 %v1966
    %v2054 = vunpack.c.h.b16 %v1966
    %v2055 = vunpack.c.l.b16 %v1967
    %v2056 = vunpack.c.h.b16 %v1967
    %v2057 = vunpack.c.l.b16 %v1968
    %v2058 = vunpack.c.h.b16 %v1968
    %v2059 = vunpack.c.l.b16 %v1969
    %v2060 = vunpack.c.h.b16 %v1969
    %v2061 = vunpack.c.l.b16 %v1970
    %v2062 = vunpack.c.h.b16 %v1970
    %v2063 = vunpack.c.l.b16 %v1971
    %v2064 = vunpack.c.h.b16 %v1971
    %v2065 = vunpack.c.l.b16 %v1972
    %v2066 = vunpack.c.h.b16 %v1972
    %v2067 = vunpack.c.l.b16 %v1973
    %v2068 = vunpack.c.h.b16 %v1973
    %v2069 = vunpack.c.l.b16 %v1974
    %v2070 = vunpack.c.h.b16 %v1974
    %v2071 = vpack.c.b16 %v2011, %v2007
    %v2072 = vpack.c.b16 %v2012, %v2008
    %v2073 = vpack.c.b16 %v2013, %v2009
    %v2074 = vpack.c.b16 %v2014, %v2010
    %v2075 = vpack.c.b16 %v2019, %v2015
    %v2076 = vpack.c.b16 %v2020, %v2016
    %v2077 = vpack.c.b16 %v2021, %v2017
    %v2078 = vpack.c.b16 %v2022, %v2018
    %v2079 = vpack.c.b16 %v2027, %v2023
    %v2080 = vpack.c.b16 %v2028, %v2024
    %v2081 = vpack.c.b16 %v2029, %v2025
    %v2082 = vpack.c.b16 %v2030, %v2026
    %v2083 = vpack.c.b16 %v2035, %v2031
    %v2084 = vpack.c.b16 %v2036, %v2032
    %v2085 = vpack.c.b16 %v2037, %v2033
    %v2086 = vpack.c.b16 %v2038, %v2034
    %v2087 = vpack.c.b16 %v2043, %v2039
    %v2088 = vpack.c.b16 %v2044, %v2040
    %v2089 = vpack.c.b16 %v2045, %v2041
    %v2090 = vpack.c.b16 %v2046, %v2042
    %v2091 = vpack.c.b16 %v2051, %v2047
    %v2092 = vpack.c.b16 %v2052, %v2048
    %v2093 = vpack.c.b16 %v2053, %v2049
    %v2094 = vpack.c.b16 %v2054, %v2050
    %v2095 = vpack.c.b16 %v2059, %v2055
    %v2096 = vpack.c.b16 %v2060, %v2056
    %v2097 = vpack.c.b16 %v2061, %v2057
    %v2098 = vpack.c.b16 %v2062, %v2058
    %v2099 = vpack.c.b16 %v2067, %v2063
    %v2100 = vpack.c.b16 %v2068, %v2064
    %v2101 = vpack.c.b16 %v2069, %v2065
    %v2102 = vpack.c.b16 %v2070, %v2066
    %2135 = vmatpush.bf16.msra.mxu0 %v2099
    %2136 = vmatpush.bf16.msra.mxu0 %v2095
    %2137 = vmatpush.bf16.msra.mxu0 %v2091
    %2138 = vmatpush.bf16.msra.mxu0 %v2087
    %2139 = vmatpush.bf16.msra.mxu0 %v2083
    %2140 = vmatpush.bf16.msra.mxu0 %v2079
    %2141 = vmatpush.bf16.msra.mxu0 %v2075
    %2142 = vmatpush.bf16.msra.mxu0 %v2071
    %2143 = vmatmul.bf16.gmra.mxu0 %v1942
    %v2144 = vpop.f32.mrf.mxu0
    %v2145 = vadd.f32 0.0, %v2144
    %v2146 = vpop.f32.mrf.mxu0
    %2147 = vdwg.mxu0
    %2148 = vmatpush.bf16.msra.mxu0 %v2100
    %2149 = vmatpush.bf16.msra.mxu0 %v2096
    %2150 = vmatpush.bf16.msra.mxu0 %v2092
    %2151 = vmatpush.bf16.msra.mxu0 %v2088
    %2152 = vmatpush.bf16.msra.mxu0 %v2084
    %2153 = vmatpush.bf16.msra.mxu0 %v2080
    %2154 = vmatpush.bf16.msra.mxu0 %v2076
    %2155 = vmatpush.bf16.msra.mxu0 %v2072
    %2156 = vmatmul.bf16.gmra.mxu0 %v1942
    %v2157 = vpop.f32.mrf.mxu0
    %v2158 = vadd.f32 0.0, %v2157
    %v2159 = vpop.f32.mrf.mxu0
    %2160 = vdwg.mxu0
    %2161 = vmatpush.bf16.msra.mxu0 %v2101
    %2162 = vmatpush.bf16.msra.mxu0 %v2097
    %2163 = vmatpush.bf16.msra.mxu0 %v2093
    %2164 = vmatpush.bf16.msra.mxu0 %v2089
    %2165 = vmatpush.bf16.msra.mxu0 %v2085
    %2166 = vmatpush.bf16.msra.mxu0 %v2081
    %2167 = vmatpush.bf16.msra.mxu0 %v2077
    %2168 = vmatpush.bf16.msra.mxu0 %v2073
    %2169 = vmatmul.bf16.gmra.mxu0 %v1942
    %v2170 = vpop.f32.mrf.mxu0
    %v2171 = vadd.f32 0.0, %v2170
    %v2172 = vpop.f32.mrf.mxu0
    %2173 = vdwg.mxu0
    %2174 = vmatpush.bf16.msra.mxu0 %v2102
    %2175 = vmatpush.bf16.msra.mxu0 %v2098
    %2176 = vmatpush.bf16.msra.mxu0 %v2094
    %2177 = vmatpush.bf16.msra.mxu0 %v2090
    %2178 = vmatpush.bf16.msra.mxu0 %v2086
    %2179 = vmatpush.bf16.msra.mxu0 %v2082
    %2180 = vmatpush.bf16.msra.mxu0 %v2078
    %2181 = vmatpush.bf16.msra.mxu0 %v2074
    %2182 = vmatmul.bf16.gmra.mxu0 %v1942
    %v2183 = vpop.f32.mrf.mxu0
    %v2184 = vadd.f32 0.0, %v2183
    %v2185 = vpop.f32.mrf.mxu0
    %2186 = vdwg.mxu0
    %v2187 = vadd.f32 %v1938, %v2145
    %v2188 = vadd.f32 %v1939, %v2158
    %v2189 = vadd.f32 %v1940, %v2171
    %v2190 = vadd.f32 %v1941, %v2184
    %v2191 = vmul.f32 %v2187, 0.5
    %v2192 = vtanh.pop %v2191
    %v2193 = vmul.f32 %v2192, 0.5
    %v2194 = vadd.f32 %v2193, 0.5
    %v2195 = vmul.f32 %v2188, 0.5
    %v2196 = vtanh.pop %v2195
    %v2197 = vmul.f32 %v2196, 0.5
    %v2198 = vadd.f32 %v2197, 0.5
    %v2199 = vtanh.pop %v2189
    %v2200 = vmul.f32 %v2190, 0.5
    %v2201 = vtanh.pop %v2200
    %v2202 = vmul.f32 %v2201, 0.5
    %v2203 = vadd.f32 %v2202, 0.5
    %v2204 = vmul.f32 %v2198, %v1928
    %v2205 = vmul.f32 %v2194, %v2199
    %v2206 = vadd.f32 %v2204, %v2205
    %v2207 = vtanh.pop %v2206
    %v2208 = vmul.f32 %v2203, %v2207
    %s2209 = scalar_lea.vmem [#allocation8], 48
    %2210 = vst [vmem:[%s2209] sm:$0xff] %v2208
    %s2211 = smul.u32 7, 4
    %s2212 = smul.addr %s2211, 4
    %s2213 = scalar_lea.vmem [#allocation4], %s2212
    %v2214 = vld [vmem:[%s2213] sm:$0xff]
    %v2215 = vld [vmem:[%s2213 + $0x8] sm:$0xff]
    %v2216 = vunpack.c.l.bf16 %v2214
    %v2217 = vunpack.c.h.bf16 %v2214
    %v2218 = vunpack.c.l.bf16 %v2215
    %v2219 = vunpack.c.h.bf16 %v2215
    %v2220 = vpack.c.bf16 %v2208, %v2208
    %v2221 = vld [vmem:[#allocation5] sm:$0xff]
    %v2222 = vld [vmem:[#allocation5 + $0x8] sm:$0xff]
    %v2223 = vld [vmem:[#allocation5 + $0x10] sm:$0xff]
    %v2224 = vld [vmem:[#allocation5 + $0x18] sm:$0xff]
    %v2225 = vld [vmem:[#allocation5 + $0x20] sm:$0xff]
    %v2226 = vld [vmem:[#allocation5 + $0x28] sm:$0xff]
    %v2227 = vld [vmem:[#allocation5 + $0x30] sm:$0xff]
    %v2228 = vld [vmem:[#allocation5 + $0x38] sm:$0xff]
    %v2229 = vld [vmem:[#allocation5 + $0x40] sm:$0xff]
    %v2230 = vld [vmem:[#allocation5 + $0x48] sm:$0xff]
    %v2231 = vld [vmem:[#allocation5 + $0x50] sm:$0xff]
    %v2232 = vld [vmem:[#allocation5 + $0x58] sm:$0xff]
    %v2233 = vld [vmem:[#allocation5 + $0x60] sm:$0xff]
    %v2234 = vld [vmem:[#allocation5 + $0x68] sm:$0xff]
    %v2235 = vld [vmem:[#allocation5 + $0x70] sm:$0xff]
    %v2236 = vld [vmem:[#allocation5 + $0x78] sm:$0xff]
    %v2237 = vld [vmem:[#allocation5 + $0x80] sm:$0xff]
    %v2238 = vld [vmem:[#allocation5 + $0x88] sm:$0xff]
    %v2239 = vld [vmem:[#allocation5 + $0x90] sm:$0xff]
    %v2240 = vld [vmem:[#allocation5 + $0x98] sm:$0xff]
    %v2241 = vld [vmem:[#allocation5 + $0xa0] sm:$0xff]
    %v2242 = vld [vmem:[#allocation5 + $0xa8] sm:$0xff]
    %v2243 = vld [vmem:[#allocation5 + $0xb0] sm:$0xff]
    %v2244 = vld [vmem:[#allocation5 + $0xb8] sm:$0xff]
    %v2245 = vld [vmem:[#allocation5 + $0xc0] sm:$0xff]
    %v2246 = vld [vmem:[#allocation5 + $0xc8] sm:$0xff]
    %v2247 = vld [vmem:[#allocation5 + $0xd0] sm:$0xff]
    %v2248 = vld [vmem:[#allocation5 + $0xd8] sm:$0xff]
    %v2249 = vld [vmem:[#allocation5 + $0xe0] sm:$0xff]
    %v2250 = vld [vmem:[#allocation5 + $0xe8] sm:$0xff]
    %v2251 = vld [vmem:[#allocation5 + $0xf0] sm:$0xff]
    %v2252 = vld [vmem:[#allocation5 + $0xf8] sm:$0xff]
    %v2285 = vunpack.c.l.b16 %v2221
    %v2286 = vunpack.c.h.b16 %v2221
    %v2287 = vunpack.c.l.b16 %v2222
    %v2288 = vunpack.c.h.b16 %v2222
    %v2289 = vunpack.c.l.b16 %v2223
    %v2290 = vunpack.c.h.b16 %v2223
    %v2291 = vunpack.c.l.b16 %v2224
    %v2292 = vunpack.c.h.b16 %v2224
    %v2293 = vunpack.c.l.b16 %v2225
    %v2294 = vunpack.c.h.b16 %v2225
    %v2295 = vunpack.c.l.b16 %v2226
    %v2296 = vunpack.c.h.b16 %v2226
    %v2297 = vunpack.c.l.b16 %v2227
    %v2298 = vunpack.c.h.b16 %v2227
    %v2299 = vunpack.c.l.b16 %v2228
    %v2300 = vunpack.c.h.b16 %v2228
    %v2301 = vunpack.c.l.b16 %v2229
    %v2302 = vunpack.c.h.b16 %v2229
    %v2303 = vunpack.c.l.b16 %v2230
    %v2304 = vunpack.c.h.b16 %v2230
    %v2305 = vunpack.c.l.b16 %v2231
    %v2306 = vunpack.c.h.b16 %v2231
    %v2307 = vunpack.c.l.b16 %v2232
    %v2308 = vunpack.c.h.b16 %v2232
    %v2309 = vunpack.c.l.b16 %v2233
    %v2310 = vunpack.c.h.b16 %v2233
    %v2311 = vunpack.c.l.b16 %v2234
    %v2312 = vunpack.c.h.b16 %v2234
    %v2313 = vunpack.c.l.b16 %v2235
    %v2314 = vunpack.c.h.b16 %v2235
    %v2315 = vunpack.c.l.b16 %v2236
    %v2316 = vunpack.c.h.b16 %v2236
    %v2317 = vunpack.c.l.b16 %v2237
    %v2318 = vunpack.c.h.b16 %v2237
    %v2319 = vunpack.c.l.b16 %v2238
    %v2320 = vunpack.c.h.b16 %v2238
    %v2321 = vunpack.c.l.b16 %v2239
    %v2322 = vunpack.c.h.b16 %v2239
    %v2323 = vunpack.c.l.b16 %v2240
    %v2324 = vunpack.c.h.b16 %v2240
    %v2325 = vunpack.c.l.b16 %v2241
    %v2326 = vunpack.c.h.b16 %v2241
    %v2327 = vunpack.c.l.b16 %v2242
    %v2328 = vunpack.c.h.b16 %v2242
    %v2329 = vunpack.c.l.b16 %v2243
    %v2330 = vunpack.c.h.b16 %v2243
    %v2331 = vunpack.c.l.b16 %v2244
    %v2332 = vunpack.c.h.b16 %v2244
    %v2333 = vunpack.c.l.b16 %v2245
    %v2334 = vunpack.c.h.b16 %v2245
    %v2335 = vunpack.c.l.b16 %v2246
    %v2336 = vunpack.c.h.b16 %v2246
    %v2337 = vunpack.c.l.b16 %v2247
    %v2338 = vunpack.c.h.b16 %v2247
    %v2339 = vunpack.c.l.b16 %v2248
    %v2340 = vunpack.c.h.b16 %v2248
    %v2341 = vunpack.c.l.b16 %v2249
    %v2342 = vunpack.c.h.b16 %v2249
    %v2343 = vunpack.c.l.b16 %v2250
    %v2344 = vunpack.c.h.b16 %v2250
    %v2345 = vunpack.c.l.b16 %v2251
    %v2346 = vunpack.c.h.b16 %v2251
    %v2347 = vunpack.c.l.b16 %v2252
    %v2348 = vunpack.c.h.b16 %v2252
    %v2349 = vpack.c.b16 %v2289, %v2285
    %v2350 = vpack.c.b16 %v2290, %v2286
    %v2351 = vpack.c.b16 %v2291, %v2287
    %v2352 = vpack.c.b16 %v2292, %v2288
    %v2353 = vpack.c.b16 %v2297, %v2293
    %v2354 = vpack.c.b16 %v2298, %v2294
    %v2355 = vpack.c.b16 %v2299, %v2295
    %v2356 = vpack.c.b16 %v2300, %v2296
    %v2357 = vpack.c.b16 %v2305, %v2301
    %v2358 = vpack.c.b16 %v2306, %v2302
    %v2359 = vpack.c.b16 %v2307, %v2303
    %v2360 = vpack.c.b16 %v2308, %v2304
    %v2361 = vpack.c.b16 %v2313, %v2309
    %v2362 = vpack.c.b16 %v2314, %v2310
    %v2363 = vpack.c.b16 %v2315, %v2311
    %v2364 = vpack.c.b16 %v2316, %v2312
    %v2365 = vpack.c.b16 %v2321, %v2317
    %v2366 = vpack.c.b16 %v2322, %v2318
    %v2367 = vpack.c.b16 %v2323, %v2319
    %v2368 = vpack.c.b16 %v2324, %v2320
    %v2369 = vpack.c.b16 %v2329, %v2325
    %v2370 = vpack.c.b16 %v2330, %v2326
    %v2371 = vpack.c.b16 %v2331, %v2327
    %v2372 = vpack.c.b16 %v2332, %v2328
    %v2373 = vpack.c.b16 %v2337, %v2333
    %v2374 = vpack.c.b16 %v2338, %v2334
    %v2375 = vpack.c.b16 %v2339, %v2335
    %v2376 = vpack.c.b16 %v2340, %v2336
    %v2377 = vpack.c.b16 %v2345, %v2341
    %v2378 = vpack.c.b16 %v2346, %v2342
    %v2379 = vpack.c.b16 %v2347, %v2343
    %v2380 = vpack.c.b16 %v2348, %v2344
    %2413 = vmatpush.bf16.msra.mxu0 %v2377
    %2414 = vmatpush.bf16.msra.mxu0 %v2373
    %2415 = vmatpush.bf16.msra.mxu0 %v2369
    %2416 = vmatpush.bf16.msra.mxu0 %v2365
    %2417 = vmatpush.bf16.msra.mxu0 %v2361
    %2418 = vmatpush.bf16.msra.mxu0 %v2357
    %2419 = vmatpush.bf16.msra.mxu0 %v2353
    %2420 = vmatpush.bf16.msra.mxu0 %v2349
    %2421 = vmatmul.bf16.gmra.mxu0 %v2220
    %v2422 = vpop.f32.mrf.mxu0
    %v2423 = vadd.f32 0.0, %v2422
    %v2424 = vpop.f32.mrf.mxu0
    %2425 = vdwg.mxu0
    %2426 = vmatpush.bf16.msra.mxu0 %v2378
    %2427 = vmatpush.bf16.msra.mxu0 %v2374
    %2428 = vmatpush.bf16.msra.mxu0 %v2370
    %2429 = vmatpush.bf16.msra.mxu0 %v2366
    %2430 = vmatpush.bf16.msra.mxu0 %v2362
    %2431 = vmatpush.bf16.msra.mxu0 %v2358
    %2432 = vmatpush.bf16.msra.mxu0 %v2354
    %2433 = vmatpush.bf16.msra.mxu0 %v2350
    %2434 = vmatmul.bf16.gmra.mxu0 %v2220
    %v2435 = vpop.f32.mrf.mxu0
    %v2436 = vadd.f32 0.0, %v2435
    %v2437 = vpop.f32.mrf.mxu0
    %2438 = vdwg.mxu0
    %2439 = vmatpush.bf16.msra.mxu0 %v2379
    %2440 = vmatpush.bf16.msra.mxu0 %v2375
    %2441 = vmatpush.bf16.msra.mxu0 %v2371
    %2442 = vmatpush.bf16.msra.mxu0 %v2367
    %2443 = vmatpush.bf16.msra.mxu0 %v2363
    %2444 = vmatpush.bf16.msra.mxu0 %v2359
    %2445 = vmatpush.bf16.msra.mxu0 %v2355
    %2446 = vmatpush.bf16.msra.mxu0 %v2351
    %2447 = vmatmul.bf16.gmra.mxu0 %v2220
    %v2448 = vpop.f32.mrf.mxu0
    %v2449 = vadd.f32 0.0, %v2448
    %v2450 = vpop.f32.mrf.mxu0
    %2451 = vdwg.mxu0
    %2452 = vmatpush.bf16.msra.mxu0 %v2380
    %2453 = vmatpush.bf16.msra.mxu0 %v2376
    %2454 = vmatpush.bf16.msra.mxu0 %v2372
    %2455 = vmatpush.bf16.msra.mxu0 %v2368
    %2456 = vmatpush.bf16.msra.mxu0 %v2364
    %2457 = vmatpush.bf16.msra.mxu0 %v2360
    %2458 = vmatpush.bf16.msra.mxu0 %v2356
    %2459 = vmatpush.bf16.msra.mxu0 %v2352
    %2460 = vmatmul.bf16.gmra.mxu0 %v2220
    %v2461 = vpop.f32.mrf.mxu0
    %v2462 = vadd.f32 0.0, %v2461
    %v2463 = vpop.f32.mrf.mxu0
    %2464 = vdwg.mxu0
    %v2465 = vadd.f32 %v2216, %v2423
    %v2466 = vadd.f32 %v2217, %v2436
    %v2467 = vadd.f32 %v2218, %v2449
    %v2468 = vadd.f32 %v2219, %v2462
    %v2469 = vmul.f32 %v2465, 0.5
    %v2470 = vtanh.pop %v2469
    %v2471 = vmul.f32 %v2470, 0.5
    %v2472 = vadd.f32 %v2471, 0.5
    %v2473 = vmul.f32 %v2466, 0.5
    %v2474 = vtanh.pop %v2473
    %v2475 = vmul.f32 %v2474, 0.5
    %v2476 = vadd.f32 %v2475, 0.5
    %v2477 = vtanh.pop %v2467
    %v2478 = vmul.f32 %v2468, 0.5
    %v2479 = vtanh.pop %v2478
    %v2480 = vmul.f32 %v2479, 0.5
    %v2481 = vadd.f32 %v2480, 0.5
    %v2482 = vmul.f32 %v2476, %v2206
    %v2483 = vmul.f32 %v2472, %v2477
    %v2484 = vadd.f32 %v2482, %v2483
    %v2485 = vtanh.pop %v2484
    %v2486 = vmul.f32 %v2481, %v2485
    %s2487 = scalar_lea.vmem [#allocation8], 56
    %2488 = vst [vmem:[%s2487] sm:$0xff] %v2486
    %2489 = vst [vmem:[#allocation2] sm:$0xff] %v2486
    %2490 = vst [vmem:[#allocation3] sm:$0xff] %v2484
    // Predicated region
    $region26: #{tpu_custom_call.1} parent=1 // pred_check
      _
    $region27: #{tpu_custom_call.1} parent=1 // pred_check_branch
      %2492 = sbr.rel (0) target = $region29
    $region28: #{tpu_custom_call.1} parent=1 // pred_region
      %2494 = vsyncadd [#allocation7], 0
      %s2495 = sshll.u32 [#allocation8], 4
      %s2496 = int_to_ptr.vmem [resolvable:$true] %s2495
      %s2497 = sshll.u32 %s4, 4
      %s2498 = int_to_ptr.hbm [resolvable:$true] %s2497
      %2503 = dma.vmem_to_hbm [thread:$0]  %s2496, 1024, %s2498, [#allocation7], 128, 128, 8
    $region29: #{tpu_custom_call.1} parent=1 // pred_fallthru
      _
    // Predicated region
    $region30: #{tpu_custom_call.1} parent=1 // pred_check
      _
    $region31: #{tpu_custom_call.1} parent=1 // pred_check_branch
      %2505 = sbr.rel (0) target = $region33
    $region32: #{tpu_custom_call.1} parent=1 // pred_region
      %2507 = dma.done [#allocation7], 1024
    $region33: #{tpu_custom_call.1} parent=1 // pred_fallthru
      _
    %2508 = vsyncpa [#allocation6], 1
    %2509 = vsyncpa [#allocation7], 1

</llo_original>
